<compile_context>
chip_gen: v7x
topology: tpu7x:2x2x1
jax: 0.10.0
libtpu: 0.0.40
codegen_flags: <defaults>
</compile_context>

<pallas_src>
import jax
import jax.numpy as jnp
from jax.experimental import pallas as pl
from jax.experimental.pallas import tpu as pltpu

# ---------------------------------------------------------------------------
# Model dimensions (fixed by the PyTorch module).
# ---------------------------------------------------------------------------
C = 2048                  # ResNet50 backbone feature channels
CR = C // 16              # channel-attention bottleneck (128)
H1 = 512                  # classifier hidden width
OUT_PAD = 128             # lane-dense padded logit width (11 / 1 real logits)
NUM_MULTI = 2             # MultiClassifier heads
NUM_BINARY = 3            # BinaryClassifier heads
NUM_HEADS = NUM_MULTI + NUM_BINARY
BN_EPS = 1e-5

# Packed small-parameter slab layout (per head): f32 (SLAB_ROWS, C)
#   row 0:                      b2c  (C,)
#   row 1, [OFF_BL1 : +H1)      bl1
#   row 1, [OFF_B1C : +CR)      b1c
#   row 1, [OFF_BL2 : +OUT_PAD) bl2 (BN-folded, zero-padded)
#   row 1, OFF_SP + {0,1,2}     spatial-conv center taps (avg, max) and bias
SLAB_ROWS = 8
OFF_BL1 = 0
OFF_B1C = H1
OFF_BL2 = H1 + CR
OFF_SP = H1 + CR + OUT_PAD


# ---------------------------------------------------------------------------
# Kernel: one grid step == one (attention module + classifier) head.
# ---------------------------------------------------------------------------
def _fused_heads_kernel(x_ref, w1c_ref, w2c_ref, wl1_ref, wl2_ref, slab_ref,
                        out_ref):
    h = pl.program_id(0)
    x = x_ref[...].astype(jnp.float32)                       # (B, C)

    slab = slab_ref[0]                                       # (SLAB_ROWS, C) f32
    b2c = slab[0:1, :]                                       # (1, C)
    bl1 = slab[1:2, OFF_BL1:OFF_BL1 + H1]                    # (1, H1)
    b1c = slab[1:2, OFF_B1C:OFF_B1C + CR]                    # (1, CR)
    bl2 = slab[1:2, OFF_BL2:OFF_BL2 + OUT_PAD]               # (1, OUT_PAD)
    ws_avg = slab[1:2, OFF_SP + 0:OFF_SP + 1]                # (1, 1)
    ws_max = slab[1:2, OFF_SP + 1:OFF_SP + 2]                # (1, 1)
    bs = slab[1:2, OFF_SP + 2:OFF_SP + 3]                    # (1, 1)

    # ---------------- AttentionModule on a (B, C, 1, 1) map ----------------
    # spatial attention: Conv2d(2,1,3,pad=1) on a zero-padded 1x1 map == center
    # tap weights + bias, then sigmoid.
    avg = jnp.mean(x, axis=1, keepdims=True)                 # torch.mean(x, dim=1)
    mx = jnp.max(x, axis=1, keepdims=True)                   # torch.max(x, dim=1)
    x_spatial = jax.nn.sigmoid(avg * ws_avg + mx * ws_max + bs)        # (B, 1)

    # channel attention: 1x1 convs == matmuls; avg_pool(x) == max_pool(x) == x
    # on a 1x1 map, so avg_out + max_out == 2 * channel_attention(x).
    hcr = jnp.dot(x.astype(jnp.bfloat16), w1c_ref[0],
                  preferred_element_type=jnp.float32) + b1c            # (B, CR)
    hcr = jnp.maximum(hcr, 0.0)
    ca = jnp.dot(hcr.astype(jnp.bfloat16), w2c_ref[0],
                 preferred_element_type=jnp.float32) + b2c             # (B, C)
    x_channel = jax.nn.sigmoid(2.0 * ca)

    att = x * x_channel * x_spatial                                    # (B, C)

    # ---------------- Classifier head (eval semantics) ----------------
    # Linear(2048,512) -> ReLU -> [BN1d folded into wl2/bl2] -> Dropout(id)
    # -> Linear(512, out) [-> Sigmoid for binary heads]
    z = jnp.dot(att.astype(jnp.bfloat16), wl1_ref[0],
                preferred_element_type=jnp.float32) + bl1              # (B, H1)
    z = jnp.maximum(z, 0.0)
    logits = jnp.dot(z.astype(jnp.bfloat16), wl2_ref[0],
                     preferred_element_type=jnp.float32) + bl2         # (B, OUT_PAD)

    out_ref[0] = logits.astype(out_ref.dtype)

    @pl.when(h >= NUM_MULTI)                                  # binary heads get Sigmoid
    def _():
        out_ref[0] = jax.nn.sigmoid(logits).astype(out_ref.dtype)


# ---------------------------------------------------------------------------
# Wrapper.
# ---------------------------------------------------------------------------
def attribute_recognition_forward(features, params):
    """features: (B, 2048, 1, 1) NCHW backbone output. Returns list of per-head preds."""
    B = features.shape[0]
    x2d = features.reshape(B, C).astype(jnp.float32)

    out = pl.pallas_call(
        _fused_heads_kernel,
        out_shape=jax.ShapeDtypeStruct((NUM_HEADS, B, OUT_PAD), jnp.float32),
        grid=(NUM_HEADS,),
        in_specs=[
            pl.BlockSpec((B, C), lambda h: (0, 0)),               # shared features
            pl.BlockSpec((1, C, CR), lambda h: (h, 0, 0)),        # w1c (bf16)
            pl.BlockSpec((1, CR, C), lambda h: (h, 0, 0)),        # w2c (bf16)
            pl.BlockSpec((1, C, H1), lambda h: (h, 0, 0)),        # wl1 (bf16)
            pl.BlockSpec((1, H1, OUT_PAD), lambda h: (h, 0, 0)),  # wl2, BN folded (bf16)
            pl.BlockSpec((1, SLAB_ROWS, C), lambda h: (h, 0, 0)), # packed small params
        ],
        out_specs=pl.BlockSpec((1, B, OUT_PAD), lambda h: (h, 0, 0)),
        compiler_params=pltpu.CompilerParams(
            dimension_semantics=("parallel",)),
    )(x2d, params["w1c"], params["w2c"], params["wl1"], params["wl2"],
      params["slab"])

    return [out[i, :, :d] for i, d in enumerate(params["out_dims"])]


# ---------------------------------------------------------------------------
# Parameter construction (synthetic, deterministic; shapes follow PyTorch
# __init__). Returns (packed-for-kernel, raw-f32-for-reference).
# ---------------------------------------------------------------------------
def init_params(key):
    kit = iter(jax.random.split(key, 512))

    def nrm(shape, scale=0.02):
        return scale * jax.random.normal(next(kit), shape, jnp.float32)

    w1c_s, w2c_s, wl1_s, wl2_s, slab_s = [], [], [], [], []
    out_dims, raw = [], []

    for h in range(NUM_HEADS):
        is_binary = h >= NUM_MULTI
        out_dim = 1 if is_binary else 11
        out_dims.append(out_dim)

        # AttentionModule (weights pre-transposed: PyTorch Conv2d weight is (out, in, 1, 1))
        w1c = nrm((C, CR))                 # Conv2d(2048, 128, 1).weight^T
        b1c = nrm((CR,))
        w2c = nrm((CR, C))                 # Conv2d(128, 2048, 1).weight^T
        b2c = nrm((C,))
        w_sp = nrm((1, 2, 3, 3))           # Conv2d(2, 1, 3, padding=1).weight
        b_sp = nrm((1,))

        # Classifier: Linear(2048,512) -> ReLU -> BN(512) -> Dropout -> Linear(512,out)
        wl1 = nrm((C, H1))
        bl1 = nrm((H1,))
        bng = 1.0 + nrm((H1,))
        bnb = nrm((H1,))
        bnm = nrm((H1,))
        bnv = 1.0 + jnp.abs(nrm((H1,)))
        wl2 = nrm((H1, out_dim))
        bl2 = nrm((out_dim,))

        raw.append(dict(w1c=w1c, b1c=b1c, w2c=w2c, b2c=b2c,
                        ws=jnp.array([w_sp[0, 0, 1, 1], w_sp[0, 1, 1, 1]]),
                        bs=b_sp, wl1=wl1, bl1=bl1, bng=bng, bnb=bnb,
                        bnm=bnm, bnv=bnv, wl2=wl2, bl2=bl2,
                        is_binary=is_binary))

        # Fold eval-mode BatchNorm1d into the second Linear (ReLU is before BN,
        # so the fold is exact): (z*s + t) @ wl2 + bl2 == z @ (s[:,None]*wl2) + (t@wl2 + bl2)
        s = bng * jax.lax.rsqrt(bnv + BN_EPS)
        t = bnb - bnm * s
        wl2_f = wl2 * s[:, None]
        bl2_f = t @ wl2 + bl2

        # Pad the final Linear to a lane-dense OUT_PAD width (zeros beyond out_dim).
        wl2_p = jnp.zeros((H1, OUT_PAD), jnp.float32).at[:, :out_dim].set(wl2_f)
        bl2_p = jnp.zeros((OUT_PAD,), jnp.float32).at[:out_dim].set(bl2_f)

        # Pack all tiny per-head tensors into one (SLAB_ROWS, C) f32 slab.
        row1 = jnp.zeros((C,), jnp.float32)
        row1 = row1.at[OFF_BL1:OFF_BL1 + H1].set(bl1)
        row1 = row1.at[OFF_B1C:OFF_B1C + CR].set(b1c)
        row1 = row1.at[OFF_BL2:OFF_BL2 + OUT_PAD].set(bl2_p)
        row1 = row1.at[OFF_SP + 0].set(w_sp[0, 0, 1, 1])   # center tap, avg channel
        row1 = row1.at[OFF_SP + 1].set(w_sp[0, 1, 1, 1])   # center tap, max channel
        row1 = row1.at[OFF_SP + 2].set(b_sp[0])
        slab = jnp.zeros((SLAB_ROWS, C), jnp.float32).at[0].set(b2c).at[1].set(row1)

        w1c_s.append(w1c.astype(jnp.bfloat16))
        w2c_s.append(w2c.astype(jnp.bfloat16))
        wl1_s.append(wl1.astype(jnp.bfloat16))
        wl2_s.append(wl2_p.astype(jnp.bfloat16))
        slab_s.append(slab)

    packed = dict(w1c=jnp.stack(w1c_s), w2c=jnp.stack(w2c_s),
                  wl1=jnp.stack(wl1_s), wl2=jnp.stack(wl2_s),
                  slab=jnp.stack(slab_s), out_dims=tuple(out_dims))
    return packed, raw


# ---------------------------------------------------------------------------
# Pure-JAX reference (eval semantics; bf16 rounding mimics the kernel matmuls).
# ---------------------------------------------------------------------------
def reference_forward(features, raw):
    B = features.shape[0]
    x = features.reshape(B, C).astype(jnp.float32)

    def bf(a):
        return a.astype(jnp.bfloat16).astype(jnp.float32)

    preds = []
    for p in raw:
        avg = jnp.mean(x, axis=1, keepdims=True)
        mx = jnp.max(x, axis=1, keepdims=True)
        x_sp = jax.nn.sigmoid(avg * p["ws"][0] + mx * p["ws"][1] + p["bs"][0])
        hcr = jnp.maximum(bf(x) @ bf(p["w1c"]) + p["b1c"], 0.0)
        ca = bf(hcr) @ bf(p["w2c"]) + p["b2c"]
        att = x * jax.nn.sigmoid(2.0 * ca) * x_sp
        z = jnp.maximum(bf(att) @ bf(p["wl1"]) + p["bl1"], 0.0)
        z = (z - p["bnm"]) * jax.lax.rsqrt(p["bnv"] + BN_EPS) * p["bng"] + p["bnb"]
        logits = bf(z) @ bf(p["wl2"]) + p["bl2"]
        preds.append(jax.nn.sigmoid(logits) if p["is_binary"] else logits)
    return preds


if __name__ == "__main__":
    B = 2
    key = jax.random.PRNGKey(0)
    k_feat, k_par = jax.random.split(key)

    # Backbone (ResNet50 + global avg pool) output features, NCHW (B, 2048, 1, 1).
    features = jax.random.normal(k_feat, (B, C, 1, 1), jnp.float32)
    params, raw_params = init_params(k_par)

    preds = attribute_recognition_forward(features, params)
    preds = jax.block_until_ready(preds)

    expected = [(B, 11), (B, 11), (B, 1), (B, 1), (B, 1)]
    assert [tuple(p.shape) for p in preds] == expected, [p.shape for p in preds]
    assert all(bool(jnp.all(jnp.isfinite(p))) for p in preds)

    # numerical check against the pure-JAX reference (loose tol for bf16 weights)
    refs = reference_forward(features, raw_params)
    for got, want in zip(preds, refs):
        assert bool(jnp.allclose(got, want, atol=2e-2, rtol=2e-2)), (
            float(jnp.max(jnp.abs(got - want))))

    print("KERNEL_OK")
</pallas_src>

<mosaic_0001>
module attributes {stable_mosaic.version = 11 : i64} {
  func.func @_fused_heads_kernel(%arg0: i32, %arg1: memref<2x2048xf32, #tpu.memory_space<vmem>>, %arg2: memref<1x2048x128xbf16, #tpu.memory_space<vmem>>, %arg3: memref<1x128x2048xbf16, #tpu.memory_space<vmem>>, %arg4: memref<1x2048x512xbf16, #tpu.memory_space<vmem>>, %arg5: memref<1x512x128xbf16, #tpu.memory_space<vmem>>, %arg6: memref<1x8x2048xf32, #tpu.memory_space<vmem>>, %arg7: memref<1x2x128xf32, #tpu.memory_space<vmem>>) attributes {dimension_semantics = [#tpu.dimension_semantics<parallel>], iteration_bounds = array<i64: 5>, scalar_prefetch = 0 : i64, scratch_operands = 0 : i64, tpu.core_type = #tpu.core_type<tc>, window_params = [{pipeline_mode = #tpu.pipeline_mode<synchronous>, transform_indices = @transform_0, window_bounds = array<i64: 2, 2048>}, {transform_indices = @transform_1, window_bounds = array<i64: 1, 2048, 128>}, {transform_indices = @transform_2, window_bounds = array<i64: 1, 128, 2048>}, {transform_indices = @transform_3, window_bounds = array<i64: 1, 2048, 512>}, {transform_indices = @transform_4, window_bounds = array<i64: 1, 512, 128>}, {transform_indices = @transform_5, window_bounds = array<i64: 1, 8, 2048>}, {transform_indices = @transform_6, window_bounds = array<i64: 1, 2, 128>}]} {
    %c0 = arith.constant 0 : index
    %c0_0 = arith.constant 0 : index
    %0 = vector.load %arg1[%c0, %c0_0] : memref<2x2048xf32, #tpu.memory_space<vmem>>, vector<2x2048xf32>
    %c0_1 = arith.constant 0 : index
    %c0_2 = arith.constant 0 : index
    %c0_3 = arith.constant 0 : index
    %1 = vector.load %arg6[%c0_1, %c0_2, %c0_3] : memref<1x8x2048xf32, #tpu.memory_space<vmem>>, vector<1x8x2048xf32>
    %2 = vector.shape_cast %1 : vector<1x8x2048xf32> to vector<8x2048xf32>
    %3 = vector.extract_strided_slice %2 {offsets = [0, 0], sizes = [1, 2048], strides = [1, 1]} : vector<8x2048xf32> to vector<1x2048xf32>
    %4 = vector.extract_strided_slice %2 {offsets = [1, 0], sizes = [1, 512], strides = [1, 1]} : vector<8x2048xf32> to vector<1x512xf32>
    %5 = vector.extract_strided_slice %2 {offsets = [1, 512], sizes = [1, 128], strides = [1, 1]} : vector<8x2048xf32> to vector<1x128xf32>
    %6 = vector.extract_strided_slice %2 {offsets = [1, 640], sizes = [1, 128], strides = [1, 1]} : vector<8x2048xf32> to vector<1x128xf32>
    %7 = vector.extract_strided_slice %2 {offsets = [1, 768], sizes = [1, 1], strides = [1, 1]} : vector<8x2048xf32> to vector<1x1xf32>
    %8 = vector.extract_strided_slice %2 {offsets = [1, 769], sizes = [1, 1], strides = [1, 1]} : vector<8x2048xf32> to vector<1x1xf32>
    %9 = vector.extract_strided_slice %2 {offsets = [1, 770], sizes = [1, 1], strides = [1, 1]} : vector<8x2048xf32> to vector<1x1xf32>
    %cst = arith.constant dense<0.000000e+00> : vector<2xf32>
    %10 = vector.multi_reduction <add>, %0, %cst [1] : vector<2x2048xf32> to vector<2xf32>
    %11 = vector.shape_cast %10 : vector<2xf32> to vector<2x1xf32>
    %cst_4 = arith.constant 2.048000e+03 : f32
    %12 = vector.broadcast %cst_4 : f32 to vector<2x1xf32>
    %13 = arith.divf %11, %12 : vector<2x1xf32>
    %cst_5 = arith.constant dense<0xFF800000> : vector<2xf32>
    %14 = vector.multi_reduction <maximumf>, %0, %cst_5 [1] : vector<2x2048xf32> to vector<2xf32>
    %15 = vector.shape_cast %14 : vector<2xf32> to vector<2x1xf32>
    %16 = vector.broadcast %7 : vector<1x1xf32> to vector<2x1xf32>
    %17 = arith.mulf %13, %16 : vector<2x1xf32>
    %18 = vector.broadcast %8 : vector<1x1xf32> to vector<2x1xf32>
    %19 = arith.mulf %15, %18 : vector<2x1xf32>
    %20 = arith.addf %17, %19 : vector<2x1xf32>
    %21 = vector.broadcast %9 : vector<1x1xf32> to vector<2x1xf32>
    %22 = arith.addf %20, %21 : vector<2x1xf32>
    %23 = arith.negf %22 : vector<2x1xf32>
    %24 = math.exp %23 : vector<2x1xf32>
    %cst_6 = arith.constant 1.000000e+00 : f32
    %25 = vector.broadcast %cst_6 : f32 to vector<2x1xf32>
    %26 = arith.addf %25, %24 : vector<2x1xf32>
    %27 = arith.divf %25, %26 : vector<2x1xf32>
    %28 = arith.truncf %0 : vector<2x2048xf32> to vector<2x2048xbf16>
    %c0_7 = arith.constant 0 : index
    %c0_8 = arith.constant 0 : index
    %c0_9 = arith.constant 0 : index
    %29 = vector.load %arg2[%c0_7, %c0_8, %c0_9] : memref<1x2048x128xbf16, #tpu.memory_space<vmem>>, vector<1x2048x128xbf16>
    %30 = vector.shape_cast %29 : vector<1x2048x128xbf16> to vector<2048x128xbf16>
    %cst_10 = arith.constant dense<0.000000e+00> : vector<2x128xf32>
    %31 = tpu.matmul %28, %30, %cst_10 {dimension_numbers = #tpu.dot_dimension_numbers<[1], [0], [0], [1], [0, 0, 1, 1], [], []>} : vector<2x2048xbf16>, vector<2048x128xbf16>, vector<2x128xf32> -> vector<2x128xf32>
    %32 = vector.broadcast %5 : vector<1x128xf32> to vector<2x128xf32>
    %33 = arith.addf %31, %32 : vector<2x128xf32>
    %cst_11 = arith.constant 0.000000e+00 : f32
    %34 = vector.broadcast %cst_11 : f32 to vector<2x128xf32>
    %35 = arith.maximumf %33, %34 : vector<2x128xf32>
    %36 = arith.truncf %35 : vector<2x128xf32> to vector<2x128xbf16>
    %c0_12 = arith.constant 0 : index
    %c0_13 = arith.constant 0 : index
    %c0_14 = arith.constant 0 : index
    %37 = vector.load %arg3[%c0_12, %c0_13, %c0_14] : memref<1x128x2048xbf16, #tpu.memory_space<vmem>>, vector<1x128x2048xbf16>
    %38 = vector.shape_cast %37 : vector<1x128x2048xbf16> to vector<128x2048xbf16>
    %cst_15 = arith.constant dense<0.000000e+00> : vector<2x2048xf32>
    %39 = tpu.matmul %36, %38, %cst_15 {dimension_numbers = #tpu.dot_dimension_numbers<[1], [0], [0], [1], [0, 0, 1, 1], [], []>} : vector<2x128xbf16>, vector<128x2048xbf16>, vector<2x2048xf32> -> vector<2x2048xf32>
    %40 = vector.broadcast %3 : vector<1x2048xf32> to vector<2x2048xf32>
    %41 = arith.addf %39, %40 : vector<2x2048xf32>
    %cst_16 = arith.constant 2.000000e+00 : f32
    %42 = vector.broadcast %cst_16 : f32 to vector<2x2048xf32>
    %43 = arith.mulf %42, %41 : vector<2x2048xf32>
    %44 = arith.negf %43 : vector<2x2048xf32>
    %45 = math.exp %44 : vector<2x2048xf32>
    %cst_17 = arith.constant 1.000000e+00 : f32
    %46 = vector.broadcast %cst_17 : f32 to vector<2x2048xf32>
    %47 = arith.addf %46, %45 : vector<2x2048xf32>
    %48 = arith.divf %46, %47 : vector<2x2048xf32>
    %49 = arith.mulf %0, %48 : vector<2x2048xf32>
    %50 = vector.broadcast %27 : vector<2x1xf32> to vector<2x2048xf32>
    %51 = arith.mulf %49, %50 : vector<2x2048xf32>
    %52 = arith.truncf %51 : vector<2x2048xf32> to vector<2x2048xbf16>
    %c0_18 = arith.constant 0 : index
    %c0_19 = arith.constant 0 : index
    %c0_20 = arith.constant 0 : index
    %53 = vector.load %arg4[%c0_18, %c0_19, %c0_20] : memref<1x2048x512xbf16, #tpu.memory_space<vmem>>, vector<1x2048x512xbf16>
    %54 = vector.shape_cast %53 : vector<1x2048x512xbf16> to vector<2048x512xbf16>
    %cst_21 = arith.constant dense<0.000000e+00> : vector<2x512xf32>
    %55 = tpu.matmul %52, %54, %cst_21 {dimension_numbers = #tpu.dot_dimension_numbers<[1], [0], [0], [1], [0, 0, 1, 1], [], []>} : vector<2x2048xbf16>, vector<2048x512xbf16>, vector<2x512xf32> -> vector<2x512xf32>
    %56 = vector.broadcast %4 : vector<1x512xf32> to vector<2x512xf32>
    %57 = arith.addf %55, %56 : vector<2x512xf32>
    %cst_22 = arith.constant 0.000000e+00 : f32
    %58 = vector.broadcast %cst_22 : f32 to vector<2x512xf32>
    %59 = arith.maximumf %57, %58 : vector<2x512xf32>
    %60 = arith.truncf %59 : vector<2x512xf32> to vector<2x512xbf16>
    %c0_23 = arith.constant 0 : index
    %c0_24 = arith.constant 0 : index
    %c0_25 = arith.constant 0 : index
    %61 = vector.load %arg5[%c0_23, %c0_24, %c0_25] : memref<1x512x128xbf16, #tpu.memory_space<vmem>>, vector<1x512x128xbf16>
    %62 = vector.shape_cast %61 : vector<1x512x128xbf16> to vector<512x128xbf16>
    %cst_26 = arith.constant dense<0.000000e+00> : vector<2x128xf32>
    %63 = tpu.matmul %60, %62, %cst_26 {dimension_numbers = #tpu.dot_dimension_numbers<[1], [0], [0], [1], [0, 0, 1, 1], [], []>} : vector<2x512xbf16>, vector<512x128xbf16>, vector<2x128xf32> -> vector<2x128xf32>
    %64 = vector.broadcast %6 : vector<1x128xf32> to vector<2x128xf32>
    %65 = arith.addf %63, %64 : vector<2x128xf32>
    %c0_27 = arith.constant 0 : index
    %c0_28 = arith.constant 0 : index
    %c0_29 = arith.constant 0 : index
    %66 = vector.load %arg7[%c0_27, %c0_28, %c0_29] : memref<1x2x128xf32, #tpu.memory_space<vmem>>, vector<1x2x128xf32>
    %67 = vector.shape_cast %66 : vector<1x2x128xf32> to vector<2x128xf32>
    %68 = vector.shape_cast %65 : vector<2x128xf32> to vector<1x2x128xf32>
    tpu.vector_store %arg7[%c0_27, %c0_28, %c0_29], %68 {strides = array<i32>} : memref<1x2x128xf32, #tpu.memory_space<vmem>>, vector<1x2x128xf32>,
    %c2_i32 = arith.constant 2 : i32
    %69 = arith.cmpi sge, %arg0, %c2_i32 : i32
    %70 = arith.extui %69 : i1 to i32
    %c0_i32 = arith.constant 0 : i32
    %71 = arith.cmpi ne, %70, %c0_i32 : i32
    scf.if %71 {
      %72 = arith.negf %65 : vector<2x128xf32>
      %73 = math.exp %72 : vector<2x128xf32>
      %cst_30 = arith.constant 1.000000e+00 : f32
      %74 = vector.broadcast %cst_30 : f32 to vector<2x128xf32>
      %75 = arith.addf %74, %73 : vector<2x128xf32>
      %76 = arith.divf %74, %75 : vector<2x128xf32>
      %c0_31 = arith.constant 0 : index
      %c0_32 = arith.constant 0 : index
      %c0_33 = arith.constant 0 : index
      %77 = vector.load %arg7[%c0_31, %c0_32, %c0_33] : memref<1x2x128xf32, #tpu.memory_space<vmem>>, vector<1x2x128xf32>
      %78 = vector.shape_cast %77 : vector<1x2x128xf32> to vector<2x128xf32>
      %79 = vector.shape_cast %76 : vector<2x128xf32> to vector<1x2x128xf32>
      tpu.vector_store %arg7[%c0_31, %c0_32, %c0_33], %79 {strides = array<i32>} : memref<1x2x128xf32, #tpu.memory_space<vmem>>, vector<1x2x128xf32>,
    } else {
    }
    return
  }
  func.func @transform_0(%arg0: i32) -> (i32, i32) {
    %c0_i32 = arith.constant 0 : i32
    %c0_i32_0 = arith.constant 0 : i32
    %c0_i32_1 = arith.constant 0 : i32
    return %c0_i32, %c0_i32_0 : i32, i32
  }
  func.func @transform_1(%arg0: i32) -> (i32, i32, i32) {
    %c0_i32 = arith.constant 0 : i32
    %c0_i32_0 = arith.constant 0 : i32
    %c0_i32_1 = arith.constant 0 : i32
    return %arg0, %c0_i32, %c0_i32_0 : i32, i32, i32
  }
  func.func @transform_2(%arg0: i32) -> (i32, i32, i32) {
    %c0_i32 = arith.constant 0 : i32
    %c0_i32_0 = arith.constant 0 : i32
    %c0_i32_1 = arith.constant 0 : i32
    return %arg0, %c0_i32, %c0_i32_0 : i32, i32, i32
  }
  func.func @transform_3(%arg0: i32) -> (i32, i32, i32) {
    %c0_i32 = arith.constant 0 : i32
    %c0_i32_0 = arith.constant 0 : i32
    %c0_i32_1 = arith.constant 0 : i32
    return %arg0, %c0_i32, %c0_i32_0 : i32, i32, i32
  }
  func.func @transform_4(%arg0: i32) -> (i32, i32, i32) {
    %c0_i32 = arith.constant 0 : i32
    %c0_i32_0 = arith.constant 0 : i32
    %c0_i32_1 = arith.constant 0 : i32
    return %arg0, %c0_i32, %c0_i32_0 : i32, i32, i32
  }
  func.func @transform_5(%arg0: i32) -> (i32, i32, i32) {
    %c0_i32 = arith.constant 0 : i32
    %c0_i32_0 = arith.constant 0 : i32
    %c0_i32_1 = arith.constant 0 : i32
    return %arg0, %c0_i32, %c0_i32_0 : i32, i32, i32
  }
  func.func @transform_6(%arg0: i32) -> (i32, i32, i32) {
    %c0_i32 = arith.constant 0 : i32
    %c0_i32_0 = arith.constant 0 : i32
    %c0_i32_1 = arith.constant 0 : i32
    return %arg0, %c0_i32, %c0_i32_0 : i32, i32, i32
  }
}

</mosaic_0001>

<llo_original>
// kernel: tpu_custom_call.1
$region0: #{tpu_custom_call.1}
  #allocation0 [shape = 'u32[]', space=smem, size = 0x4, offset = 0x4, fixed_abs, tag = 'smem constant byte address 0x4 - core index']
  #allocation1 [shape = 'u32[144,128]{1,0:T(1,128)}', space=vmem, size = 0x12000, scoped, tag = 'internal scratch']
  %s0 = inlined_call_operand.hbm [shape: f32[2,2048], index: 0, kind: input, shape index: {}]
  %s1 = inlined_call_operand.hbm [shape: bf16[5,2048,128], index: 1, kind: input, shape index: {}]
  %s2 = inlined_call_operand.hbm [shape: bf16[5,128,2048], index: 2, kind: input, shape index: {}]
  %s3 = inlined_call_operand.hbm [shape: bf16[5,2048,512], index: 3, kind: input, shape index: {}]
  %s4 = inlined_call_operand.hbm [shape: bf16[5,512,128], index: 4, kind: input, shape index: {}]
  %s5 = inlined_call_operand.hbm [shape: f32[5,8,2048], index: 5, kind: input, shape index: {}]
  %s6 = inlined_call_operand.hbm [shape: f32[5,2,128], index: 6, kind: output, shape index: {}]
  %s7 = sld [smem:[#allocation0]]
  $region85: #{tpu_custom_call.1} parent=0
    _
  %s9 = ssub.s32 1, %s7
  %s10 = scalar_select 0, %s9, %s7
  $region1: #{tpu_custom_call.1} parent=0
    #allocation2 [shape = 'u8[16384]{0}', space=vmem, size = 0x4000, scoped, tag = 'input window, operand 0, single buffered']
    #allocation3 [shape = 's32[2]{0}', space=sflag, size = 0x8, scoped, tag = 'scoped memory for tpu_custom_call.1']
    #allocation4 [shape = 's32[2]{0}', space=sflag, size = 0x8, scoped, tag = 'scoped memory for tpu_custom_call.1']
    #allocation5 [shape = 'u8[1048576]{0}', space=vmem, size = 0x100000, scoped, tag = 'input window, operand 1']
    #allocation6 [shape = 's32[2]{0}', space=sflag, size = 0x8, scoped, tag = 'scoped memory for tpu_custom_call.1']
    #allocation7 [shape = 'u8[1048576]{0}', space=vmem, size = 0x100000, scoped, tag = 'input window, operand 2']
    #allocation8 [shape = 'u8[4194304]{0}', space=vmem, size = 0x400000, scoped, tag = 'input window, operand 3']
    #allocation9 [shape = 's32[2]{0}', space=sflag, size = 0x8, scoped, tag = 'scoped memory for tpu_custom_call.1']
    #allocation10 [shape = 'u8[262144]{0}', space=vmem, size = 0x40000, scoped, tag = 'input window, operand 4']
    #allocation11 [shape = 'u8[131072]{0}', space=vmem, size = 0x20000, scoped, tag = 'input window, operand 5']
    #allocation12 [shape = 's32[2]{0}', space=sflag, size = 0x8, scoped, tag = 'scoped memory for tpu_custom_call.1']
    #allocation13 [shape = 'u8[2048]{0}', space=vmem, size = 0x800, scoped, tag = 'output window, operand 0']
    %11 = vsyncpa [#allocation3], 0
    %12 = vsyncpa [#allocation6], 0
    %s13 = scalar_lea.sflag [#allocation6], 1
    %14 = vsyncpa %s13, 0
    %15 = vsyncpa [#allocation9], 0
    %s16 = scalar_lea.sflag [#allocation9], 1
    %17 = vsyncpa %s16, 0
    %18 = vsyncpa [#allocation12], 0
    %s19 = scalar_lea.sflag [#allocation12], 1
    %20 = vsyncpa %s19, 0
    %21 = vsyncpa [#allocation4], 0
    %s22 = scalar_lea.sflag [#allocation4], 1
    %23 = vsyncpa %s22, 0
    loop: start=0, step=1, limit=7
    $region2: #{tpu_custom_call.1} parent=1 // loop_pre_header
      _
    $region3: #{tpu_custom_call.1} parent=1 // loop_header
      %s25 = sphi 0, %s29
      %p26 = scmp.ge.s32.totalorder %s25, 7
      %s33 = sphi 0, %s33
      %s35 = sphi 0, %s33
      %s36 = sphi 0, %s35
      %s50 = sphi 0, %s36
      %s56 = sphi 0, %s58
      %s59 = sphi 0, %s56
      %s60 = sphi 0, %s59
      %s76 = sphi 0, %s60
      %s82 = sphi 0, %s84
      %s85 = sphi 0, %s82
      %s86 = sphi 0, %s85
      %s102 = sphi 0, %s86
      %s108 = sphi 0, %s110
      %s111 = sphi 0, %s108
      %s112 = sphi 0, %s111
      %s128 = sphi 0, %s112
      %s134 = sphi 0, %s136
      %s137 = sphi 0, %s134
      %s138 = sphi 0, %s137
      %s154 = sphi 0, %s138
      %s160 = sphi 0, %s162
      %s163 = sphi 0, %s160
      %s164 = sphi 0, %s163
      %s180 = sphi 0, %s164
      %s186 = sphi 0, %s188
      %s189 = sphi 0, %s186
      %s190 = sphi 0, %s189
      %s206 = sphi 0, %s190
    $region4: #{tpu_custom_call.1} parent=1 // loop_header_branch
      %28 = sbr.rel (%p26) target = $region8
    $region5: #{tpu_custom_call.1} parent=1 // loop_body
      %s30 = ssub.s32 %s25, 1
      %s31 = ssub.s32 %s25, 2
      %s32 = sadd.s32 %s25, 1
      %s34 = sadd.s32 %s33, 1
      %p37 = scmp.eq.s32.totalorder %s25, 4
      %p38 = scmp.ne.s32.totalorder %s33, %s35
      %p39 = scmp.eq.s32.totalorder %s25, 0
      %p40 = por %p38, %p39
      %p41 = scmp.ne.s32.totalorder %s33, %s35
      %p42 = scmp.eq.s32.totalorder %s30, 4
      %p43 = por %p41, %p42
      %p44 = scmp.ne.s32.totalorder %s35, %s36
      %p45 = scmp.eq.s32.totalorder %s30, 0
      %p46 = por %p44, %p45
      %p47 = scmp.ne.s32.totalorder %s35, %s36
      %p48 = scmp.eq.s32.totalorder %s31, 4
      %p49 = por %p47, %p48
      %p51 = scmp.ne.s32.totalorder %s36, %s50
      %p52 = scmp.eq.s32.totalorder %s31, 0
      %p53 = por %p51, %p52
      %s54 = ssub.s32 %s25, %s32
      %p55 = scmp.eq.s32.totalorder %s54, 0
      %s57 = sadd.s32 %s56, 1
      %s58 = scalar_select %p55, %s56, %s57
      %p61 = pneg %p55
      %p62 = scmp.eq.s32.totalorder %s25, 4
      %p63 = por %p61, %p62
      %p64 = scmp.ne.s32.totalorder %s56, %s59
      %p65 = scmp.eq.s32.totalorder %s25, 0
      %p66 = por %p64, %p65
      %p67 = scmp.ne.s32.totalorder %s56, %s59
      %p68 = scmp.eq.s32.totalorder %s30, 4
      %p69 = por %p67, %p68
      %p70 = scmp.ne.s32.totalorder %s59, %s60
      %p71 = scmp.eq.s32.totalorder %s30, 0
      %p72 = por %p70, %p71
      %p73 = scmp.ne.s32.totalorder %s59, %s60
      %p74 = scmp.eq.s32.totalorder %s31, 4
      %p75 = por %p73, %p74
      %p77 = scmp.ne.s32.totalorder %s60, %s76
      %p78 = scmp.eq.s32.totalorder %s31, 0
      %p79 = por %p77, %p78
      %s80 = ssub.s32 %s25, %s32
      %p81 = scmp.eq.s32.totalorder %s80, 0
      %s83 = sadd.s32 %s82, 1
      %s84 = scalar_select %p81, %s82, %s83
      %p87 = pneg %p81
      %p88 = scmp.eq.s32.totalorder %s25, 4
      %p89 = por %p87, %p88
      %p90 = scmp.ne.s32.totalorder %s82, %s85
      %p91 = scmp.eq.s32.totalorder %s25, 0
      %p92 = por %p90, %p91
      %p93 = scmp.ne.s32.totalorder %s82, %s85
      %p94 = scmp.eq.s32.totalorder %s30, 4
      %p95 = por %p93, %p94
      %p96 = scmp.ne.s32.totalorder %s85, %s86
      %p97 = scmp.eq.s32.totalorder %s30, 0
      %p98 = por %p96, %p97
      %p99 = scmp.ne.s32.totalorder %s85, %s86
      %p100 = scmp.eq.s32.totalorder %s31, 4
      %p101 = por %p99, %p100
      %p103 = scmp.ne.s32.totalorder %s86, %s102
      %p104 = scmp.eq.s32.totalorder %s31, 0
      %p105 = por %p103, %p104
      %s106 = ssub.s32 %s25, %s32
      %p107 = scmp.eq.s32.totalorder %s106, 0
      %s109 = sadd.s32 %s108, 1
      %s110 = scalar_select %p107, %s108, %s109
      %p113 = pneg %p107
      %p114 = scmp.eq.s32.totalorder %s25, 4
      %p115 = por %p113, %p114
      %p116 = scmp.ne.s32.totalorder %s108, %s111
      %p117 = scmp.eq.s32.totalorder %s25, 0
      %p118 = por %p116, %p117
      %p119 = scmp.ne.s32.totalorder %s108, %s111
      %p120 = scmp.eq.s32.totalorder %s30, 4
      %p121 = por %p119, %p120
      %p122 = scmp.ne.s32.totalorder %s111, %s112
      %p123 = scmp.eq.s32.totalorder %s30, 0
      %p124 = por %p122, %p123
      %p125 = scmp.ne.s32.totalorder %s111, %s112
      %p126 = scmp.eq.s32.totalorder %s31, 4
      %p127 = por %p125, %p126
      %p129 = scmp.ne.s32.totalorder %s112, %s128
      %p130 = scmp.eq.s32.totalorder %s31, 0
      %p131 = por %p129, %p130
      %s132 = ssub.s32 %s25, %s32
      %p133 = scmp.eq.s32.totalorder %s132, 0
      %s135 = sadd.s32 %s134, 1
      %s136 = scalar_select %p133, %s134, %s135
      %p139 = pneg %p133
      %p140 = scmp.eq.s32.totalorder %s25, 4
      %p141 = por %p139, %p140
      %p142 = scmp.ne.s32.totalorder %s134, %s137
      %p143 = scmp.eq.s32.totalorder %s25, 0
      %p144 = por %p142, %p143
      %p145 = scmp.ne.s32.totalorder %s134, %s137
      %p146 = scmp.eq.s32.totalorder %s30, 4
      %p147 = por %p145, %p146
      %p148 = scmp.ne.s32.totalorder %s137, %s138
      %p149 = scmp.eq.s32.totalorder %s30, 0
      %p150 = por %p148, %p149
      %p151 = scmp.ne.s32.totalorder %s137, %s138
      %p152 = scmp.eq.s32.totalorder %s31, 4
      %p153 = por %p151, %p152
      %p155 = scmp.ne.s32.totalorder %s138, %s154
      %p156 = scmp.eq.s32.totalorder %s31, 0
      %p157 = por %p155, %p156
      %s158 = ssub.s32 %s25, %s32
      %p159 = scmp.eq.s32.totalorder %s158, 0
      %s161 = sadd.s32 %s160, 1
      %s162 = scalar_select %p159, %s160, %s161
      %p165 = pneg %p159
      %p166 = scmp.eq.s32.totalorder %s25, 4
      %p167 = por %p165, %p166
      %p168 = scmp.ne.s32.totalorder %s160, %s163
      %p169 = scmp.eq.s32.totalorder %s25, 0
      %p170 = por %p168, %p169
      %p171 = scmp.ne.s32.totalorder %s160, %s163
      %p172 = scmp.eq.s32.totalorder %s30, 4
      %p173 = por %p171, %p172
      %p174 = scmp.ne.s32.totalorder %s163, %s164
      %p175 = scmp.eq.s32.totalorder %s30, 0
      %p176 = por %p174, %p175
      %p177 = scmp.ne.s32.totalorder %s163, %s164
      %p178 = scmp.eq.s32.totalorder %s31, 4
      %p179 = por %p177, %p178
      %p181 = scmp.ne.s32.totalorder %s164, %s180
      %p182 = scmp.eq.s32.totalorder %s31, 0
      %p183 = por %p181, %p182
      %s184 = ssub.s32 %s25, %s32
      %p185 = scmp.eq.s32.totalorder %s184, 0
      %s187 = sadd.s32 %s186, 1
      %s188 = scalar_select %p185, %s186, %s187
      %p191 = pneg %p185
      %p192 = scmp.eq.s32.totalorder %s25, 4
      %p193 = por %p191, %p192
      %p194 = scmp.ne.s32.totalorder %s186, %s189
      %p195 = scmp.eq.s32.totalorder %s25, 0
      %p196 = por %p194, %p195
      %p197 = scmp.ne.s32.totalorder %s186, %s189
      %p198 = scmp.eq.s32.totalorder %s30, 4
      %p199 = por %p197, %p198
      %p200 = scmp.ne.s32.totalorder %s189, %s190
      %p201 = scmp.eq.s32.totalorder %s30, 0
      %p202 = por %p200, %p201
      %p203 = scmp.ne.s32.totalorder %s189, %s190
      %p204 = scmp.eq.s32.totalorder %s31, 4
      %p205 = por %p203, %p204
      %p207 = scmp.ne.s32.totalorder %s190, %s206
      %p208 = scmp.eq.s32.totalorder %s31, 0
      %p209 = por %p207, %p208
      %p210 = scmp.le.s32.totalorder 1, %s25
      %p211 = scmp.lt.s32.totalorder %s25, 6
      %p212 = pnand %p210, %p211
      %p213 = pneg %p212
      // Predicated region
      $region9: #{tpu_custom_call.1} parent=5 // pred_check
        _
      $region10: #{tpu_custom_call.1} parent=5 // pred_check_branch
        %215 = sbr.rel (%p212) target = $region12
      $region11: #{tpu_custom_call.1} parent=5 // pred_region
        %s216 = ssub.s32 %s25, 1
        // Predicated region
        $region13: #{tpu_custom_call.1} parent=11 // pred_check
          %p217 = pneg %p46
        $region14: #{tpu_custom_call.1} parent=11 // pred_check_branch
          %219 = sbr.rel (%p217) target = $region16
        $region15: #{tpu_custom_call.1} parent=11 // pred_region
          %s221 = ssub.s32 512, 512
          %222 = vsyncadd [#allocation3], %s221
          %s224 = sshll.u32 [#allocation2], 4
          %s225 = int_to_ptr.vmem [resolvable:$true] %s224
          %227 = dma.hbm_to_vmem [thread:$0]  %s0, 512, %s225, [#allocation3]
        $region16: #{tpu_custom_call.1} parent=11 // pred_fallthru
          _
      $region12: #{tpu_custom_call.1} parent=5 // pred_fallthru
        _
      %p228 = scmp.lt.s32.totalorder %s25, 5
      // Predicated region
      $region17: #{tpu_custom_call.1} parent=5 // pred_check
        %p229 = pneg %p228
      $region18: #{tpu_custom_call.1} parent=5 // pred_check_branch
        %231 = sbr.rel (%p229) target = $region20
      $region19: #{tpu_custom_call.1} parent=5 // pred_region
        // Predicated region
        $region21: #{tpu_custom_call.1} parent=19 // pred_check
          %p232 = pneg %p66
        $region22: #{tpu_custom_call.1} parent=19 // pred_check_branch
          %234 = sbr.rel (%p232) target = $region24
        $region23: #{tpu_custom_call.1} parent=19 // pred_region
          %s235 = sand.u32 %s25, 1
          %s236 = scalar_lea.sflag [#allocation6], %s235
          %s237 = sand.u32 %s56, 1
          %s238 = smul.addr %s237, 1024
          %s239 = scalar_lea.vmem [#allocation5], %s238
          %s241 = ssub.s32 16384, 16384
          %242 = vsyncadd %s236, %s241
          %s243 = smul.addr %s25, 256
          %s244 = smul.addr %s243, 64
          %s245 = scalar_lea.hbm %s1, %s244
          %s246 = sshll.u32 %s239, 4
          %s247 = int_to_ptr.vmem [resolvable:$true] %s246
          %252 = dma.hbm_to_vmem [thread:$0]  %s245, 16384, %s247, %s236, 64, 64, 4
        $region24: #{tpu_custom_call.1} parent=19 // pred_fallthru
          _
        // Predicated region
        $region25: #{tpu_custom_call.1} parent=19 // pred_check
          %p253 = pneg %p92
        $region26: #{tpu_custom_call.1} parent=19 // pred_check_branch
          %255 = sbr.rel (%p253) target = $region28
        $region27: #{tpu_custom_call.1} parent=19 // pred_region
          %s256 = sand.u32 %s25, 1
          %s257 = scalar_lea.sflag [#allocation6], %s256
          %s258 = sand.u32 %s82, 1
          %s259 = smul.addr %s258, 1024
          %s260 = scalar_lea.vmem [#allocation7], %s259
          %s262 = ssub.s32 16384, 16384
          %263 = vsyncadd %s257, %s262
          %s264 = smul.addr %s25, 256
          %s265 = smul.addr %s264, 64
          %s266 = scalar_lea.hbm %s2, %s265
          %s267 = sshll.u32 %s260, 4
          %s268 = int_to_ptr.vmem [resolvable:$true] %s267
          %273 = dma.hbm_to_vmem [thread:$0]  %s266, 16384, %s268, %s257, 1024, 1024, 64
        $region28: #{tpu_custom_call.1} parent=19 // pred_fallthru
          _
        // Predicated region
        $region29: #{tpu_custom_call.1} parent=19 // pred_check
          %p274 = pneg %p118
        $region30: #{tpu_custom_call.1} parent=19 // pred_check_branch
          %276 = sbr.rel (%p274) target = $region32
        $region31: #{tpu_custom_call.1} parent=19 // pred_region
          %s277 = sand.u32 %s25, 1
          %s278 = scalar_lea.sflag [#allocation9], %s277
          %s279 = sand.u32 %s108, 1
          %s280 = smul.addr %s279, 4096
          %s281 = scalar_lea.vmem [#allocation8], %s280
          %s283 = ssub.s32 65536, 65536
          %284 = vsyncadd %s278, %s283
          %s285 = smul.addr %s25, 1024
          %s286 = smul.addr %s285, 64
          %s287 = scalar_lea.hbm %s3, %s286
          %s288 = sshll.u32 %s281, 4
          %s289 = int_to_ptr.vmem [resolvable:$true] %s288
          %294 = dma.hbm_to_vmem [thread:$0]  %s287, 65536, %s289, %s278, 256, 256, 16
        $region32: #{tpu_custom_call.1} parent=19 // pred_fallthru
          _
        // Predicated region
        $region33: #{tpu_custom_call.1} parent=19 // pred_check
          %p295 = pneg %p144
        $region34: #{tpu_custom_call.1} parent=19 // pred_check_branch
          %297 = sbr.rel (%p295) target = $region36
        $region35: #{tpu_custom_call.1} parent=19 // pred_region
          %s298 = sand.u32 %s25, 1
          %s299 = scalar_lea.sflag [#allocation9], %s298
          %s300 = sand.u32 %s134, 1
          %s301 = smul.addr %s300, 256
          %s302 = scalar_lea.vmem [#allocation10], %s301
          %s304 = ssub.s32 4096, 4096
          %305 = vsyncadd %s299, %s304
          %s306 = smul.addr %s25, 64
          %s307 = smul.addr %s306, 64
          %s308 = scalar_lea.hbm %s4, %s307
          %s309 = sshll.u32 %s302, 4
          %s310 = int_to_ptr.vmem [resolvable:$true] %s309
          %315 = dma.hbm_to_vmem [thread:$0]  %s308, 4096, %s310, %s299, 64, 64, 4
        $region36: #{tpu_custom_call.1} parent=19 // pred_fallthru
          _
        // Predicated region
        $region37: #{tpu_custom_call.1} parent=19 // pred_check
          %p316 = pneg %p170
        $region38: #{tpu_custom_call.1} parent=19 // pred_check_branch
          %318 = sbr.rel (%p316) target = $region40
        $region39: #{tpu_custom_call.1} parent=19 // pred_region
          %s319 = sand.u32 %s160, 1
          %s320 = scalar_lea.sflag [#allocation12], %s319
          %s321 = sand.u32 %s160, 1
          %s322 = smul.addr %s321, 128
          %s323 = scalar_lea.vmem [#allocation11], %s322
          %s325 = ssub.s32 2048, 2048
          %326 = vsyncadd %s320, %s325
          %s327 = smul.addr %s25, 16
          %s328 = smul.addr %s327, 128
          %s329 = scalar_lea.hbm %s5, %s328
          %s331 = sshll.u32 %s323, 4
          %s332 = int_to_ptr.vmem [resolvable:$true] %s331
          %334 = dma.hbm_to_vmem [thread:$0]  %s329, 2048, %s332, %s320
        $region40: #{tpu_custom_call.1} parent=19 // pred_fallthru
          _
      $region20: #{tpu_custom_call.1} parent=5 // pred_fallthru
        _
      %p335 = scmp.le.s32.totalorder 1, %s25
      %p336 = scmp.lt.s32.totalorder %s25, 6
      %p337 = pnand %p335, %p336
      %p338 = pneg %p337
      // Predicated region
      $region41: #{tpu_custom_call.1} parent=5 // pred_check
        _
      $region42: #{tpu_custom_call.1} parent=5 // pred_check_branch
        %340 = sbr.rel (%p337) target = $region44
      $region43: #{tpu_custom_call.1} parent=5 // pred_region
        %s341 = ssub.s32 %s25, 1
        // Predicated region
        $region45: #{tpu_custom_call.1} parent=43 // pred_check
          %p342 = pneg %p46
        $region46: #{tpu_custom_call.1} parent=43 // pred_check_branch
          %344 = sbr.rel (%p342) target = $region48
        $region47: #{tpu_custom_call.1} parent=43 // pred_region
          %345 = dma.done [#allocation3], 512
        $region48: #{tpu_custom_call.1} parent=43 // pred_fallthru
          _
        %s346 = sand.u32 %s30, 1
        %s347 = scalar_lea.sflag [#allocation6], %s346
        %s348 = sand.u32 %s59, 1
        %s349 = smul.addr %s348, 1024
        %s350 = scalar_lea.vmem [#allocation5], %s349
        // Predicated region
        $region49: #{tpu_custom_call.1} parent=43 // pred_check
          %p351 = pneg %p72
        $region50: #{tpu_custom_call.1} parent=43 // pred_check_branch
          %353 = sbr.rel (%p351) target = $region52
        $region51: #{tpu_custom_call.1} parent=43 // pred_region
          %354 = dma.done %s347, 16384
        $region52: #{tpu_custom_call.1} parent=43 // pred_fallthru
          _
        %s355 = sand.u32 %s30, 1
        %s356 = scalar_lea.sflag [#allocation6], %s355
        %s357 = sand.u32 %s85, 1
        %s358 = smul.addr %s357, 1024
        %s359 = scalar_lea.vmem [#allocation7], %s358
        // Predicated region
        $region53: #{tpu_custom_call.1} parent=43 // pred_check
          %p360 = pneg %p98
        $region54: #{tpu_custom_call.1} parent=43 // pred_check_branch
          %362 = sbr.rel (%p360) target = $region56
        $region55: #{tpu_custom_call.1} parent=43 // pred_region
          %363 = dma.done %s356, 16384
        $region56: #{tpu_custom_call.1} parent=43 // pred_fallthru
          _
        %s364 = sand.u32 %s30, 1
        %s365 = scalar_lea.sflag [#allocation9], %s364
        %s366 = sand.u32 %s111, 1
        %s367 = smul.addr %s366, 4096
        %s368 = scalar_lea.vmem [#allocation8], %s367
        // Predicated region
        $region57: #{tpu_custom_call.1} parent=43 // pred_check
          %p369 = pneg %p124
        $region58: #{tpu_custom_call.1} parent=43 // pred_check_branch
          %371 = sbr.rel (%p369) target = $region60
        $region59: #{tpu_custom_call.1} parent=43 // pred_region
          %372 = dma.done %s365, 65536
        $region60: #{tpu_custom_call.1} parent=43 // pred_fallthru
          _
        %s373 = sand.u32 %s30, 1
        %s374 = scalar_lea.sflag [#allocation9], %s373
        %s375 = sand.u32 %s137, 1
        %s376 = smul.addr %s375, 256
        %s377 = scalar_lea.vmem [#allocation10], %s376
        // Predicated region
        $region61: #{tpu_custom_call.1} parent=43 // pred_check
          %p378 = pneg %p150
        $region62: #{tpu_custom_call.1} parent=43 // pred_check_branch
          %380 = sbr.rel (%p378) target = $region64
        $region63: #{tpu_custom_call.1} parent=43 // pred_region
          %381 = dma.done %s374, 4096
        $region64: #{tpu_custom_call.1} parent=43 // pred_fallthru
          _
        %s382 = sand.u32 %s163, 1
        %s383 = scalar_lea.sflag [#allocation12], %s382
        %s384 = sand.u32 %s163, 1
        %s385 = smul.addr %s384, 128
        %s386 = scalar_lea.vmem [#allocation11], %s385
        // Predicated region
        $region65: #{tpu_custom_call.1} parent=43 // pred_check
          %p387 = pneg %p176
        $region66: #{tpu_custom_call.1} parent=43 // pred_check_branch
          %389 = sbr.rel (%p387) target = $region68
        $region67: #{tpu_custom_call.1} parent=43 // pred_region
          %390 = dma.done %s383, 2048
        $region68: #{tpu_custom_call.1} parent=43 // pred_fallthru
          _
        %p391 = pneg %p46
        %p392 = pneg %p43
        %s393 = sand.u32 %s30, 1
        %s394 = scalar_lea.sflag [#allocation6], %s393
        %s395 = sand.u32 %s59, 1
        %s396 = smul.addr %s395, 1024
        %s397 = scalar_lea.vmem [#allocation5], %s396
        %p398 = pneg %p72
        %p399 = pneg %p69
        %s400 = sand.u32 %s30, 1
        %s401 = scalar_lea.sflag [#allocation6], %s400
        %s402 = sand.u32 %s85, 1
        %s403 = smul.addr %s402, 1024
        %s404 = scalar_lea.vmem [#allocation7], %s403
        %p405 = pneg %p98
        %p406 = pneg %p95
        %s407 = sand.u32 %s30, 1
        %s408 = scalar_lea.sflag [#allocation9], %s407
        %s409 = sand.u32 %s111, 1
        %s410 = smul.addr %s409, 4096
        %s411 = scalar_lea.vmem [#allocation8], %s410
        %p412 = pneg %p124
        %p413 = pneg %p121
        %s414 = sand.u32 %s30, 1
        %s415 = scalar_lea.sflag [#allocation9], %s414
        %s416 = sand.u32 %s137, 1
        %s417 = smul.addr %s416, 256
        %s418 = scalar_lea.vmem [#allocation10], %s417
        %p419 = pneg %p150
        %p420 = pneg %p147
        %s421 = sand.u32 %s163, 1
        %s422 = scalar_lea.sflag [#allocation12], %s421
        %s423 = sand.u32 %s163, 1
        %s424 = smul.addr %s423, 128
        %s425 = scalar_lea.vmem [#allocation11], %s424
        %p426 = pneg %p176
        %p427 = pneg %p173
        %p428 = pneg %p202
        %p429 = pneg %p199
        %s430 = sand.u32 %s189, 1
        %s431 = scalar_lea.sflag [#allocation4], %s430
        %s432 = sand.u32 %s189, 1
        %s433 = smul.addr %s432, 2
        %s434 = scalar_lea.vmem [#allocation13], %s433
        %v436 = vld [vmem:[#allocation2] sm:$0xff]
        %v437 = vld [vmem:[#allocation2 + $0x8] sm:$0xff]
        %v438 = vld [vmem:[#allocation2 + $0x10] sm:$0xff]
        %v439 = vld [vmem:[#allocation2 + $0x18] sm:$0xff]
        %v440 = vld [vmem:[%s386] sm:$0xff]
        %v441 = vld [vmem:[%s386 + $0x8] sm:$0xff]
        %v442 = vld [vmem:[%s386 + $0x10] sm:$0xff]
        %v443 = vld [vmem:[%s386 + $0x18] sm:$0xff]
        %v444 = vld [vmem:[%s386 + $0x20] sm:$0xff]
        %v445 = vld [vmem:[%s386 + $0x28] sm:$0xff]
        %v446 = vld [vmem:[%s386 + $0x30] sm:$0xff]
        %v447 = vld [vmem:[%s386 + $0x38] sm:$0xff]
        %v448 = vld [vmem:[%s386 + $0x40] sm:$0xff]
        %v449 = vld [vmem:[%s386 + $0x48] sm:$0xff]
        %v450 = vld [vmem:[%s386 + $0x50] sm:$0xff]
        %v451 = vld [vmem:[%s386 + $0x58] sm:$0xff]
        %v452 = vld [vmem:[%s386 + $0x60] sm:$0xff]
        %v453 = vld [vmem:[%s386 + $0x68] sm:$0xff]
        %v454 = vld [vmem:[%s386 + $0x70] sm:$0xff]
        %v455 = vld [vmem:[%s386 + $0x78] sm:$0xff]
        %v460 = vcombine.high %v436, %v436
        %v462 = vunpack.c.l.s4 1983009808
        %v463 = vunpack.c.0.s8 %v462
        %v464 = vlaneseq
        %v465 = vshrl.u32 %v464, 7
        %v466 = vsub.s32 %v463, %v465
        %v467 = vrot.slane %v436, %v466
        %v469 = vunpack.c.l.s4 1983009808
        %v470 = vunpack.c.0.s8 %v469
        %v471 = vlaneseq
        %v472 = vshrl.u32 %v471, 7
        %v473 = vsub.s32 %v470, %v472
        %v474 = vrot.slane %v460, %v473
        %v475 = vcombine.high %v467, %v467
        %v476 = vcombine.high %v474, %v474
        %v477 = vcombine.high %v437, %v437
        %v479 = vunpack.c.l.s4 1983009808
        %v480 = vunpack.c.0.s8 %v479
        %v481 = vlaneseq
        %v482 = vshrl.u32 %v481, 7
        %v483 = vsub.s32 %v480, %v482
        %v484 = vrot.slane %v437, %v483
        %v486 = vunpack.c.l.s4 1983009808
        %v487 = vunpack.c.0.s8 %v486
        %v488 = vlaneseq
        %v489 = vshrl.u32 %v488, 7
        %v490 = vsub.s32 %v487, %v489
        %v491 = vrot.slane %v477, %v490
        %v492 = vcombine.high %v484, %v484
        %v493 = vcombine.high %v491, %v491
        %v494 = vcombine.high %v438, %v438
        %v496 = vunpack.c.l.s4 1983009808
        %v497 = vunpack.c.0.s8 %v496
        %v498 = vlaneseq
        %v499 = vshrl.u32 %v498, 7
        %v500 = vsub.s32 %v497, %v499
        %v501 = vrot.slane %v438, %v500
        %v503 = vunpack.c.l.s4 1983009808
        %v504 = vunpack.c.0.s8 %v503
        %v505 = vlaneseq
        %v506 = vshrl.u32 %v505, 7
        %v507 = vsub.s32 %v504, %v506
        %v508 = vrot.slane %v494, %v507
        %v509 = vcombine.high %v501, %v501
        %v510 = vcombine.high %v508, %v508
        %v511 = vcombine.high %v439, %v439
        %v513 = vunpack.c.l.s4 1983009808
        %v514 = vunpack.c.0.s8 %v513
        %v515 = vlaneseq
        %v516 = vshrl.u32 %v515, 7
        %v517 = vsub.s32 %v514, %v516
        %v518 = vrot.slane %v439, %v517
        %v520 = vunpack.c.l.s4 1983009808
        %v521 = vunpack.c.0.s8 %v520
        %v522 = vlaneseq
        %v523 = vshrl.u32 %v522, 7
        %v524 = vsub.s32 %v521, %v523
        %v525 = vrot.slane %v511, %v524
        %v526 = vcombine.high %v518, %v518
        %v527 = vcombine.high %v525, %v525
        %vm544 = vcmask 1041408
        %v545 = vsel %vm544, %v467, 0.0
        %v546 = vsel %vm544, %v475, 0.0
        %v547 = vadd.f32 %v545, %v546
        %v548 = vsel %vm544, %v474, 0.0
        %v549 = vadd.f32 %v547, %v548
        %v550 = vsel %vm544, %v476, 0.0
        %v551 = vadd.f32 %v549, %v550
        %v552 = vsel %vm544, %v484, 0.0
        %v553 = vadd.f32 %v551, %v552
        %v554 = vsel %vm544, %v492, 0.0
        %v555 = vadd.f32 %v553, %v554
        %v556 = vsel %vm544, %v491, 0.0
        %v557 = vadd.f32 %v555, %v556
        %v558 = vsel %vm544, %v493, 0.0
        %v559 = vadd.f32 %v557, %v558
        %v560 = vsel %vm544, %v501, 0.0
        %v561 = vadd.f32 %v559, %v560
        %v562 = vsel %vm544, %v509, 0.0
        %v563 = vadd.f32 %v561, %v562
        %v564 = vsel %vm544, %v508, 0.0
        %v565 = vadd.f32 %v563, %v564
        %v566 = vsel %vm544, %v510, 0.0
        %v567 = vadd.f32 %v565, %v566
        %v568 = vsel %vm544, %v518, 0.0
        %v569 = vadd.f32 %v567, %v568
        %v570 = vsel %vm544, %v526, 0.0
        %v571 = vadd.f32 %v569, %v570
        %v572 = vsel %vm544, %v525, 0.0
        %v573 = vadd.f32 %v571, %v572
        %v574 = vsel %vm544, %v527, 0.0
        %v575 = vadd.f32 %v573, %v574
        %576 = vadd.xlane.f32.xlu0 %v575
        %v577 = vpop.xlane.xlu0 %576
        %v578 = vrcp.pop 2048.0
        %v579 = vmul.f32 %v577, %v578
        %v580 = vsel %vm544, %v467, -inf
        %v581 = vsel %vm544, %v475, -inf
        %v582 = vsel %vm544, %v474, -inf
        %v583 = vsel %vm544, %v476, -inf
        %v584 = vsel %vm544, %v484, -inf
        %v585 = vmax.f32 %v580, %v584
        %v586 = vsel %vm544, %v492, -inf
        %v587 = vmax.f32 %v581, %v586
        %v588 = vsel %vm544, %v491, -inf
        %v589 = vmax.f32 %v582, %v588
        %v590 = vsel %vm544, %v493, -inf
        %v591 = vmax.f32 %v583, %v590
        %v592 = vsel %vm544, %v501, -inf
        %v593 = vmax.f32 %v585, %v592
        %v594 = vsel %vm544, %v509, -inf
        %v595 = vmax.f32 %v587, %v594
        %v596 = vsel %vm544, %v508, -inf
        %v597 = vmax.f32 %v589, %v596
        %v598 = vsel %vm544, %v510, -inf
        %v599 = vmax.f32 %v591, %v598
        %v600 = vsel %vm544, %v518, -inf
        %v601 = vmax.f32 %v593, %v600
        %v602 = vsel %vm544, %v526, -inf
        %v603 = vmax.f32 %v595, %v602
        %v604 = vsel %vm544, %v525, -inf
        %v605 = vmax.f32 %v597, %v604
        %v606 = vsel %vm544, %v527, -inf
        %v607 = vmax.f32 %v599, %v606
        %v608 = vmax.f32 %v601, %v603
        %v609 = vmax.f32 %v605, %v607
        %v610 = vmax.f32 %v608, %v609
        %611 = vmax.xlane.f32.xlu0 %v610
        %v612 = vpop.xlane.xlu0 %611
        %v613 = vlaneseq
        %v614 = vshrl.u32 %v613, 7
        %v615 = vsub.s32 1, %v614
        %v616 = vrot.slane %v446, %v615
        %v617 = vmul.f32 %v579, %v616
        %v618 = vmul.f32 %v612, %v616
        %620 = vrot.lane.b32.xlu0 %v618, 127
        %v621 = vpop.permute.xlu0 %620
        %v623 = vadd.f32 %v617, %v621
        %625 = vrot.lane.b32.xlu0 %v616, 126
        %v626 = vpop.permute.xlu0 %625
        %v628 = vadd.f32 %v623, %v626
        %v629 = vxor.u32 %v628, 2147483648
        %v630 = vmul.f32 %v629, 1.442695
        %v631 = vpow.pop %v630
        %v632 = vadd.f32 %v631, 1.0
        %v633 = vrcp.pop %v632
        %v634 = vmul.f32 1.0, %v633
        %v635 = vpack.c.bf16 %v467, %v467
        %v636 = vpack.c.bf16 %v475, %v475
        %v637 = vpack.c.bf16 %v474, %v474
        %v638 = vpack.c.bf16 %v476, %v476
        %v639 = vpack.c.bf16 %v484, %v484
        %v640 = vpack.c.bf16 %v492, %v492
        %v641 = vpack.c.bf16 %v491, %v491
        %v642 = vpack.c.bf16 %v493, %v493
        %v643 = vpack.c.bf16 %v501, %v501
        %v644 = vpack.c.bf16 %v509, %v509
        %v645 = vpack.c.bf16 %v508, %v508
        %v646 = vpack.c.bf16 %v510, %v510
        %v647 = vpack.c.bf16 %v518, %v518
        %v648 = vpack.c.bf16 %v526, %v526
        %v649 = vpack.c.bf16 %v525, %v525
        %v650 = vpack.c.bf16 %v527, %v527
        %v651 = vld [vmem:[%s350] sm:$0xf]
        %v652 = vld [vmem:[%s350 + $0x4] sm:$0xf]
        %v653 = vld [vmem:[%s350 + $0x8] sm:$0xf]
        %v654 = vld [vmem:[%s350 + $0xc] sm:$0xf]
        %v655 = vld [vmem:[%s350 + $0x10] sm:$0xf]
        %v656 = vld [vmem:[%s350 + $0x14] sm:$0xf]
        %v657 = vld [vmem:[%s350 + $0x18] sm:$0xf]
        %v658 = vld [vmem:[%s350 + $0x1c] sm:$0xf]
        %v659 = vld [vmem:[%s350 + $0x20] sm:$0xf]
        %v660 = vld [vmem:[%s350 + $0x24] sm:$0xf]
        %v661 = vld [vmem:[%s350 + $0x28] sm:$0xf]
        %v662 = vld [vmem:[%s350 + $0x2c] sm:$0xf]
        %v663 = vld [vmem:[%s350 + $0x30] sm:$0xf]
        %v664 = vld [vmem:[%s350 + $0x34] sm:$0xf]
        %v665 = vld [vmem:[%s350 + $0x38] sm:$0xf]
        %v666 = vld [vmem:[%s350 + $0x3c] sm:$0xf]
        %v667 = vld [vmem:[%s350 + $0x40] sm:$0xf]
        %v668 = vld [vmem:[%s350 + $0x44] sm:$0xf]
        %v669 = vld [vmem:[%s350 + $0x48] sm:$0xf]
        %v670 = vld [vmem:[%s350 + $0x4c] sm:$0xf]
        %v671 = vld [vmem:[%s350 + $0x50] sm:$0xf]
        %v672 = vld [vmem:[%s350 + $0x54] sm:$0xf]
        %v673 = vld [vmem:[%s350 + $0x58] sm:$0xf]
        %v674 = vld [vmem:[%s350 + $0x5c] sm:$0xf]
        %v675 = vld [vmem:[%s350 + $0x60] sm:$0xf]
        %v676 = vld [vmem:[%s350 + $0x64] sm:$0xf]
        %v677 = vld [vmem:[%s350 + $0x68] sm:$0xf]
        %v678 = vld [vmem:[%s350 + $0x6c] sm:$0xf]
        %v679 = vld [vmem:[%s350 + $0x70] sm:$0xf]
        %v680 = vld [vmem:[%s350 + $0x74] sm:$0xf]
        %v681 = vld [vmem:[%s350 + $0x78] sm:$0xf]
        %v682 = vld [vmem:[%s350 + $0x7c] sm:$0xf]
        %v683 = vld [vmem:[%s350 + $0x80] sm:$0xf]
        %v684 = vld [vmem:[%s350 + $0x84] sm:$0xf]
        %v685 = vld [vmem:[%s350 + $0x88] sm:$0xf]
        %v686 = vld [vmem:[%s350 + $0x8c] sm:$0xf]
        %v687 = vld [vmem:[%s350 + $0x90] sm:$0xf]
        %v688 = vld [vmem:[%s350 + $0x94] sm:$0xf]
        %v689 = vld [vmem:[%s350 + $0x98] sm:$0xf]
        %v690 = vld [vmem:[%s350 + $0x9c] sm:$0xf]
        %v691 = vld [vmem:[%s350 + $0xa0] sm:$0xf]
        %v692 = vld [vmem:[%s350 + $0xa4] sm:$0xf]
        %v693 = vld [vmem:[%s350 + $0xa8] sm:$0xf]
        %v694 = vld [vmem:[%s350 + $0xac] sm:$0xf]
        %v695 = vld [vmem:[%s350 + $0xb0] sm:$0xf]
        %v696 = vld [vmem:[%s350 + $0xb4] sm:$0xf]
        %v697 = vld [vmem:[%s350 + $0xb8] sm:$0xf]
        %v698 = vld [vmem:[%s350 + $0xbc] sm:$0xf]
        %v699 = vld [vmem:[%s350 + $0xc0] sm:$0xf]
        %v700 = vld [vmem:[%s350 + $0xc4] sm:$0xf]
        %v701 = vld [vmem:[%s350 + $0xc8] sm:$0xf]
        %v702 = vld [vmem:[%s350 + $0xcc] sm:$0xf]
        %v703 = vld [vmem:[%s350 + $0xd0] sm:$0xf]
        %v704 = vld [vmem:[%s350 + $0xd4] sm:$0xf]
        %v705 = vld [vmem:[%s350 + $0xd8] sm:$0xf]
        %v706 = vld [vmem:[%s350 + $0xdc] sm:$0xf]
        %v707 = vld [vmem:[%s350 + $0xe0] sm:$0xf]
        %v708 = vld [vmem:[%s350 + $0xe4] sm:$0xf]
        %v709 = vld [vmem:[%s350 + $0xe8] sm:$0xf]
        %v710 = vld [vmem:[%s350 + $0xec] sm:$0xf]
        %v711 = vld [vmem:[%s350 + $0xf0] sm:$0xf]
        %v712 = vld [vmem:[%s350 + $0xf4] sm:$0xf]
        %v713 = vld [vmem:[%s350 + $0xf8] sm:$0xf]
        %v714 = vld [vmem:[%s350 + $0xfc] sm:$0xf]
        %v715 = vld [vmem:[%s350 + $0x100] sm:$0xf]
        %v716 = vld [vmem:[%s350 + $0x104] sm:$0xf]
        %v717 = vld [vmem:[%s350 + $0x108] sm:$0xf]
        %v718 = vld [vmem:[%s350 + $0x10c] sm:$0xf]
        %v719 = vld [vmem:[%s350 + $0x110] sm:$0xf]
        %v720 = vld [vmem:[%s350 + $0x114] sm:$0xf]
        %v721 = vld [vmem:[%s350 + $0x118] sm:$0xf]
        %v722 = vld [vmem:[%s350 + $0x11c] sm:$0xf]
        %v723 = vld [vmem:[%s350 + $0x120] sm:$0xf]
        %v724 = vld [vmem:[%s350 + $0x124] sm:$0xf]
        %v725 = vld [vmem:[%s350 + $0x128] sm:$0xf]
        %v726 = vld [vmem:[%s350 + $0x12c] sm:$0xf]
        %v727 = vld [vmem:[%s350 + $0x130] sm:$0xf]
        %v728 = vld [vmem:[%s350 + $0x134] sm:$0xf]
        %v729 = vld [vmem:[%s350 + $0x138] sm:$0xf]
        %v730 = vld [vmem:[%s350 + $0x13c] sm:$0xf]
        %v731 = vld [vmem:[%s350 + $0x140] sm:$0xf]
        %v732 = vld [vmem:[%s350 + $0x144] sm:$0xf]
        %v733 = vld [vmem:[%s350 + $0x148] sm:$0xf]
        %v734 = vld [vmem:[%s350 + $0x14c] sm:$0xf]
        %v735 = vld [vmem:[%s350 + $0x150] sm:$0xf]
        %v736 = vld [vmem:[%s350 + $0x154] sm:$0xf]
        %v737 = vld [vmem:[%s350 + $0x158] sm:$0xf]
        %v738 = vld [vmem:[%s350 + $0x15c] sm:$0xf]
        %v739 = vld [vmem:[%s350 + $0x160] sm:$0xf]
        %v740 = vld [vmem:[%s350 + $0x164] sm:$0xf]
        %v741 = vld [vmem:[%s350 + $0x168] sm:$0xf]
        %v742 = vld [vmem:[%s350 + $0x16c] sm:$0xf]
        %v743 = vld [vmem:[%s350 + $0x170] sm:$0xf]
        %v744 = vld [vmem:[%s350 + $0x174] sm:$0xf]
        %v745 = vld [vmem:[%s350 + $0x178] sm:$0xf]
        %v746 = vld [vmem:[%s350 + $0x17c] sm:$0xf]
        %v747 = vld [vmem:[%s350 + $0x180] sm:$0xf]
        %v748 = vld [vmem:[%s350 + $0x184] sm:$0xf]
        %v749 = vld [vmem:[%s350 + $0x188] sm:$0xf]
        %v750 = vld [vmem:[%s350 + $0x18c] sm:$0xf]
        %v751 = vld [vmem:[%s350 + $0x190] sm:$0xf]
        %v752 = vld [vmem:[%s350 + $0x194] sm:$0xf]
        %v753 = vld [vmem:[%s350 + $0x198] sm:$0xf]
        %v754 = vld [vmem:[%s350 + $0x19c] sm:$0xf]
        %v755 = vld [vmem:[%s350 + $0x1a0] sm:$0xf]
        %v756 = vld [vmem:[%s350 + $0x1a4] sm:$0xf]
        %v757 = vld [vmem:[%s350 + $0x1a8] sm:$0xf]
        %v758 = vld [vmem:[%s350 + $0x1ac] sm:$0xf]
        %v759 = vld [vmem:[%s350 + $0x1b0] sm:$0xf]
        %v760 = vld [vmem:[%s350 + $0x1b4] sm:$0xf]
        %v761 = vld [vmem:[%s350 + $0x1b8] sm:$0xf]
        %v762 = vld [vmem:[%s350 + $0x1bc] sm:$0xf]
        %v763 = vld [vmem:[%s350 + $0x1c0] sm:$0xf]
        %v764 = vld [vmem:[%s350 + $0x1c4] sm:$0xf]
        %v765 = vld [vmem:[%s350 + $0x1c8] sm:$0xf]
        %v766 = vld [vmem:[%s350 + $0x1cc] sm:$0xf]
        %v767 = vld [vmem:[%s350 + $0x1d0] sm:$0xf]
        %v768 = vld [vmem:[%s350 + $0x1d4] sm:$0xf]
        %v769 = vld [vmem:[%s350 + $0x1d8] sm:$0xf]
        %v770 = vld [vmem:[%s350 + $0x1dc] sm:$0xf]
        %v771 = vld [vmem:[%s350 + $0x1e0] sm:$0xf]
        %v772 = vld [vmem:[%s350 + $0x1e4] sm:$0xf]
        %v773 = vld [vmem:[%s350 + $0x1e8] sm:$0xf]
        %v774 = vld [vmem:[%s350 + $0x1ec] sm:$0xf]
        %v775 = vld [vmem:[%s350 + $0x1f0] sm:$0xf]
        %v776 = vld [vmem:[%s350 + $0x1f4] sm:$0xf]
        %v777 = vld [vmem:[%s350 + $0x1f8] sm:$0xf]
        %v778 = vld [vmem:[%s350 + $0x1fc] sm:$0xf]
        %v779 = vld [vmem:[%s350 + $0x200] sm:$0xf]
        %v780 = vld [vmem:[%s350 + $0x204] sm:$0xf]
        %v781 = vld [vmem:[%s350 + $0x208] sm:$0xf]
        %v782 = vld [vmem:[%s350 + $0x20c] sm:$0xf]
        %v783 = vld [vmem:[%s350 + $0x210] sm:$0xf]
        %v784 = vld [vmem:[%s350 + $0x214] sm:$0xf]
        %v785 = vld [vmem:[%s350 + $0x218] sm:$0xf]
        %v786 = vld [vmem:[%s350 + $0x21c] sm:$0xf]
        %v787 = vld [vmem:[%s350 + $0x220] sm:$0xf]
        %v788 = vld [vmem:[%s350 + $0x224] sm:$0xf]
        %v789 = vld [vmem:[%s350 + $0x228] sm:$0xf]
        %v790 = vld [vmem:[%s350 + $0x22c] sm:$0xf]
        %v791 = vld [vmem:[%s350 + $0x230] sm:$0xf]
        %v792 = vld [vmem:[%s350 + $0x234] sm:$0xf]
        %v793 = vld [vmem:[%s350 + $0x238] sm:$0xf]
        %v794 = vld [vmem:[%s350 + $0x23c] sm:$0xf]
        %v795 = vld [vmem:[%s350 + $0x240] sm:$0xf]
        %v796 = vld [vmem:[%s350 + $0x244] sm:$0xf]
        %v797 = vld [vmem:[%s350 + $0x248] sm:$0xf]
        %v798 = vld [vmem:[%s350 + $0x24c] sm:$0xf]
        %v799 = vld [vmem:[%s350 + $0x250] sm:$0xf]
        %v800 = vld [vmem:[%s350 + $0x254] sm:$0xf]
        %v801 = vld [vmem:[%s350 + $0x258] sm:$0xf]
        %v802 = vld [vmem:[%s350 + $0x25c] sm:$0xf]
        %v803 = vld [vmem:[%s350 + $0x260] sm:$0xf]
        %v804 = vld [vmem:[%s350 + $0x264] sm:$0xf]
        %v805 = vld [vmem:[%s350 + $0x268] sm:$0xf]
        %v806 = vld [vmem:[%s350 + $0x26c] sm:$0xf]
        %v807 = vld [vmem:[%s350 + $0x270] sm:$0xf]
        %v808 = vld [vmem:[%s350 + $0x274] sm:$0xf]
        %v809 = vld [vmem:[%s350 + $0x278] sm:$0xf]
        %v810 = vld [vmem:[%s350 + $0x27c] sm:$0xf]
        %v811 = vld [vmem:[%s350 + $0x280] sm:$0xf]
        %v812 = vld [vmem:[%s350 + $0x284] sm:$0xf]
        %v813 = vld [vmem:[%s350 + $0x288] sm:$0xf]
        %v814 = vld [vmem:[%s350 + $0x28c] sm:$0xf]
        %v815 = vld [vmem:[%s350 + $0x290] sm:$0xf]
        %v816 = vld [vmem:[%s350 + $0x294] sm:$0xf]
        %v817 = vld [vmem:[%s350 + $0x298] sm:$0xf]
        %v818 = vld [vmem:[%s350 + $0x29c] sm:$0xf]
        %v819 = vld [vmem:[%s350 + $0x2a0] sm:$0xf]
        %v820 = vld [vmem:[%s350 + $0x2a4] sm:$0xf]
        %v821 = vld [vmem:[%s350 + $0x2a8] sm:$0xf]
        %v822 = vld [vmem:[%s350 + $0x2ac] sm:$0xf]
        %v823 = vld [vmem:[%s350 + $0x2b0] sm:$0xf]
        %v824 = vld [vmem:[%s350 + $0x2b4] sm:$0xf]
        %v825 = vld [vmem:[%s350 + $0x2b8] sm:$0xf]
        %v826 = vld [vmem:[%s350 + $0x2bc] sm:$0xf]
        %v827 = vld [vmem:[%s350 + $0x2c0] sm:$0xf]
        %v828 = vld [vmem:[%s350 + $0x2c4] sm:$0xf]
        %v829 = vld [vmem:[%s350 + $0x2c8] sm:$0xf]
        %v830 = vld [vmem:[%s350 + $0x2cc] sm:$0xf]
        %v831 = vld [vmem:[%s350 + $0x2d0] sm:$0xf]
        %v832 = vld [vmem:[%s350 + $0x2d4] sm:$0xf]
        %v833 = vld [vmem:[%s350 + $0x2d8] sm:$0xf]
        %v834 = vld [vmem:[%s350 + $0x2dc] sm:$0xf]
        %v835 = vld [vmem:[%s350 + $0x2e0] sm:$0xf]
        %v836 = vld [vmem:[%s350 + $0x2e4] sm:$0xf]
        %v837 = vld [vmem:[%s350 + $0x2e8] sm:$0xf]
        %v838 = vld [vmem:[%s350 + $0x2ec] sm:$0xf]
        %v839 = vld [vmem:[%s350 + $0x2f0] sm:$0xf]
        %v840 = vld [vmem:[%s350 + $0x2f4] sm:$0xf]
        %v841 = vld [vmem:[%s350 + $0x2f8] sm:$0xf]
        %v842 = vld [vmem:[%s350 + $0x2fc] sm:$0xf]
        %v843 = vld [vmem:[%s350 + $0x300] sm:$0xf]
        %v844 = vld [vmem:[%s350 + $0x304] sm:$0xf]
        %v845 = vld [vmem:[%s350 + $0x308] sm:$0xf]
        %v846 = vld [vmem:[%s350 + $0x30c] sm:$0xf]
        %v847 = vld [vmem:[%s350 + $0x310] sm:$0xf]
        %v848 = vld [vmem:[%s350 + $0x314] sm:$0xf]
        %v849 = vld [vmem:[%s350 + $0x318] sm:$0xf]
        %v850 = vld [vmem:[%s350 + $0x31c] sm:$0xf]
        %v851 = vld [vmem:[%s350 + $0x320] sm:$0xf]
        %v852 = vld [vmem:[%s350 + $0x324] sm:$0xf]
        %v853 = vld [vmem:[%s350 + $0x328] sm:$0xf]
        %v854 = vld [vmem:[%s350 + $0x32c] sm:$0xf]
        %v855 = vld [vmem:[%s350 + $0x330] sm:$0xf]
        %v856 = vld [vmem:[%s350 + $0x334] sm:$0xf]
        %v857 = vld [vmem:[%s350 + $0x338] sm:$0xf]
        %v858 = vld [vmem:[%s350 + $0x33c] sm:$0xf]
        %v859 = vld [vmem:[%s350 + $0x340] sm:$0xf]
        %v860 = vld [vmem:[%s350 + $0x344] sm:$0xf]
        %v861 = vld [vmem:[%s350 + $0x348] sm:$0xf]
        %v862 = vld [vmem:[%s350 + $0x34c] sm:$0xf]
        %v863 = vld [vmem:[%s350 + $0x350] sm:$0xf]
        %v864 = vld [vmem:[%s350 + $0x354] sm:$0xf]
        %v865 = vld [vmem:[%s350 + $0x358] sm:$0xf]
        %v866 = vld [vmem:[%s350 + $0x35c] sm:$0xf]
        %v867 = vld [vmem:[%s350 + $0x360] sm:$0xf]
        %v868 = vld [vmem:[%s350 + $0x364] sm:$0xf]
        %v869 = vld [vmem:[%s350 + $0x368] sm:$0xf]
        %v870 = vld [vmem:[%s350 + $0x36c] sm:$0xf]
        %v871 = vld [vmem:[%s350 + $0x370] sm:$0xf]
        %v872 = vld [vmem:[%s350 + $0x374] sm:$0xf]
        %v873 = vld [vmem:[%s350 + $0x378] sm:$0xf]
        %v874 = vld [vmem:[%s350 + $0x37c] sm:$0xf]
        %v875 = vld [vmem:[%s350 + $0x380] sm:$0xf]
        %v876 = vld [vmem:[%s350 + $0x384] sm:$0xf]
        %v877 = vld [vmem:[%s350 + $0x388] sm:$0xf]
        %v878 = vld [vmem:[%s350 + $0x38c] sm:$0xf]
        %v879 = vld [vmem:[%s350 + $0x390] sm:$0xf]
        %v880 = vld [vmem:[%s350 + $0x394] sm:$0xf]
        %v881 = vld [vmem:[%s350 + $0x398] sm:$0xf]
        %v882 = vld [vmem:[%s350 + $0x39c] sm:$0xf]
        %v883 = vld [vmem:[%s350 + $0x3a0] sm:$0xf]
        %v884 = vld [vmem:[%s350 + $0x3a4] sm:$0xf]
        %v885 = vld [vmem:[%s350 + $0x3a8] sm:$0xf]
        %v886 = vld [vmem:[%s350 + $0x3ac] sm:$0xf]
        %v887 = vld [vmem:[%s350 + $0x3b0] sm:$0xf]
        %v888 = vld [vmem:[%s350 + $0x3b4] sm:$0xf]
        %v889 = vld [vmem:[%s350 + $0x3b8] sm:$0xf]
        %v890 = vld [vmem:[%s350 + $0x3bc] sm:$0xf]
        %v891 = vld [vmem:[%s350 + $0x3c0] sm:$0xf]
        %v892 = vld [vmem:[%s350 + $0x3c4] sm:$0xf]
        %v893 = vld [vmem:[%s350 + $0x3c8] sm:$0xf]
        %v894 = vld [vmem:[%s350 + $0x3cc] sm:$0xf]
        %v895 = vld [vmem:[%s350 + $0x3d0] sm:$0xf]
        %v896 = vld [vmem:[%s350 + $0x3d4] sm:$0xf]
        %v897 = vld [vmem:[%s350 + $0x3d8] sm:$0xf]
        %v898 = vld [vmem:[%s350 + $0x3dc] sm:$0xf]
        %v899 = vld [vmem:[%s350 + $0x3e0] sm:$0xf]
        %v900 = vld [vmem:[%s350 + $0x3e4] sm:$0xf]
        %v901 = vld [vmem:[%s350 + $0x3e8] sm:$0xf]
        %v902 = vld [vmem:[%s350 + $0x3ec] sm:$0xf]
        %v903 = vld [vmem:[%s350 + $0x3f0] sm:$0xf]
        %v904 = vld [vmem:[%s350 + $0x3f4] sm:$0xf]
        %v905 = vld [vmem:[%s350 + $0x3f8] sm:$0xf]
        %v906 = vld [vmem:[%s350 + $0x3fc] sm:$0xf]
        %v907 = vlaneseq
        %v908 = vshrl.u32 %v907, 7
        %v909 = vsub.s32 1, %v908
        %v910 = vrot.slane %v444, %v909
        %v1167 = vunpack.c.l.b16 %v651
        %v1168 = vunpack.c.l.b16 %v652
        %v1169 = vunpack.c.l.b16 %v653
        %v1170 = vunpack.c.l.b16 %v654
        %v1171 = vunpack.c.l.b16 %v655
        %v1172 = vunpack.c.l.b16 %v656
        %v1173 = vunpack.c.l.b16 %v657
        %v1174 = vunpack.c.l.b16 %v658
        %v1175 = vunpack.c.l.b16 %v659
        %v1176 = vunpack.c.l.b16 %v660
        %v1177 = vunpack.c.l.b16 %v661
        %v1178 = vunpack.c.l.b16 %v662
        %v1179 = vunpack.c.l.b16 %v663
        %v1180 = vunpack.c.l.b16 %v664
        %v1181 = vunpack.c.l.b16 %v665
        %v1182 = vunpack.c.l.b16 %v666
        %v1183 = vunpack.c.l.b16 %v667
        %v1184 = vunpack.c.l.b16 %v668
        %v1185 = vunpack.c.l.b16 %v669
        %v1186 = vunpack.c.l.b16 %v670
        %v1187 = vunpack.c.l.b16 %v671
        %v1188 = vunpack.c.l.b16 %v672
        %v1189 = vunpack.c.l.b16 %v673
        %v1190 = vunpack.c.l.b16 %v674
        %v1191 = vunpack.c.l.b16 %v675
        %v1192 = vunpack.c.l.b16 %v676
        %v1193 = vunpack.c.l.b16 %v677
        %v1194 = vunpack.c.l.b16 %v678
        %v1195 = vunpack.c.l.b16 %v679
        %v1196 = vunpack.c.l.b16 %v680
        %v1197 = vunpack.c.l.b16 %v681
        %v1198 = vunpack.c.l.b16 %v682
        %v1199 = vunpack.c.l.b16 %v683
        %v1200 = vunpack.c.l.b16 %v684
        %v1201 = vunpack.c.l.b16 %v685
        %v1202 = vunpack.c.l.b16 %v686
        %v1203 = vunpack.c.l.b16 %v687
        %v1204 = vunpack.c.l.b16 %v688
        %v1205 = vunpack.c.l.b16 %v689
        %v1206 = vunpack.c.l.b16 %v690
        %v1207 = vunpack.c.l.b16 %v691
        %v1208 = vunpack.c.l.b16 %v692
        %v1209 = vunpack.c.l.b16 %v693
        %v1210 = vunpack.c.l.b16 %v694
        %v1211 = vunpack.c.l.b16 %v695
        %v1212 = vunpack.c.l.b16 %v696
        %v1213 = vunpack.c.l.b16 %v697
        %v1214 = vunpack.c.l.b16 %v698
        %v1215 = vunpack.c.l.b16 %v699
        %v1216 = vunpack.c.l.b16 %v700
        %v1217 = vunpack.c.l.b16 %v701
        %v1218 = vunpack.c.l.b16 %v702
        %v1219 = vunpack.c.l.b16 %v703
        %v1220 = vunpack.c.l.b16 %v704
        %v1221 = vunpack.c.l.b16 %v705
        %v1222 = vunpack.c.l.b16 %v706
        %v1223 = vunpack.c.l.b16 %v707
        %v1224 = vunpack.c.l.b16 %v708
        %v1225 = vunpack.c.l.b16 %v709
        %v1226 = vunpack.c.l.b16 %v710
        %v1227 = vunpack.c.l.b16 %v711
        %v1228 = vunpack.c.l.b16 %v712
        %v1229 = vunpack.c.l.b16 %v713
        %v1230 = vunpack.c.l.b16 %v714
        %v1231 = vunpack.c.l.b16 %v715
        %v1232 = vunpack.c.l.b16 %v716
        %v1233 = vunpack.c.l.b16 %v717
        %v1234 = vunpack.c.l.b16 %v718
        %v1235 = vunpack.c.l.b16 %v719
        %v1236 = vunpack.c.l.b16 %v720
        %v1237 = vunpack.c.l.b16 %v721
        %v1238 = vunpack.c.l.b16 %v722
        %v1239 = vunpack.c.l.b16 %v723
        %v1240 = vunpack.c.l.b16 %v724
        %v1241 = vunpack.c.l.b16 %v725
        %v1242 = vunpack.c.l.b16 %v726
        %v1243 = vunpack.c.l.b16 %v727
        %v1244 = vunpack.c.l.b16 %v728
        %v1245 = vunpack.c.l.b16 %v729
        %v1246 = vunpack.c.l.b16 %v730
        %v1247 = vunpack.c.l.b16 %v731
        %v1248 = vunpack.c.l.b16 %v732
        %v1249 = vunpack.c.l.b16 %v733
        %v1250 = vunpack.c.l.b16 %v734
        %v1251 = vunpack.c.l.b16 %v735
        %v1252 = vunpack.c.l.b16 %v736
        %v1253 = vunpack.c.l.b16 %v737
        %v1254 = vunpack.c.l.b16 %v738
        %v1255 = vunpack.c.l.b16 %v739
        %v1256 = vunpack.c.l.b16 %v740
        %v1257 = vunpack.c.l.b16 %v741
        %v1258 = vunpack.c.l.b16 %v742
        %v1259 = vunpack.c.l.b16 %v743
        %v1260 = vunpack.c.l.b16 %v744
        %v1261 = vunpack.c.l.b16 %v745
        %v1262 = vunpack.c.l.b16 %v746
        %v1263 = vunpack.c.l.b16 %v747
        %v1264 = vunpack.c.l.b16 %v748
        %v1265 = vunpack.c.l.b16 %v749
        %v1266 = vunpack.c.l.b16 %v750
        %v1267 = vunpack.c.l.b16 %v751
        %v1268 = vunpack.c.l.b16 %v752
        %v1269 = vunpack.c.l.b16 %v753
        %v1270 = vunpack.c.l.b16 %v754
        %v1271 = vunpack.c.l.b16 %v755
        %v1272 = vunpack.c.l.b16 %v756
        %v1273 = vunpack.c.l.b16 %v757
        %v1274 = vunpack.c.l.b16 %v758
        %v1275 = vunpack.c.l.b16 %v759
        %v1276 = vunpack.c.l.b16 %v760
        %v1277 = vunpack.c.l.b16 %v761
        %v1278 = vunpack.c.l.b16 %v762
        %v1279 = vunpack.c.l.b16 %v763
        %v1280 = vunpack.c.l.b16 %v764
        %v1281 = vunpack.c.l.b16 %v765
        %v1282 = vunpack.c.l.b16 %v766
        %v1283 = vunpack.c.l.b16 %v767
        %v1284 = vunpack.c.l.b16 %v768
        %v1285 = vunpack.c.l.b16 %v769
        %v1286 = vunpack.c.l.b16 %v770
        %v1287 = vunpack.c.l.b16 %v771
        %v1288 = vunpack.c.l.b16 %v772
        %v1289 = vunpack.c.l.b16 %v773
        %v1290 = vunpack.c.l.b16 %v774
        %v1291 = vunpack.c.l.b16 %v775
        %v1292 = vunpack.c.l.b16 %v776
        %v1293 = vunpack.c.l.b16 %v777
        %v1294 = vunpack.c.l.b16 %v778
        %v1295 = vunpack.c.l.b16 %v779
        %v1296 = vunpack.c.l.b16 %v780
        %v1297 = vunpack.c.l.b16 %v781
        %v1298 = vunpack.c.l.b16 %v782
        %v1299 = vunpack.c.l.b16 %v783
        %v1300 = vunpack.c.l.b16 %v784
        %v1301 = vunpack.c.l.b16 %v785
        %v1302 = vunpack.c.l.b16 %v786
        %v1303 = vunpack.c.l.b16 %v787
        %v1304 = vunpack.c.l.b16 %v788
        %v1305 = vunpack.c.l.b16 %v789
        %v1306 = vunpack.c.l.b16 %v790
        %v1307 = vunpack.c.l.b16 %v791
        %v1308 = vunpack.c.l.b16 %v792
        %v1309 = vunpack.c.l.b16 %v793
        %v1310 = vunpack.c.l.b16 %v794
        %v1311 = vunpack.c.l.b16 %v795
        %v1312 = vunpack.c.l.b16 %v796
        %v1313 = vunpack.c.l.b16 %v797
        %v1314 = vunpack.c.l.b16 %v798
        %v1315 = vunpack.c.l.b16 %v799
        %v1316 = vunpack.c.l.b16 %v800
        %v1317 = vunpack.c.l.b16 %v801
        %v1318 = vunpack.c.l.b16 %v802
        %v1319 = vunpack.c.l.b16 %v803
        %v1320 = vunpack.c.l.b16 %v804
        %v1321 = vunpack.c.l.b16 %v805
        %v1322 = vunpack.c.l.b16 %v806
        %v1323 = vunpack.c.l.b16 %v807
        %v1324 = vunpack.c.l.b16 %v808
        %v1325 = vunpack.c.l.b16 %v809
        %v1326 = vunpack.c.l.b16 %v810
        %v1327 = vunpack.c.l.b16 %v811
        %v1328 = vunpack.c.l.b16 %v812
        %v1329 = vunpack.c.l.b16 %v813
        %v1330 = vunpack.c.l.b16 %v814
        %v1331 = vunpack.c.l.b16 %v815
        %v1332 = vunpack.c.l.b16 %v816
        %v1333 = vunpack.c.l.b16 %v817
        %v1334 = vunpack.c.l.b16 %v818
        %v1335 = vunpack.c.l.b16 %v819
        %v1336 = vunpack.c.l.b16 %v820
        %v1337 = vunpack.c.l.b16 %v821
        %v1338 = vunpack.c.l.b16 %v822
        %v1339 = vunpack.c.l.b16 %v823
        %v1340 = vunpack.c.l.b16 %v824
        %v1341 = vunpack.c.l.b16 %v825
        %v1342 = vunpack.c.l.b16 %v826
        %v1343 = vunpack.c.l.b16 %v827
        %v1344 = vunpack.c.l.b16 %v828
        %v1345 = vunpack.c.l.b16 %v829
        %v1346 = vunpack.c.l.b16 %v830
        %v1347 = vunpack.c.l.b16 %v831
        %v1348 = vunpack.c.l.b16 %v832
        %v1349 = vunpack.c.l.b16 %v833
        %v1350 = vunpack.c.l.b16 %v834
        %v1351 = vunpack.c.l.b16 %v835
        %v1352 = vunpack.c.l.b16 %v836
        %v1353 = vunpack.c.l.b16 %v837
        %v1354 = vunpack.c.l.b16 %v838
        %v1355 = vunpack.c.l.b16 %v839
        %v1356 = vunpack.c.l.b16 %v840
        %v1357 = vunpack.c.l.b16 %v841
        %v1358 = vunpack.c.l.b16 %v842
        %v1359 = vunpack.c.l.b16 %v843
        %v1360 = vunpack.c.l.b16 %v844
        %v1361 = vunpack.c.l.b16 %v845
        %v1362 = vunpack.c.l.b16 %v846
        %v1363 = vunpack.c.l.b16 %v847
        %v1364 = vunpack.c.l.b16 %v848
        %v1365 = vunpack.c.l.b16 %v849
        %v1366 = vunpack.c.l.b16 %v850
        %v1367 = vunpack.c.l.b16 %v851
        %v1368 = vunpack.c.l.b16 %v852
        %v1369 = vunpack.c.l.b16 %v853
        %v1370 = vunpack.c.l.b16 %v854
        %v1371 = vunpack.c.l.b16 %v855
        %v1372 = vunpack.c.l.b16 %v856
        %v1373 = vunpack.c.l.b16 %v857
        %v1374 = vunpack.c.l.b16 %v858
        %v1375 = vunpack.c.l.b16 %v859
        %v1376 = vunpack.c.l.b16 %v860
        %v1377 = vunpack.c.l.b16 %v861
        %v1378 = vunpack.c.l.b16 %v862
        %v1379 = vunpack.c.l.b16 %v863
        %v1380 = vunpack.c.l.b16 %v864
        %v1381 = vunpack.c.l.b16 %v865
        %v1382 = vunpack.c.l.b16 %v866
        %v1383 = vunpack.c.l.b16 %v867
        %v1384 = vunpack.c.l.b16 %v868
        %v1385 = vunpack.c.l.b16 %v869
        %v1386 = vunpack.c.l.b16 %v870
        %v1387 = vunpack.c.l.b16 %v871
        %v1388 = vunpack.c.l.b16 %v872
        %v1389 = vunpack.c.l.b16 %v873
        %v1390 = vunpack.c.l.b16 %v874
        %v1391 = vunpack.c.l.b16 %v875
        %v1392 = vunpack.c.l.b16 %v876
        %v1393 = vunpack.c.l.b16 %v877
        %v1394 = vunpack.c.l.b16 %v878
        %v1395 = vunpack.c.l.b16 %v879
        %v1396 = vunpack.c.l.b16 %v880
        %v1397 = vunpack.c.l.b16 %v881
        %v1398 = vunpack.c.l.b16 %v882
        %v1399 = vunpack.c.l.b16 %v883
        %v1400 = vunpack.c.l.b16 %v884
        %v1401 = vunpack.c.l.b16 %v885
        %v1402 = vunpack.c.l.b16 %v886
        %v1403 = vunpack.c.l.b16 %v887
        %v1404 = vunpack.c.l.b16 %v888
        %v1405 = vunpack.c.l.b16 %v889
        %v1406 = vunpack.c.l.b16 %v890
        %v1407 = vunpack.c.l.b16 %v891
        %v1408 = vunpack.c.l.b16 %v892
        %v1409 = vunpack.c.l.b16 %v893
        %v1410 = vunpack.c.l.b16 %v894
        %v1411 = vunpack.c.l.b16 %v895
        %v1412 = vunpack.c.l.b16 %v896
        %v1413 = vunpack.c.l.b16 %v897
        %v1414 = vunpack.c.l.b16 %v898
        %v1415 = vunpack.c.l.b16 %v899
        %v1416 = vunpack.c.l.b16 %v900
        %v1417 = vunpack.c.l.b16 %v901
        %v1418 = vunpack.c.l.b16 %v902
        %v1419 = vunpack.c.l.b16 %v903
        %v1420 = vunpack.c.l.b16 %v904
        %v1421 = vunpack.c.l.b16 %v905
        %v1422 = vunpack.c.l.b16 %v906
        %v1423 = vpack.c.b16 %v1168, %v1167
        %v1424 = vpack.c.b16 %v1170, %v1169
        %v1425 = vpack.c.b16 %v1172, %v1171
        %v1426 = vpack.c.b16 %v1174, %v1173
        %v1427 = vpack.c.b16 %v1176, %v1175
        %v1428 = vpack.c.b16 %v1178, %v1177
        %v1429 = vpack.c.b16 %v1180, %v1179
        %v1430 = vpack.c.b16 %v1182, %v1181
        %v1431 = vpack.c.b16 %v1184, %v1183
        %v1432 = vpack.c.b16 %v1186, %v1185
        %v1433 = vpack.c.b16 %v1188, %v1187
        %v1434 = vpack.c.b16 %v1190, %v1189
        %v1435 = vpack.c.b16 %v1192, %v1191
        %v1436 = vpack.c.b16 %v1194, %v1193
        %v1437 = vpack.c.b16 %v1196, %v1195
        %v1438 = vpack.c.b16 %v1198, %v1197
        %v1439 = vpack.c.b16 %v1200, %v1199
        %v1440 = vpack.c.b16 %v1202, %v1201
        %v1441 = vpack.c.b16 %v1204, %v1203
        %v1442 = vpack.c.b16 %v1206, %v1205
        %v1443 = vpack.c.b16 %v1208, %v1207
        %v1444 = vpack.c.b16 %v1210, %v1209
        %v1445 = vpack.c.b16 %v1212, %v1211
        %v1446 = vpack.c.b16 %v1214, %v1213
        %v1447 = vpack.c.b16 %v1216, %v1215
        %v1448 = vpack.c.b16 %v1218, %v1217
        %v1449 = vpack.c.b16 %v1220, %v1219
        %v1450 = vpack.c.b16 %v1222, %v1221
        %v1451 = vpack.c.b16 %v1224, %v1223
        %v1452 = vpack.c.b16 %v1226, %v1225
        %v1453 = vpack.c.b16 %v1228, %v1227
        %v1454 = vpack.c.b16 %v1230, %v1229
        %v1455 = vpack.c.b16 %v1232, %v1231
        %v1456 = vpack.c.b16 %v1234, %v1233
        %v1457 = vpack.c.b16 %v1236, %v1235
        %v1458 = vpack.c.b16 %v1238, %v1237
        %v1459 = vpack.c.b16 %v1240, %v1239
        %v1460 = vpack.c.b16 %v1242, %v1241
        %v1461 = vpack.c.b16 %v1244, %v1243
        %v1462 = vpack.c.b16 %v1246, %v1245
        %v1463 = vpack.c.b16 %v1248, %v1247
        %v1464 = vpack.c.b16 %v1250, %v1249
        %v1465 = vpack.c.b16 %v1252, %v1251
        %v1466 = vpack.c.b16 %v1254, %v1253
        %v1467 = vpack.c.b16 %v1256, %v1255
        %v1468 = vpack.c.b16 %v1258, %v1257
        %v1469 = vpack.c.b16 %v1260, %v1259
        %v1470 = vpack.c.b16 %v1262, %v1261
        %v1471 = vpack.c.b16 %v1264, %v1263
        %v1472 = vpack.c.b16 %v1266, %v1265
        %v1473 = vpack.c.b16 %v1268, %v1267
        %v1474 = vpack.c.b16 %v1270, %v1269
        %v1475 = vpack.c.b16 %v1272, %v1271
        %v1476 = vpack.c.b16 %v1274, %v1273
        %v1477 = vpack.c.b16 %v1276, %v1275
        %v1478 = vpack.c.b16 %v1278, %v1277
        %v1479 = vpack.c.b16 %v1280, %v1279
        %v1480 = vpack.c.b16 %v1282, %v1281
        %v1481 = vpack.c.b16 %v1284, %v1283
        %v1482 = vpack.c.b16 %v1286, %v1285
        %v1483 = vpack.c.b16 %v1288, %v1287
        %v1484 = vpack.c.b16 %v1290, %v1289
        %v1485 = vpack.c.b16 %v1292, %v1291
        %v1486 = vpack.c.b16 %v1294, %v1293
        %v1487 = vpack.c.b16 %v1296, %v1295
        %v1488 = vpack.c.b16 %v1298, %v1297
        %v1489 = vpack.c.b16 %v1300, %v1299
        %v1490 = vpack.c.b16 %v1302, %v1301
        %v1491 = vpack.c.b16 %v1304, %v1303
        %v1492 = vpack.c.b16 %v1306, %v1305
        %v1493 = vpack.c.b16 %v1308, %v1307
        %v1494 = vpack.c.b16 %v1310, %v1309
        %v1495 = vpack.c.b16 %v1312, %v1311
        %v1496 = vpack.c.b16 %v1314, %v1313
        %v1497 = vpack.c.b16 %v1316, %v1315
        %v1498 = vpack.c.b16 %v1318, %v1317
        %v1499 = vpack.c.b16 %v1320, %v1319
        %v1500 = vpack.c.b16 %v1322, %v1321
        %v1501 = vpack.c.b16 %v1324, %v1323
        %v1502 = vpack.c.b16 %v1326, %v1325
        %v1503 = vpack.c.b16 %v1328, %v1327
        %v1504 = vpack.c.b16 %v1330, %v1329
        %v1505 = vpack.c.b16 %v1332, %v1331
        %v1506 = vpack.c.b16 %v1334, %v1333
        %v1507 = vpack.c.b16 %v1336, %v1335
        %v1508 = vpack.c.b16 %v1338, %v1337
        %v1509 = vpack.c.b16 %v1340, %v1339
        %v1510 = vpack.c.b16 %v1342, %v1341
        %v1511 = vpack.c.b16 %v1344, %v1343
        %v1512 = vpack.c.b16 %v1346, %v1345
        %v1513 = vpack.c.b16 %v1348, %v1347
        %v1514 = vpack.c.b16 %v1350, %v1349
        %v1515 = vpack.c.b16 %v1352, %v1351
        %v1516 = vpack.c.b16 %v1354, %v1353
        %v1517 = vpack.c.b16 %v1356, %v1355
        %v1518 = vpack.c.b16 %v1358, %v1357
        %v1519 = vpack.c.b16 %v1360, %v1359
        %v1520 = vpack.c.b16 %v1362, %v1361
        %v1521 = vpack.c.b16 %v1364, %v1363
        %v1522 = vpack.c.b16 %v1366, %v1365
        %v1523 = vpack.c.b16 %v1368, %v1367
        %v1524 = vpack.c.b16 %v1370, %v1369
        %v1525 = vpack.c.b16 %v1372, %v1371
        %v1526 = vpack.c.b16 %v1374, %v1373
        %v1527 = vpack.c.b16 %v1376, %v1375
        %v1528 = vpack.c.b16 %v1378, %v1377
        %v1529 = vpack.c.b16 %v1380, %v1379
        %v1530 = vpack.c.b16 %v1382, %v1381
        %v1531 = vpack.c.b16 %v1384, %v1383
        %v1532 = vpack.c.b16 %v1386, %v1385
        %v1533 = vpack.c.b16 %v1388, %v1387
        %v1534 = vpack.c.b16 %v1390, %v1389
        %v1535 = vpack.c.b16 %v1392, %v1391
        %v1536 = vpack.c.b16 %v1394, %v1393
        %v1537 = vpack.c.b16 %v1396, %v1395
        %v1538 = vpack.c.b16 %v1398, %v1397
        %v1539 = vpack.c.b16 %v1400, %v1399
        %v1540 = vpack.c.b16 %v1402, %v1401
        %v1541 = vpack.c.b16 %v1404, %v1403
        %v1542 = vpack.c.b16 %v1406, %v1405
        %v1543 = vpack.c.b16 %v1408, %v1407
        %v1544 = vpack.c.b16 %v1410, %v1409
        %v1545 = vpack.c.b16 %v1412, %v1411
        %v1546 = vpack.c.b16 %v1414, %v1413
        %v1547 = vpack.c.b16 %v1416, %v1415
        %v1548 = vpack.c.b16 %v1418, %v1417
        %v1549 = vpack.c.b16 %v1420, %v1419
        %v1550 = vpack.c.b16 %v1422, %v1421
        %1679 = vmatprep.subr.bf16.mxu0 0
        %1680 = vmatpush1.bf16.msra.mxu0 %v1423
        %1681 = vmatprep.subr.bf16.mxu0 0
        %1682 = vmatpush1.bf16.msra.mxu0 %v1424
        %1683 = vmatprep.subr.bf16.mxu0 0
        %1684 = vmatpush1.bf16.msra.mxu0 %v1425
        %1685 = vmatprep.subr.bf16.mxu0 0
        %1686 = vmatpush1.bf16.msra.mxu0 %v1426
        %1687 = vmatprep.subr.bf16.mxu0 0
        %1688 = vmatpush1.bf16.msra.mxu0 %v1427
        %1689 = vmatprep.subr.bf16.mxu0 0
        %1690 = vmatpush1.bf16.msra.mxu0 %v1428
        %1691 = vmatprep.subr.bf16.mxu0 0
        %1692 = vmatpush1.bf16.msra.mxu0 %v1429
        %1693 = vmatprep.subr.bf16.mxu0 0
        %1694 = vmatpush1.bf16.msra.mxu0 %v1430
        %1695 = vmatprep.subr.bf16.mxu0 0
        %1696 = vmatpush1.bf16.msra.mxu0 %v1431
        %1697 = vmatprep.subr.bf16.mxu0 0
        %1698 = vmatpush1.bf16.msra.mxu0 %v1432
        %1699 = vmatprep.subr.bf16.mxu0 0
        %1700 = vmatpush1.bf16.msra.mxu0 %v1433
        %1701 = vmatprep.subr.bf16.mxu0 0
        %1702 = vmatpush1.bf16.msra.mxu0 %v1434
        %1703 = vmatprep.subr.bf16.mxu0 0
        %1704 = vmatpush1.bf16.msra.mxu0 %v1435
        %1705 = vmatprep.subr.bf16.mxu0 0
        %1706 = vmatpush1.bf16.msra.mxu0 %v1436
        %1707 = vmatprep.subr.bf16.mxu0 0
        %1708 = vmatpush1.bf16.msra.mxu0 %v1437
        %1709 = vmatprep.subr.bf16.mxu0 0
        %1710 = vmatpush1.bf16.msra.mxu0 %v1438
        %1711 = vmatprep.mubr.bf16.mxu0 %v636
        %1712 = vmatmul.mubr.bf16.gmra.mrb[0].mxu0 %v635
        %v1713 = vpop.f32.mrb[0].mxu0
        %v1714 = vadd.f32 %v910, %v1713
        %v1715 = vpop.f32.mrb[0].mxu0
        %v1716 = vpop.f32.mrb[0].mxu0
        %v1717 = vpop.f32.mrb[0].mxu0
        %1718 = vdwg.mxu0
        %1719 = vmatprep.subr.bf16.mxu0 0
        %1720 = vmatpush1.bf16.msra.mxu0 %v1439
        %1721 = vmatprep.subr.bf16.mxu0 0
        %1722 = vmatpush1.bf16.msra.mxu0 %v1440
        %1723 = vmatprep.subr.bf16.mxu0 0
        %1724 = vmatpush1.bf16.msra.mxu0 %v1441
        %1725 = vmatprep.subr.bf16.mxu0 0
        %1726 = vmatpush1.bf16.msra.mxu0 %v1442
        %1727 = vmatprep.subr.bf16.mxu0 0
        %1728 = vmatpush1.bf16.msra.mxu0 %v1443
        %1729 = vmatprep.subr.bf16.mxu0 0
        %1730 = vmatpush1.bf16.msra.mxu0 %v1444
        %1731 = vmatprep.subr.bf16.mxu0 0
        %1732 = vmatpush1.bf16.msra.mxu0 %v1445
        %1733 = vmatprep.subr.bf16.mxu0 0
        %1734 = vmatpush1.bf16.msra.mxu0 %v1446
        %1735 = vmatprep.subr.bf16.mxu0 0
        %1736 = vmatpush1.bf16.msra.mxu0 %v1447
        %1737 = vmatprep.subr.bf16.mxu0 0
        %1738 = vmatpush1.bf16.msra.mxu0 %v1448
        %1739 = vmatprep.subr.bf16.mxu0 0
        %1740 = vmatpush1.bf16.msra.mxu0 %v1449
        %1741 = vmatprep.subr.bf16.mxu0 0
        %1742 = vmatpush1.bf16.msra.mxu0 %v1450
        %1743 = vmatprep.subr.bf16.mxu0 0
        %1744 = vmatpush1.bf16.msra.mxu0 %v1451
        %1745 = vmatprep.subr.bf16.mxu0 0
        %1746 = vmatpush1.bf16.msra.mxu0 %v1452
        %1747 = vmatprep.subr.bf16.mxu0 0
        %1748 = vmatpush1.bf16.msra.mxu0 %v1453
        %1749 = vmatprep.subr.bf16.mxu0 0
        %1750 = vmatpush1.bf16.msra.mxu0 %v1454
        %1751 = vmatprep.mubr.bf16.mxu0 %v638
        %1752 = vmatmul.mubr.bf16.gmra.mrb[0].mxu0 %v637
        %v1753 = vpop.f32.mrb[0].mxu0
        %v1754 = vadd.f32 %v1714, %v1753
        %v1755 = vpop.f32.mrb[0].mxu0
        %v1756 = vpop.f32.mrb[0].mxu0
        %v1757 = vpop.f32.mrb[0].mxu0
        %1758 = vdwg.mxu0
        %1759 = vmatprep.subr.bf16.mxu0 0
        %1760 = vmatpush1.bf16.msra.mxu0 %v1455
        %1761 = vmatprep.subr.bf16.mxu0 0
        %1762 = vmatpush1.bf16.msra.mxu0 %v1456
        %1763 = vmatprep.subr.bf16.mxu0 0
        %1764 = vmatpush1.bf16.msra.mxu0 %v1457
        %1765 = vmatprep.subr.bf16.mxu0 0
        %1766 = vmatpush1.bf16.msra.mxu0 %v1458
        %1767 = vmatprep.subr.bf16.mxu0 0
        %1768 = vmatpush1.bf16.msra.mxu0 %v1459
        %1769 = vmatprep.subr.bf16.mxu0 0
        %1770 = vmatpush1.bf16.msra.mxu0 %v1460
        %1771 = vmatprep.subr.bf16.mxu0 0
        %1772 = vmatpush1.bf16.msra.mxu0 %v1461
        %1773 = vmatprep.subr.bf16.mxu0 0
        %1774 = vmatpush1.bf16.msra.mxu0 %v1462
        %1775 = vmatprep.subr.bf16.mxu0 0
        %1776 = vmatpush1.bf16.msra.mxu0 %v1463
        %1777 = vmatprep.subr.bf16.mxu0 0
        %1778 = vmatpush1.bf16.msra.mxu0 %v1464
        %1779 = vmatprep.subr.bf16.mxu0 0
        %1780 = vmatpush1.bf16.msra.mxu0 %v1465
        %1781 = vmatprep.subr.bf16.mxu0 0
        %1782 = vmatpush1.bf16.msra.mxu0 %v1466
        %1783 = vmatprep.subr.bf16.mxu0 0
        %1784 = vmatpush1.bf16.msra.mxu0 %v1467
        %1785 = vmatprep.subr.bf16.mxu0 0
        %1786 = vmatpush1.bf16.msra.mxu0 %v1468
        %1787 = vmatprep.subr.bf16.mxu0 0
        %1788 = vmatpush1.bf16.msra.mxu0 %v1469
        %1789 = vmatprep.subr.bf16.mxu0 0
        %1790 = vmatpush1.bf16.msra.mxu0 %v1470
        %1791 = vmatprep.mubr.bf16.mxu0 %v640
        %1792 = vmatmul.mubr.bf16.gmra.mrb[0].mxu0 %v639
        %v1793 = vpop.f32.mrb[0].mxu0
        %v1794 = vadd.f32 %v1754, %v1793
        %v1795 = vpop.f32.mrb[0].mxu0
        %v1796 = vpop.f32.mrb[0].mxu0
        %v1797 = vpop.f32.mrb[0].mxu0
        %1798 = vdwg.mxu0
        %1799 = vmatprep.subr.bf16.mxu0 0
        %1800 = vmatpush1.bf16.msra.mxu0 %v1471
        %1801 = vmatprep.subr.bf16.mxu0 0
        %1802 = vmatpush1.bf16.msra.mxu0 %v1472
        %1803 = vmatprep.subr.bf16.mxu0 0
        %1804 = vmatpush1.bf16.msra.mxu0 %v1473
        %1805 = vmatprep.subr.bf16.mxu0 0
        %1806 = vmatpush1.bf16.msra.mxu0 %v1474
        %1807 = vmatprep.subr.bf16.mxu0 0
        %1808 = vmatpush1.bf16.msra.mxu0 %v1475
        %1809 = vmatprep.subr.bf16.mxu0 0
        %1810 = vmatpush1.bf16.msra.mxu0 %v1476
        %1811 = vmatprep.subr.bf16.mxu0 0
        %1812 = vmatpush1.bf16.msra.mxu0 %v1477
        %1813 = vmatprep.subr.bf16.mxu0 0
        %1814 = vmatpush1.bf16.msra.mxu0 %v1478
        %1815 = vmatprep.subr.bf16.mxu0 0
        %1816 = vmatpush1.bf16.msra.mxu0 %v1479
        %1817 = vmatprep.subr.bf16.mxu0 0
        %1818 = vmatpush1.bf16.msra.mxu0 %v1480
        %1819 = vmatprep.subr.bf16.mxu0 0
        %1820 = vmatpush1.bf16.msra.mxu0 %v1481
        %1821 = vmatprep.subr.bf16.mxu0 0
        %1822 = vmatpush1.bf16.msra.mxu0 %v1482
        %1823 = vmatprep.subr.bf16.mxu0 0
        %1824 = vmatpush1.bf16.msra.mxu0 %v1483
        %1825 = vmatprep.subr.bf16.mxu0 0
        %1826 = vmatpush1.bf16.msra.mxu0 %v1484
        %1827 = vmatprep.subr.bf16.mxu0 0
        %1828 = vmatpush1.bf16.msra.mxu0 %v1485
        %1829 = vmatprep.subr.bf16.mxu0 0
        %1830 = vmatpush1.bf16.msra.mxu0 %v1486
        %1831 = vmatprep.mubr.bf16.mxu0 %v642
        %1832 = vmatmul.mubr.bf16.gmra.mrb[0].mxu0 %v641
        %v1833 = vpop.f32.mrb[0].mxu0
        %v1834 = vadd.f32 %v1794, %v1833
        %v1835 = vpop.f32.mrb[0].mxu0
        %v1836 = vpop.f32.mrb[0].mxu0
        %v1837 = vpop.f32.mrb[0].mxu0
        %1838 = vdwg.mxu0
        %1839 = vmatprep.subr.bf16.mxu0 0
        %1840 = vmatpush1.bf16.msra.mxu0 %v1487
        %1841 = vmatprep.subr.bf16.mxu0 0
        %1842 = vmatpush1.bf16.msra.mxu0 %v1488
        %1843 = vmatprep.subr.bf16.mxu0 0
        %1844 = vmatpush1.bf16.msra.mxu0 %v1489
        %1845 = vmatprep.subr.bf16.mxu0 0
        %1846 = vmatpush1.bf16.msra.mxu0 %v1490
        %1847 = vmatprep.subr.bf16.mxu0 0
        %1848 = vmatpush1.bf16.msra.mxu0 %v1491
        %1849 = vmatprep.subr.bf16.mxu0 0
        %1850 = vmatpush1.bf16.msra.mxu0 %v1492
        %1851 = vmatprep.subr.bf16.mxu0 0
        %1852 = vmatpush1.bf16.msra.mxu0 %v1493
        %1853 = vmatprep.subr.bf16.mxu0 0
        %1854 = vmatpush1.bf16.msra.mxu0 %v1494
        %1855 = vmatprep.subr.bf16.mxu0 0
        %1856 = vmatpush1.bf16.msra.mxu0 %v1495
        %1857 = vmatprep.subr.bf16.mxu0 0
        %1858 = vmatpush1.bf16.msra.mxu0 %v1496
        %1859 = vmatprep.subr.bf16.mxu0 0
        %1860 = vmatpush1.bf16.msra.mxu0 %v1497
        %1861 = vmatprep.subr.bf16.mxu0 0
        %1862 = vmatpush1.bf16.msra.mxu0 %v1498
        %1863 = vmatprep.subr.bf16.mxu0 0
        %1864 = vmatpush1.bf16.msra.mxu0 %v1499
        %1865 = vmatprep.subr.bf16.mxu0 0
        %1866 = vmatpush1.bf16.msra.mxu0 %v1500
        %1867 = vmatprep.subr.bf16.mxu0 0
        %1868 = vmatpush1.bf16.msra.mxu0 %v1501
        %1869 = vmatprep.subr.bf16.mxu0 0
        %1870 = vmatpush1.bf16.msra.mxu0 %v1502
        %1871 = vmatprep.mubr.bf16.mxu0 %v644
        %1872 = vmatmul.mubr.bf16.gmra.mrb[0].mxu0 %v643
        %v1873 = vpop.f32.mrb[0].mxu0
        %v1874 = vadd.f32 %v1834, %v1873
        %v1875 = vpop.f32.mrb[0].mxu0
        %v1876 = vpop.f32.mrb[0].mxu0
        %v1877 = vpop.f32.mrb[0].mxu0
        %1878 = vdwg.mxu0
        %1879 = vmatprep.subr.bf16.mxu0 0
        %1880 = vmatpush1.bf16.msra.mxu0 %v1503
        %1881 = vmatprep.subr.bf16.mxu0 0
        %1882 = vmatpush1.bf16.msra.mxu0 %v1504
        %1883 = vmatprep.subr.bf16.mxu0 0
        %1884 = vmatpush1.bf16.msra.mxu0 %v1505
        %1885 = vmatprep.subr.bf16.mxu0 0
        %1886 = vmatpush1.bf16.msra.mxu0 %v1506
        %1887 = vmatprep.subr.bf16.mxu0 0
        %1888 = vmatpush1.bf16.msra.mxu0 %v1507
        %1889 = vmatprep.subr.bf16.mxu0 0
        %1890 = vmatpush1.bf16.msra.mxu0 %v1508
        %1891 = vmatprep.subr.bf16.mxu0 0
        %1892 = vmatpush1.bf16.msra.mxu0 %v1509
        %1893 = vmatprep.subr.bf16.mxu0 0
        %1894 = vmatpush1.bf16.msra.mxu0 %v1510
        %1895 = vmatprep.subr.bf16.mxu0 0
        %1896 = vmatpush1.bf16.msra.mxu0 %v1511
        %1897 = vmatprep.subr.bf16.mxu0 0
        %1898 = vmatpush1.bf16.msra.mxu0 %v1512
        %1899 = vmatprep.subr.bf16.mxu0 0
        %1900 = vmatpush1.bf16.msra.mxu0 %v1513
        %1901 = vmatprep.subr.bf16.mxu0 0
        %1902 = vmatpush1.bf16.msra.mxu0 %v1514
        %1903 = vmatprep.subr.bf16.mxu0 0
        %1904 = vmatpush1.bf16.msra.mxu0 %v1515
        %1905 = vmatprep.subr.bf16.mxu0 0
        %1906 = vmatpush1.bf16.msra.mxu0 %v1516
        %1907 = vmatprep.subr.bf16.mxu0 0
        %1908 = vmatpush1.bf16.msra.mxu0 %v1517
        %1909 = vmatprep.subr.bf16.mxu0 0
        %1910 = vmatpush1.bf16.msra.mxu0 %v1518
        %1911 = vmatprep.mubr.bf16.mxu0 %v646
        %1912 = vmatmul.mubr.bf16.gmra.mrb[0].mxu0 %v645
        %v1913 = vpop.f32.mrb[0].mxu0
        %v1914 = vadd.f32 %v1874, %v1913
        %v1915 = vpop.f32.mrb[0].mxu0
        %v1916 = vpop.f32.mrb[0].mxu0
        %v1917 = vpop.f32.mrb[0].mxu0
        %1918 = vdwg.mxu0
        %1919 = vmatprep.subr.bf16.mxu0 0
        %1920 = vmatpush1.bf16.msra.mxu0 %v1519
        %1921 = vmatprep.subr.bf16.mxu0 0
        %1922 = vmatpush1.bf16.msra.mxu0 %v1520
        %1923 = vmatprep.subr.bf16.mxu0 0
        %1924 = vmatpush1.bf16.msra.mxu0 %v1521
        %1925 = vmatprep.subr.bf16.mxu0 0
        %1926 = vmatpush1.bf16.msra.mxu0 %v1522
        %1927 = vmatprep.subr.bf16.mxu0 0
        %1928 = vmatpush1.bf16.msra.mxu0 %v1523
        %1929 = vmatprep.subr.bf16.mxu0 0
        %1930 = vmatpush1.bf16.msra.mxu0 %v1524
        %1931 = vmatprep.subr.bf16.mxu0 0
        %1932 = vmatpush1.bf16.msra.mxu0 %v1525
        %1933 = vmatprep.subr.bf16.mxu0 0
        %1934 = vmatpush1.bf16.msra.mxu0 %v1526
        %1935 = vmatprep.subr.bf16.mxu0 0
        %1936 = vmatpush1.bf16.msra.mxu0 %v1527
        %1937 = vmatprep.subr.bf16.mxu0 0
        %1938 = vmatpush1.bf16.msra.mxu0 %v1528
        %1939 = vmatprep.subr.bf16.mxu0 0
        %1940 = vmatpush1.bf16.msra.mxu0 %v1529
        %1941 = vmatprep.subr.bf16.mxu0 0
        %1942 = vmatpush1.bf16.msra.mxu0 %v1530
        %1943 = vmatprep.subr.bf16.mxu0 0
        %1944 = vmatpush1.bf16.msra.mxu0 %v1531
        %1945 = vmatprep.subr.bf16.mxu0 0
        %1946 = vmatpush1.bf16.msra.mxu0 %v1532
        %1947 = vmatprep.subr.bf16.mxu0 0
        %1948 = vmatpush1.bf16.msra.mxu0 %v1533
        %1949 = vmatprep.subr.bf16.mxu0 0
        %1950 = vmatpush1.bf16.msra.mxu0 %v1534
        %1951 = vmatprep.mubr.bf16.mxu0 %v648
        %1952 = vmatmul.mubr.bf16.gmra.mrb[0].mxu0 %v647
        %v1953 = vpop.f32.mrb[0].mxu0
        %v1954 = vadd.f32 %v1914, %v1953
        %v1955 = vpop.f32.mrb[0].mxu0
        %v1956 = vpop.f32.mrb[0].mxu0
        %v1957 = vpop.f32.mrb[0].mxu0
        %1958 = vdwg.mxu0
        %1959 = vmatprep.subr.bf16.mxu0 0
        %1960 = vmatpush1.bf16.msra.mxu0 %v1535
        %1961 = vmatprep.subr.bf16.mxu0 0
        %1962 = vmatpush1.bf16.msra.mxu0 %v1536
        %1963 = vmatprep.subr.bf16.mxu0 0
        %1964 = vmatpush1.bf16.msra.mxu0 %v1537
        %1965 = vmatprep.subr.bf16.mxu0 0
        %1966 = vmatpush1.bf16.msra.mxu0 %v1538
        %1967 = vmatprep.subr.bf16.mxu0 0
        %1968 = vmatpush1.bf16.msra.mxu0 %v1539
        %1969 = vmatprep.subr.bf16.mxu0 0
        %1970 = vmatpush1.bf16.msra.mxu0 %v1540
        %1971 = vmatprep.subr.bf16.mxu0 0
        %1972 = vmatpush1.bf16.msra.mxu0 %v1541
        %1973 = vmatprep.subr.bf16.mxu0 0
        %1974 = vmatpush1.bf16.msra.mxu0 %v1542
        %1975 = vmatprep.subr.bf16.mxu0 0
        %1976 = vmatpush1.bf16.msra.mxu0 %v1543
        %1977 = vmatprep.subr.bf16.mxu0 0
        %1978 = vmatpush1.bf16.msra.mxu0 %v1544
        %1979 = vmatprep.subr.bf16.mxu0 0
        %1980 = vmatpush1.bf16.msra.mxu0 %v1545
        %1981 = vmatprep.subr.bf16.mxu0 0
        %1982 = vmatpush1.bf16.msra.mxu0 %v1546
        %1983 = vmatprep.subr.bf16.mxu0 0
        %1984 = vmatpush1.bf16.msra.mxu0 %v1547
        %1985 = vmatprep.subr.bf16.mxu0 0
        %1986 = vmatpush1.bf16.msra.mxu0 %v1548
        %1987 = vmatprep.subr.bf16.mxu0 0
        %1988 = vmatpush1.bf16.msra.mxu0 %v1549
        %1989 = vmatprep.subr.bf16.mxu0 0
        %1990 = vmatpush1.bf16.msra.mxu0 %v1550
        %1991 = vmatprep.mubr.bf16.mxu0 %v650
        %1992 = vmatmul.mubr.bf16.gmra.mrb[0].mxu0 %v649
        %v1993 = vpop.f32.mrb[0].mxu0
        %v1994 = vadd.f32 %v1954, %v1993
        %v1995 = vpop.f32.mrb[0].mxu0
        %v1996 = vpop.f32.mrb[0].mxu0
        %v1997 = vpop.f32.mrb[0].mxu0
        %1998 = vdwg.mxu0
        %v1999 = vmax.f32 %v1994, 0.0
        %v2000 = vpack.c.bf16 %v1999, %v1999
        %v2001 = vld [vmem:[%s359] sm:$0xff]
        %v2002 = vld [vmem:[%s359 + $0x8] sm:$0xff]
        %v2003 = vld [vmem:[%s359 + $0x10] sm:$0xff]
        %v2004 = vld [vmem:[%s359 + $0x18] sm:$0xff]
        %v2005 = vld [vmem:[%s359 + $0x20] sm:$0xff]
        %v2006 = vld [vmem:[%s359 + $0x28] sm:$0xff]
        %v2007 = vld [vmem:[%s359 + $0x30] sm:$0xff]
        %v2008 = vld [vmem:[%s359 + $0x38] sm:$0xff]
        %v2009 = vld [vmem:[%s359 + $0x40] sm:$0xff]
        %v2010 = vld [vmem:[%s359 + $0x48] sm:$0xff]
        %v2011 = vld [vmem:[%s359 + $0x50] sm:$0xff]
        %v2012 = vld [vmem:[%s359 + $0x58] sm:$0xff]
        %v2013 = vld [vmem:[%s359 + $0x60] sm:$0xff]
        %v2014 = vld [vmem:[%s359 + $0x68] sm:$0xff]
        %v2015 = vld [vmem:[%s359 + $0x70] sm:$0xff]
        %v2016 = vld [vmem:[%s359 + $0x78] sm:$0xff]
        %v2017 = vld [vmem:[%s359 + $0x80] sm:$0xff]
        %v2018 = vld [vmem:[%s359 + $0x88] sm:$0xff]
        %v2019 = vld [vmem:[%s359 + $0x90] sm:$0xff]
        %v2020 = vld [vmem:[%s359 + $0x98] sm:$0xff]
        %v2021 = vld [vmem:[%s359 + $0xa0] sm:$0xff]
        %v2022 = vld [vmem:[%s359 + $0xa8] sm:$0xff]
        %v2023 = vld [vmem:[%s359 + $0xb0] sm:$0xff]
        %v2024 = vld [vmem:[%s359 + $0xb8] sm:$0xff]
        %v2025 = vld [vmem:[%s359 + $0xc0] sm:$0xff]
        %v2026 = vld [vmem:[%s359 + $0xc8] sm:$0xff]
        %v2027 = vld [vmem:[%s359 + $0xd0] sm:$0xff]
        %v2028 = vld [vmem:[%s359 + $0xd8] sm:$0xff]
        %v2029 = vld [vmem:[%s359 + $0xe0] sm:$0xff]
        %v2030 = vld [vmem:[%s359 + $0xe8] sm:$0xff]
        %v2031 = vld [vmem:[%s359 + $0xf0] sm:$0xff]
        %v2032 = vld [vmem:[%s359 + $0xf8] sm:$0xff]
        %v2033 = vld [vmem:[%s359 + $0x100] sm:$0xff]
        %v2034 = vld [vmem:[%s359 + $0x108] sm:$0xff]
        %v2035 = vld [vmem:[%s359 + $0x110] sm:$0xff]
        %v2036 = vld [vmem:[%s359 + $0x118] sm:$0xff]
        %v2037 = vld [vmem:[%s359 + $0x120] sm:$0xff]
        %v2038 = vld [vmem:[%s359 + $0x128] sm:$0xff]
        %v2039 = vld [vmem:[%s359 + $0x130] sm:$0xff]
        %v2040 = vld [vmem:[%s359 + $0x138] sm:$0xff]
        %v2041 = vld [vmem:[%s359 + $0x140] sm:$0xff]
        %v2042 = vld [vmem:[%s359 + $0x148] sm:$0xff]
        %v2043 = vld [vmem:[%s359 + $0x150] sm:$0xff]
        %v2044 = vld [vmem:[%s359 + $0x158] sm:$0xff]
        %v2045 = vld [vmem:[%s359 + $0x160] sm:$0xff]
        %v2046 = vld [vmem:[%s359 + $0x168] sm:$0xff]
        %v2047 = vld [vmem:[%s359 + $0x170] sm:$0xff]
        %v2048 = vld [vmem:[%s359 + $0x178] sm:$0xff]
        %v2049 = vld [vmem:[%s359 + $0x180] sm:$0xff]
        %v2050 = vld [vmem:[%s359 + $0x188] sm:$0xff]
        %v2051 = vld [vmem:[%s359 + $0x190] sm:$0xff]
        %v2052 = vld [vmem:[%s359 + $0x198] sm:$0xff]
        %v2053 = vld [vmem:[%s359 + $0x1a0] sm:$0xff]
        %v2054 = vld [vmem:[%s359 + $0x1a8] sm:$0xff]
        %v2055 = vld [vmem:[%s359 + $0x1b0] sm:$0xff]
        %v2056 = vld [vmem:[%s359 + $0x1b8] sm:$0xff]
        %v2057 = vld [vmem:[%s359 + $0x1c0] sm:$0xff]
        %v2058 = vld [vmem:[%s359 + $0x1c8] sm:$0xff]
        %v2059 = vld [vmem:[%s359 + $0x1d0] sm:$0xff]
        %v2060 = vld [vmem:[%s359 + $0x1d8] sm:$0xff]
        %v2061 = vld [vmem:[%s359 + $0x1e0] sm:$0xff]
        %v2062 = vld [vmem:[%s359 + $0x1e8] sm:$0xff]
        %v2063 = vld [vmem:[%s359 + $0x1f0] sm:$0xff]
        %v2064 = vld [vmem:[%s359 + $0x1f8] sm:$0xff]
        %v2065 = vld [vmem:[%s359 + $0x200] sm:$0xff]
        %v2066 = vld [vmem:[%s359 + $0x208] sm:$0xff]
        %v2067 = vld [vmem:[%s359 + $0x210] sm:$0xff]
        %v2068 = vld [vmem:[%s359 + $0x218] sm:$0xff]
        %v2069 = vld [vmem:[%s359 + $0x220] sm:$0xff]
        %v2070 = vld [vmem:[%s359 + $0x228] sm:$0xff]
        %v2071 = vld [vmem:[%s359 + $0x230] sm:$0xff]
        %v2072 = vld [vmem:[%s359 + $0x238] sm:$0xff]
        %v2073 = vld [vmem:[%s359 + $0x240] sm:$0xff]
        %v2074 = vld [vmem:[%s359 + $0x248] sm:$0xff]
        %v2075 = vld [vmem:[%s359 + $0x250] sm:$0xff]
        %v2076 = vld [vmem:[%s359 + $0x258] sm:$0xff]
        %v2077 = vld [vmem:[%s359 + $0x260] sm:$0xff]
        %v2078 = vld [vmem:[%s359 + $0x268] sm:$0xff]
        %v2079 = vld [vmem:[%s359 + $0x270] sm:$0xff]
        %v2080 = vld [vmem:[%s359 + $0x278] sm:$0xff]
        %v2081 = vld [vmem:[%s359 + $0x280] sm:$0xff]
        %v2082 = vld [vmem:[%s359 + $0x288] sm:$0xff]
        %v2083 = vld [vmem:[%s359 + $0x290] sm:$0xff]
        %v2084 = vld [vmem:[%s359 + $0x298] sm:$0xff]
        %v2085 = vld [vmem:[%s359 + $0x2a0] sm:$0xff]
        %v2086 = vld [vmem:[%s359 + $0x2a8] sm:$0xff]
        %v2087 = vld [vmem:[%s359 + $0x2b0] sm:$0xff]
        %v2088 = vld [vmem:[%s359 + $0x2b8] sm:$0xff]
        %v2089 = vld [vmem:[%s359 + $0x2c0] sm:$0xff]
        %v2090 = vld [vmem:[%s359 + $0x2c8] sm:$0xff]
        %v2091 = vld [vmem:[%s359 + $0x2d0] sm:$0xff]
        %v2092 = vld [vmem:[%s359 + $0x2d8] sm:$0xff]
        %v2093 = vld [vmem:[%s359 + $0x2e0] sm:$0xff]
        %v2094 = vld [vmem:[%s359 + $0x2e8] sm:$0xff]
        %v2095 = vld [vmem:[%s359 + $0x2f0] sm:$0xff]
        %v2096 = vld [vmem:[%s359 + $0x2f8] sm:$0xff]
        %v2097 = vld [vmem:[%s359 + $0x300] sm:$0xff]
        %v2098 = vld [vmem:[%s359 + $0x308] sm:$0xff]
        %v2099 = vld [vmem:[%s359 + $0x310] sm:$0xff]
        %v2100 = vld [vmem:[%s359 + $0x318] sm:$0xff]
        %v2101 = vld [vmem:[%s359 + $0x320] sm:$0xff]
        %v2102 = vld [vmem:[%s359 + $0x328] sm:$0xff]
        %v2103 = vld [vmem:[%s359 + $0x330] sm:$0xff]
        %v2104 = vld [vmem:[%s359 + $0x338] sm:$0xff]
        %v2105 = vld [vmem:[%s359 + $0x340] sm:$0xff]
        %v2106 = vld [vmem:[%s359 + $0x348] sm:$0xff]
        %v2107 = vld [vmem:[%s359 + $0x350] sm:$0xff]
        %v2108 = vld [vmem:[%s359 + $0x358] sm:$0xff]
        %v2109 = vld [vmem:[%s359 + $0x360] sm:$0xff]
        %v2110 = vld [vmem:[%s359 + $0x368] sm:$0xff]
        %v2111 = vld [vmem:[%s359 + $0x370] sm:$0xff]
        %v2112 = vld [vmem:[%s359 + $0x378] sm:$0xff]
        %v2113 = vld [vmem:[%s359 + $0x380] sm:$0xff]
        %v2114 = vld [vmem:[%s359 + $0x388] sm:$0xff]
        %v2115 = vld [vmem:[%s359 + $0x390] sm:$0xff]
        %v2116 = vld [vmem:[%s359 + $0x398] sm:$0xff]
        %v2117 = vld [vmem:[%s359 + $0x3a0] sm:$0xff]
        %v2118 = vld [vmem:[%s359 + $0x3a8] sm:$0xff]
        %v2119 = vld [vmem:[%s359 + $0x3b0] sm:$0xff]
        %v2120 = vld [vmem:[%s359 + $0x3b8] sm:$0xff]
        %v2121 = vld [vmem:[%s359 + $0x3c0] sm:$0xff]
        %v2122 = vld [vmem:[%s359 + $0x3c8] sm:$0xff]
        %v2123 = vld [vmem:[%s359 + $0x3d0] sm:$0xff]
        %v2124 = vld [vmem:[%s359 + $0x3d8] sm:$0xff]
        %v2125 = vld [vmem:[%s359 + $0x3e0] sm:$0xff]
        %v2126 = vld [vmem:[%s359 + $0x3e8] sm:$0xff]
        %v2127 = vld [vmem:[%s359 + $0x3f0] sm:$0xff]
        %v2128 = vld [vmem:[%s359 + $0x3f8] sm:$0xff]
        %v2129 = vlaneseq
        %v2130 = vshrl.u32 %v2129, 7
        %v2131 = vsub.s32 0, %v2130
        %v2132 = vrot.slane %v440, %v2131
        %v2133 = vlaneseq
        %v2134 = vshrl.u32 %v2133, 7
        %v2135 = vsub.s32 0, %v2134
        %v2136 = vrot.slane %v441, %v2135
        %v2137 = vlaneseq
        %v2138 = vshrl.u32 %v2137, 7
        %v2139 = vsub.s32 0, %v2138
        %v2140 = vrot.slane %v442, %v2139
        %v2141 = vlaneseq
        %v2142 = vshrl.u32 %v2141, 7
        %v2143 = vsub.s32 0, %v2142
        %v2144 = vrot.slane %v443, %v2143
        %v2145 = vlaneseq
        %v2146 = vshrl.u32 %v2145, 7
        %v2147 = vsub.s32 0, %v2146
        %v2148 = vrot.slane %v444, %v2147
        %v2149 = vlaneseq
        %v2150 = vshrl.u32 %v2149, 7
        %v2151 = vsub.s32 0, %v2150
        %v2152 = vrot.slane %v445, %v2151
        %v2153 = vlaneseq
        %v2154 = vshrl.u32 %v2153, 7
        %v2155 = vsub.s32 0, %v2154
        %v2156 = vrot.slane %v446, %v2155
        %v2157 = vlaneseq
        %v2158 = vshrl.u32 %v2157, 7
        %v2159 = vsub.s32 0, %v2158
        %v2160 = vrot.slane %v447, %v2159
        %v2161 = vlaneseq
        %v2162 = vshrl.u32 %v2161, 7
        %v2163 = vsub.s32 0, %v2162
        %v2164 = vrot.slane %v448, %v2163
        %v2165 = vlaneseq
        %v2166 = vshrl.u32 %v2165, 7
        %v2167 = vsub.s32 0, %v2166
        %v2168 = vrot.slane %v449, %v2167
        %v2169 = vlaneseq
        %v2170 = vshrl.u32 %v2169, 7
        %v2171 = vsub.s32 0, %v2170
        %v2172 = vrot.slane %v450, %v2171
        %v2173 = vlaneseq
        %v2174 = vshrl.u32 %v2173, 7
        %v2175 = vsub.s32 0, %v2174
        %v2176 = vrot.slane %v451, %v2175
        %v2177 = vlaneseq
        %v2178 = vshrl.u32 %v2177, 7
        %v2179 = vsub.s32 0, %v2178
        %v2180 = vrot.slane %v452, %v2179
        %v2181 = vlaneseq
        %v2182 = vshrl.u32 %v2181, 7
        %v2183 = vsub.s32 0, %v2182
        %v2184 = vrot.slane %v453, %v2183
        %v2185 = vlaneseq
        %v2186 = vshrl.u32 %v2185, 7
        %v2187 = vsub.s32 0, %v2186
        %v2188 = vrot.slane %v454, %v2187
        %v2189 = vlaneseq
        %v2190 = vshrl.u32 %v2189, 7
        %v2191 = vsub.s32 0, %v2190
        %v2192 = vrot.slane %v455, %v2191
        %v2321 = vunpack.c.l.b16 %v2001
        %v2322 = vunpack.c.h.b16 %v2001
        %v2323 = vunpack.c.l.b16 %v2002
        %v2324 = vunpack.c.h.b16 %v2002
        %v2325 = vunpack.c.l.b16 %v2003
        %v2326 = vunpack.c.h.b16 %v2003
        %v2327 = vunpack.c.l.b16 %v2004
        %v2328 = vunpack.c.h.b16 %v2004
        %v2329 = vunpack.c.l.b16 %v2005
        %v2330 = vunpack.c.h.b16 %v2005
        %v2331 = vunpack.c.l.b16 %v2006
        %v2332 = vunpack.c.h.b16 %v2006
        %v2333 = vunpack.c.l.b16 %v2007
        %v2334 = vunpack.c.h.b16 %v2007
        %v2335 = vunpack.c.l.b16 %v2008
        %v2336 = vunpack.c.h.b16 %v2008
        %v2337 = vunpack.c.l.b16 %v2009
        %v2338 = vunpack.c.h.b16 %v2009
        %v2339 = vunpack.c.l.b16 %v2010
        %v2340 = vunpack.c.h.b16 %v2010
        %v2341 = vunpack.c.l.b16 %v2011
        %v2342 = vunpack.c.h.b16 %v2011
        %v2343 = vunpack.c.l.b16 %v2012
        %v2344 = vunpack.c.h.b16 %v2012
        %v2345 = vunpack.c.l.b16 %v2013
        %v2346 = vunpack.c.h.b16 %v2013
        %v2347 = vunpack.c.l.b16 %v2014
        %v2348 = vunpack.c.h.b16 %v2014
        %v2349 = vunpack.c.l.b16 %v2015
        %v2350 = vunpack.c.h.b16 %v2015
        %v2351 = vunpack.c.l.b16 %v2016
        %v2352 = vunpack.c.h.b16 %v2016
        %v2353 = vunpack.c.l.b16 %v2017
        %v2354 = vunpack.c.h.b16 %v2017
        %v2355 = vunpack.c.l.b16 %v2018
        %v2356 = vunpack.c.h.b16 %v2018
        %v2357 = vunpack.c.l.b16 %v2019
        %v2358 = vunpack.c.h.b16 %v2019
        %v2359 = vunpack.c.l.b16 %v2020
        %v2360 = vunpack.c.h.b16 %v2020
        %v2361 = vunpack.c.l.b16 %v2021
        %v2362 = vunpack.c.h.b16 %v2021
        %v2363 = vunpack.c.l.b16 %v2022
        %v2364 = vunpack.c.h.b16 %v2022
        %v2365 = vunpack.c.l.b16 %v2023
        %v2366 = vunpack.c.h.b16 %v2023
        %v2367 = vunpack.c.l.b16 %v2024
        %v2368 = vunpack.c.h.b16 %v2024
        %v2369 = vunpack.c.l.b16 %v2025
        %v2370 = vunpack.c.h.b16 %v2025
        %v2371 = vunpack.c.l.b16 %v2026
        %v2372 = vunpack.c.h.b16 %v2026
        %v2373 = vunpack.c.l.b16 %v2027
        %v2374 = vunpack.c.h.b16 %v2027
        %v2375 = vunpack.c.l.b16 %v2028
        %v2376 = vunpack.c.h.b16 %v2028
        %v2377 = vunpack.c.l.b16 %v2029
        %v2378 = vunpack.c.h.b16 %v2029
        %v2379 = vunpack.c.l.b16 %v2030
        %v2380 = vunpack.c.h.b16 %v2030
        %v2381 = vunpack.c.l.b16 %v2031
        %v2382 = vunpack.c.h.b16 %v2031
        %v2383 = vunpack.c.l.b16 %v2032
        %v2384 = vunpack.c.h.b16 %v2032
        %v2385 = vunpack.c.l.b16 %v2033
        %v2386 = vunpack.c.h.b16 %v2033
        %v2387 = vunpack.c.l.b16 %v2034
        %v2388 = vunpack.c.h.b16 %v2034
        %v2389 = vunpack.c.l.b16 %v2035
        %v2390 = vunpack.c.h.b16 %v2035
        %v2391 = vunpack.c.l.b16 %v2036
        %v2392 = vunpack.c.h.b16 %v2036
        %v2393 = vunpack.c.l.b16 %v2037
        %v2394 = vunpack.c.h.b16 %v2037
        %v2395 = vunpack.c.l.b16 %v2038
        %v2396 = vunpack.c.h.b16 %v2038
        %v2397 = vunpack.c.l.b16 %v2039
        %v2398 = vunpack.c.h.b16 %v2039
        %v2399 = vunpack.c.l.b16 %v2040
        %v2400 = vunpack.c.h.b16 %v2040
        %v2401 = vunpack.c.l.b16 %v2041
        %v2402 = vunpack.c.h.b16 %v2041
        %v2403 = vunpack.c.l.b16 %v2042
        %v2404 = vunpack.c.h.b16 %v2042
        %v2405 = vunpack.c.l.b16 %v2043
        %v2406 = vunpack.c.h.b16 %v2043
        %v2407 = vunpack.c.l.b16 %v2044
        %v2408 = vunpack.c.h.b16 %v2044
        %v2409 = vunpack.c.l.b16 %v2045
        %v2410 = vunpack.c.h.b16 %v2045
        %v2411 = vunpack.c.l.b16 %v2046
        %v2412 = vunpack.c.h.b16 %v2046
        %v2413 = vunpack.c.l.b16 %v2047
        %v2414 = vunpack.c.h.b16 %v2047
        %v2415 = vunpack.c.l.b16 %v2048
        %v2416 = vunpack.c.h.b16 %v2048
        %v2417 = vunpack.c.l.b16 %v2049
        %v2418 = vunpack.c.h.b16 %v2049
        %v2419 = vunpack.c.l.b16 %v2050
        %v2420 = vunpack.c.h.b16 %v2050
        %v2421 = vunpack.c.l.b16 %v2051
        %v2422 = vunpack.c.h.b16 %v2051
        %v2423 = vunpack.c.l.b16 %v2052
        %v2424 = vunpack.c.h.b16 %v2052
        %v2425 = vunpack.c.l.b16 %v2053
        %v2426 = vunpack.c.h.b16 %v2053
        %v2427 = vunpack.c.l.b16 %v2054
        %v2428 = vunpack.c.h.b16 %v2054
        %v2429 = vunpack.c.l.b16 %v2055
        %v2430 = vunpack.c.h.b16 %v2055
        %v2431 = vunpack.c.l.b16 %v2056
        %v2432 = vunpack.c.h.b16 %v2056
        %v2433 = vunpack.c.l.b16 %v2057
        %v2434 = vunpack.c.h.b16 %v2057
        %v2435 = vunpack.c.l.b16 %v2058
        %v2436 = vunpack.c.h.b16 %v2058
        %v2437 = vunpack.c.l.b16 %v2059
        %v2438 = vunpack.c.h.b16 %v2059
        %v2439 = vunpack.c.l.b16 %v2060
        %v2440 = vunpack.c.h.b16 %v2060
        %v2441 = vunpack.c.l.b16 %v2061
        %v2442 = vunpack.c.h.b16 %v2061
        %v2443 = vunpack.c.l.b16 %v2062
        %v2444 = vunpack.c.h.b16 %v2062
        %v2445 = vunpack.c.l.b16 %v2063
        %v2446 = vunpack.c.h.b16 %v2063
        %v2447 = vunpack.c.l.b16 %v2064
        %v2448 = vunpack.c.h.b16 %v2064
        %v2449 = vunpack.c.l.b16 %v2065
        %v2450 = vunpack.c.h.b16 %v2065
        %v2451 = vunpack.c.l.b16 %v2066
        %v2452 = vunpack.c.h.b16 %v2066
        %v2453 = vunpack.c.l.b16 %v2067
        %v2454 = vunpack.c.h.b16 %v2067
        %v2455 = vunpack.c.l.b16 %v2068
        %v2456 = vunpack.c.h.b16 %v2068
        %v2457 = vunpack.c.l.b16 %v2069
        %v2458 = vunpack.c.h.b16 %v2069
        %v2459 = vunpack.c.l.b16 %v2070
        %v2460 = vunpack.c.h.b16 %v2070
        %v2461 = vunpack.c.l.b16 %v2071
        %v2462 = vunpack.c.h.b16 %v2071
        %v2463 = vunpack.c.l.b16 %v2072
        %v2464 = vunpack.c.h.b16 %v2072
        %v2465 = vunpack.c.l.b16 %v2073
        %v2466 = vunpack.c.h.b16 %v2073
        %v2467 = vunpack.c.l.b16 %v2074
        %v2468 = vunpack.c.h.b16 %v2074
        %v2469 = vunpack.c.l.b16 %v2075
        %v2470 = vunpack.c.h.b16 %v2075
        %v2471 = vunpack.c.l.b16 %v2076
        %v2472 = vunpack.c.h.b16 %v2076
        %v2473 = vunpack.c.l.b16 %v2077
        %v2474 = vunpack.c.h.b16 %v2077
        %v2475 = vunpack.c.l.b16 %v2078
        %v2476 = vunpack.c.h.b16 %v2078
        %v2477 = vunpack.c.l.b16 %v2079
        %v2478 = vunpack.c.h.b16 %v2079
        %v2479 = vunpack.c.l.b16 %v2080
        %v2480 = vunpack.c.h.b16 %v2080
        %v2481 = vunpack.c.l.b16 %v2081
        %v2482 = vunpack.c.h.b16 %v2081
        %v2483 = vunpack.c.l.b16 %v2082
        %v2484 = vunpack.c.h.b16 %v2082
        %v2485 = vunpack.c.l.b16 %v2083
        %v2486 = vunpack.c.h.b16 %v2083
        %v2487 = vunpack.c.l.b16 %v2084
        %v2488 = vunpack.c.h.b16 %v2084
        %v2489 = vunpack.c.l.b16 %v2085
        %v2490 = vunpack.c.h.b16 %v2085
        %v2491 = vunpack.c.l.b16 %v2086
        %v2492 = vunpack.c.h.b16 %v2086
        %v2493 = vunpack.c.l.b16 %v2087
        %v2494 = vunpack.c.h.b16 %v2087
        %v2495 = vunpack.c.l.b16 %v2088
        %v2496 = vunpack.c.h.b16 %v2088
        %v2497 = vunpack.c.l.b16 %v2089
        %v2498 = vunpack.c.h.b16 %v2089
        %v2499 = vunpack.c.l.b16 %v2090
        %v2500 = vunpack.c.h.b16 %v2090
        %v2501 = vunpack.c.l.b16 %v2091
        %v2502 = vunpack.c.h.b16 %v2091
        %v2503 = vunpack.c.l.b16 %v2092
        %v2504 = vunpack.c.h.b16 %v2092
        %v2505 = vunpack.c.l.b16 %v2093
        %v2506 = vunpack.c.h.b16 %v2093
        %v2507 = vunpack.c.l.b16 %v2094
        %v2508 = vunpack.c.h.b16 %v2094
        %v2509 = vunpack.c.l.b16 %v2095
        %v2510 = vunpack.c.h.b16 %v2095
        %v2511 = vunpack.c.l.b16 %v2096
        %v2512 = vunpack.c.h.b16 %v2096
        %v2513 = vunpack.c.l.b16 %v2097
        %v2514 = vunpack.c.h.b16 %v2097
        %v2515 = vunpack.c.l.b16 %v2098
        %v2516 = vunpack.c.h.b16 %v2098
        %v2517 = vunpack.c.l.b16 %v2099
        %v2518 = vunpack.c.h.b16 %v2099
        %v2519 = vunpack.c.l.b16 %v2100
        %v2520 = vunpack.c.h.b16 %v2100
        %v2521 = vunpack.c.l.b16 %v2101
        %v2522 = vunpack.c.h.b16 %v2101
        %v2523 = vunpack.c.l.b16 %v2102
        %v2524 = vunpack.c.h.b16 %v2102
        %v2525 = vunpack.c.l.b16 %v2103
        %v2526 = vunpack.c.h.b16 %v2103
        %v2527 = vunpack.c.l.b16 %v2104
        %v2528 = vunpack.c.h.b16 %v2104
        %v2529 = vunpack.c.l.b16 %v2105
        %v2530 = vunpack.c.h.b16 %v2105
        %v2531 = vunpack.c.l.b16 %v2106
        %v2532 = vunpack.c.h.b16 %v2106
        %v2533 = vunpack.c.l.b16 %v2107
        %v2534 = vunpack.c.h.b16 %v2107
        %v2535 = vunpack.c.l.b16 %v2108
        %v2536 = vunpack.c.h.b16 %v2108
        %v2537 = vunpack.c.l.b16 %v2109
        %v2538 = vunpack.c.h.b16 %v2109
        %v2539 = vunpack.c.l.b16 %v2110
        %v2540 = vunpack.c.h.b16 %v2110
        %v2541 = vunpack.c.l.b16 %v2111
        %v2542 = vunpack.c.h.b16 %v2111
        %v2543 = vunpack.c.l.b16 %v2112
        %v2544 = vunpack.c.h.b16 %v2112
        %v2545 = vunpack.c.l.b16 %v2113
        %v2546 = vunpack.c.h.b16 %v2113
        %v2547 = vunpack.c.l.b16 %v2114
        %v2548 = vunpack.c.h.b16 %v2114
        %v2549 = vunpack.c.l.b16 %v2115
        %v2550 = vunpack.c.h.b16 %v2115
        %v2551 = vunpack.c.l.b16 %v2116
        %v2552 = vunpack.c.h.b16 %v2116
        %v2553 = vunpack.c.l.b16 %v2117
        %v2554 = vunpack.c.h.b16 %v2117
        %v2555 = vunpack.c.l.b16 %v2118
        %v2556 = vunpack.c.h.b16 %v2118
        %v2557 = vunpack.c.l.b16 %v2119
        %v2558 = vunpack.c.h.b16 %v2119
        %v2559 = vunpack.c.l.b16 %v2120
        %v2560 = vunpack.c.h.b16 %v2120
        %v2561 = vunpack.c.l.b16 %v2121
        %v2562 = vunpack.c.h.b16 %v2121
        %v2563 = vunpack.c.l.b16 %v2122
        %v2564 = vunpack.c.h.b16 %v2122
        %v2565 = vunpack.c.l.b16 %v2123
        %v2566 = vunpack.c.h.b16 %v2123
        %v2567 = vunpack.c.l.b16 %v2124
        %v2568 = vunpack.c.h.b16 %v2124
        %v2569 = vunpack.c.l.b16 %v2125
        %v2570 = vunpack.c.h.b16 %v2125
        %v2571 = vunpack.c.l.b16 %v2126
        %v2572 = vunpack.c.h.b16 %v2126
        %v2573 = vunpack.c.l.b16 %v2127
        %v2574 = vunpack.c.h.b16 %v2127
        %v2575 = vunpack.c.l.b16 %v2128
        %v2576 = vunpack.c.h.b16 %v2128
        %v2577 = vpack.c.b16 %v2337, %v2321
        %v2578 = vpack.c.b16 %v2338, %v2322
        %v2579 = vpack.c.b16 %v2339, %v2323
        %v2580 = vpack.c.b16 %v2340, %v2324
        %v2581 = vpack.c.b16 %v2341, %v2325
        %v2582 = vpack.c.b16 %v2342, %v2326
        %v2583 = vpack.c.b16 %v2343, %v2327
        %v2584 = vpack.c.b16 %v2344, %v2328
        %v2585 = vpack.c.b16 %v2345, %v2329
        %v2586 = vpack.c.b16 %v2346, %v2330
        %v2587 = vpack.c.b16 %v2347, %v2331
        %v2588 = vpack.c.b16 %v2348, %v2332
        %v2589 = vpack.c.b16 %v2349, %v2333
        %v2590 = vpack.c.b16 %v2350, %v2334
        %v2591 = vpack.c.b16 %v2351, %v2335
        %v2592 = vpack.c.b16 %v2352, %v2336
        %v2593 = vpack.c.b16 %v2369, %v2353
        %v2594 = vpack.c.b16 %v2370, %v2354
        %v2595 = vpack.c.b16 %v2371, %v2355
        %v2596 = vpack.c.b16 %v2372, %v2356
        %v2597 = vpack.c.b16 %v2373, %v2357
        %v2598 = vpack.c.b16 %v2374, %v2358
        %v2599 = vpack.c.b16 %v2375, %v2359
        %v2600 = vpack.c.b16 %v2376, %v2360
        %v2601 = vpack.c.b16 %v2377, %v2361
        %v2602 = vpack.c.b16 %v2378, %v2362
        %v2603 = vpack.c.b16 %v2379, %v2363
        %v2604 = vpack.c.b16 %v2380, %v2364
        %v2605 = vpack.c.b16 %v2381, %v2365
        %v2606 = vpack.c.b16 %v2382, %v2366
        %v2607 = vpack.c.b16 %v2383, %v2367
        %v2608 = vpack.c.b16 %v2384, %v2368
        %v2609 = vpack.c.b16 %v2401, %v2385
        %v2610 = vpack.c.b16 %v2402, %v2386
        %v2611 = vpack.c.b16 %v2403, %v2387
        %v2612 = vpack.c.b16 %v2404, %v2388
        %v2613 = vpack.c.b16 %v2405, %v2389
        %v2614 = vpack.c.b16 %v2406, %v2390
        %v2615 = vpack.c.b16 %v2407, %v2391
        %v2616 = vpack.c.b16 %v2408, %v2392
        %v2617 = vpack.c.b16 %v2409, %v2393
        %v2618 = vpack.c.b16 %v2410, %v2394
        %v2619 = vpack.c.b16 %v2411, %v2395
        %v2620 = vpack.c.b16 %v2412, %v2396
        %v2621 = vpack.c.b16 %v2413, %v2397
        %v2622 = vpack.c.b16 %v2414, %v2398
        %v2623 = vpack.c.b16 %v2415, %v2399
        %v2624 = vpack.c.b16 %v2416, %v2400
        %v2625 = vpack.c.b16 %v2433, %v2417
        %v2626 = vpack.c.b16 %v2434, %v2418
        %v2627 = vpack.c.b16 %v2435, %v2419
        %v2628 = vpack.c.b16 %v2436, %v2420
        %v2629 = vpack.c.b16 %v2437, %v2421
        %v2630 = vpack.c.b16 %v2438, %v2422
        %v2631 = vpack.c.b16 %v2439, %v2423
        %v2632 = vpack.c.b16 %v2440, %v2424
        %v2633 = vpack.c.b16 %v2441, %v2425
        %v2634 = vpack.c.b16 %v2442, %v2426
        %v2635 = vpack.c.b16 %v2443, %v2427
        %v2636 = vpack.c.b16 %v2444, %v2428
        %v2637 = vpack.c.b16 %v2445, %v2429
        %v2638 = vpack.c.b16 %v2446, %v2430
        %v2639 = vpack.c.b16 %v2447, %v2431
        %v2640 = vpack.c.b16 %v2448, %v2432
        %v2641 = vpack.c.b16 %v2465, %v2449
        %v2642 = vpack.c.b16 %v2466, %v2450
        %v2643 = vpack.c.b16 %v2467, %v2451
        %v2644 = vpack.c.b16 %v2468, %v2452
        %v2645 = vpack.c.b16 %v2469, %v2453
        %v2646 = vpack.c.b16 %v2470, %v2454
        %v2647 = vpack.c.b16 %v2471, %v2455
        %v2648 = vpack.c.b16 %v2472, %v2456
        %v2649 = vpack.c.b16 %v2473, %v2457
        %v2650 = vpack.c.b16 %v2474, %v2458
        %v2651 = vpack.c.b16 %v2475, %v2459
        %v2652 = vpack.c.b16 %v2476, %v2460
        %v2653 = vpack.c.b16 %v2477, %v2461
        %v2654 = vpack.c.b16 %v2478, %v2462
        %v2655 = vpack.c.b16 %v2479, %v2463
        %v2656 = vpack.c.b16 %v2480, %v2464
        %v2657 = vpack.c.b16 %v2497, %v2481
        %v2658 = vpack.c.b16 %v2498, %v2482
        %v2659 = vpack.c.b16 %v2499, %v2483
        %v2660 = vpack.c.b16 %v2500, %v2484
        %v2661 = vpack.c.b16 %v2501, %v2485
        %v2662 = vpack.c.b16 %v2502, %v2486
        %v2663 = vpack.c.b16 %v2503, %v2487
        %v2664 = vpack.c.b16 %v2504, %v2488
        %v2665 = vpack.c.b16 %v2505, %v2489
        %v2666 = vpack.c.b16 %v2506, %v2490
        %v2667 = vpack.c.b16 %v2507, %v2491
        %v2668 = vpack.c.b16 %v2508, %v2492
        %v2669 = vpack.c.b16 %v2509, %v2493
        %v2670 = vpack.c.b16 %v2510, %v2494
        %v2671 = vpack.c.b16 %v2511, %v2495
        %v2672 = vpack.c.b16 %v2512, %v2496
        %v2673 = vpack.c.b16 %v2529, %v2513
        %v2674 = vpack.c.b16 %v2530, %v2514
        %v2675 = vpack.c.b16 %v2531, %v2515
        %v2676 = vpack.c.b16 %v2532, %v2516
        %v2677 = vpack.c.b16 %v2533, %v2517
        %v2678 = vpack.c.b16 %v2534, %v2518
        %v2679 = vpack.c.b16 %v2535, %v2519
        %v2680 = vpack.c.b16 %v2536, %v2520
        %v2681 = vpack.c.b16 %v2537, %v2521
        %v2682 = vpack.c.b16 %v2538, %v2522
        %v2683 = vpack.c.b16 %v2539, %v2523
        %v2684 = vpack.c.b16 %v2540, %v2524
        %v2685 = vpack.c.b16 %v2541, %v2525
        %v2686 = vpack.c.b16 %v2542, %v2526
        %v2687 = vpack.c.b16 %v2543, %v2527
        %v2688 = vpack.c.b16 %v2544, %v2528
        %v2689 = vpack.c.b16 %v2561, %v2545
        %v2690 = vpack.c.b16 %v2562, %v2546
        %v2691 = vpack.c.b16 %v2563, %v2547
        %v2692 = vpack.c.b16 %v2564, %v2548
        %v2693 = vpack.c.b16 %v2565, %v2549
        %v2694 = vpack.c.b16 %v2566, %v2550
        %v2695 = vpack.c.b16 %v2567, %v2551
        %v2696 = vpack.c.b16 %v2568, %v2552
        %v2697 = vpack.c.b16 %v2569, %v2553
        %v2698 = vpack.c.b16 %v2570, %v2554
        %v2699 = vpack.c.b16 %v2571, %v2555
        %v2700 = vpack.c.b16 %v2572, %v2556
        %v2701 = vpack.c.b16 %v2573, %v2557
        %v2702 = vpack.c.b16 %v2574, %v2558
        %v2703 = vpack.c.b16 %v2575, %v2559
        %v2704 = vpack.c.b16 %v2576, %v2560
        %2833 = vmatprep.subr.bf16.mxu0 %v2578
        %2834 = vmatpush1.bf16.msra.mxu0 %v2577
        %2835 = vmatprep.subr.bf16.mxu0 %v2594
        %2836 = vmatpush1.bf16.msra.mxu0 %v2593
        %2837 = vmatprep.subr.bf16.mxu0 %v2610
        %2838 = vmatpush1.bf16.msra.mxu0 %v2609
        %2839 = vmatprep.subr.bf16.mxu0 %v2626
        %2840 = vmatpush1.bf16.msra.mxu0 %v2625
        %2841 = vmatprep.subr.bf16.mxu0 %v2642
        %2842 = vmatpush1.bf16.msra.mxu0 %v2641
        %2843 = vmatprep.subr.bf16.mxu0 %v2658
        %2844 = vmatpush1.bf16.msra.mxu0 %v2657
        %2845 = vmatprep.subr.bf16.mxu0 %v2674
        %2846 = vmatpush1.bf16.msra.mxu0 %v2673
        %2847 = vmatprep.subr.bf16.mxu0 %v2690
        %2848 = vmatpush1.bf16.msra.mxu0 %v2689
        %2849 = vmatprep.subr.bf16.mxu0 0
        %2850 = vmatpush1.bf16.msra.mxu0 0
        %2851 = vmatprep.subr.bf16.mxu0 0
        %2852 = vmatpush1.bf16.msra.mxu0 0
        %2853 = vmatprep.subr.bf16.mxu0 0
        %2854 = vmatpush1.bf16.msra.mxu0 0
        %2855 = vmatprep.subr.bf16.mxu0 0
        %2856 = vmatpush1.bf16.msra.mxu0 0
        %2857 = vmatprep.subr.bf16.mxu0 0
        %2858 = vmatpush1.bf16.msra.mxu0 0
        %2859 = vmatprep.subr.bf16.mxu0 0
        %2860 = vmatpush1.bf16.msra.mxu0 0
        %2861 = vmatprep.subr.bf16.mxu0 0
        %2862 = vmatpush1.bf16.msra.mxu0 0
        %2863 = vmatprep.subr.bf16.mxu0 0
        %2864 = vmatpush1.bf16.msra.mxu0 0
        %2865 = vmatprep.mubr.bf16.mxu0 0
        %2866 = vmatmul.mubr.bf16.gmra.mrb[0].mxu0 %v2000
        %v2867 = vpop.f32.mrb[0].mxu0
        %v2868 = vadd.f32 %v2132, %v2867
        %v2869 = vpop.f32.mrb[0].mxu0
        %v2870 = vadd.f32 %v2136, %v2869
        %v2871 = vpop.f32.mrb[0].mxu0
        %v2872 = vpop.f32.mrb[0].mxu0
        %2873 = vdwg.mxu0
        %2874 = vmatprep.subr.bf16.mxu0 %v2580
        %2875 = vmatpush1.bf16.msra.mxu0 %v2579
        %2876 = vmatprep.subr.bf16.mxu0 %v2596
        %2877 = vmatpush1.bf16.msra.mxu0 %v2595
        %2878 = vmatprep.subr.bf16.mxu0 %v2612
        %2879 = vmatpush1.bf16.msra.mxu0 %v2611
        %2880 = vmatprep.subr.bf16.mxu0 %v2628
        %2881 = vmatpush1.bf16.msra.mxu0 %v2627
        %2882 = vmatprep.subr.bf16.mxu0 %v2644
        %2883 = vmatpush1.bf16.msra.mxu0 %v2643
        %2884 = vmatprep.subr.bf16.mxu0 %v2660
        %2885 = vmatpush1.bf16.msra.mxu0 %v2659
        %2886 = vmatprep.subr.bf16.mxu0 %v2676
        %2887 = vmatpush1.bf16.msra.mxu0 %v2675
        %2888 = vmatprep.subr.bf16.mxu0 %v2692
        %2889 = vmatpush1.bf16.msra.mxu0 %v2691
        %2890 = vmatprep.subr.bf16.mxu0 0
        %2891 = vmatpush1.bf16.msra.mxu0 0
        %2892 = vmatprep.subr.bf16.mxu0 0
        %2893 = vmatpush1.bf16.msra.mxu0 0
        %2894 = vmatprep.subr.bf16.mxu0 0
        %2895 = vmatpush1.bf16.msra.mxu0 0
        %2896 = vmatprep.subr.bf16.mxu0 0
        %2897 = vmatpush1.bf16.msra.mxu0 0
        %2898 = vmatprep.subr.bf16.mxu0 0
        %2899 = vmatpush1.bf16.msra.mxu0 0
        %2900 = vmatprep.subr.bf16.mxu0 0
        %2901 = vmatpush1.bf16.msra.mxu0 0
        %2902 = vmatprep.subr.bf16.mxu0 0
        %2903 = vmatpush1.bf16.msra.mxu0 0
        %2904 = vmatprep.subr.bf16.mxu0 0
        %2905 = vmatpush1.bf16.msra.mxu0 0
        %2906 = vmatprep.mubr.bf16.mxu0 0
        %2907 = vmatmul.mubr.bf16.gmra.mrb[0].mxu0 %v2000
        %v2908 = vpop.f32.mrb[0].mxu0
        %v2909 = vadd.f32 %v2140, %v2908
        %v2910 = vpop.f32.mrb[0].mxu0
        %v2911 = vadd.f32 %v2144, %v2910
        %v2912 = vpop.f32.mrb[0].mxu0
        %v2913 = vpop.f32.mrb[0].mxu0
        %2914 = vdwg.mxu0
        %2915 = vmatprep.subr.bf16.mxu0 %v2582
        %2916 = vmatpush1.bf16.msra.mxu0 %v2581
        %2917 = vmatprep.subr.bf16.mxu0 %v2598
        %2918 = vmatpush1.bf16.msra.mxu0 %v2597
        %2919 = vmatprep.subr.bf16.mxu0 %v2614
        %2920 = vmatpush1.bf16.msra.mxu0 %v2613
        %2921 = vmatprep.subr.bf16.mxu0 %v2630
        %2922 = vmatpush1.bf16.msra.mxu0 %v2629
        %2923 = vmatprep.subr.bf16.mxu0 %v2646
        %2924 = vmatpush1.bf16.msra.mxu0 %v2645
        %2925 = vmatprep.subr.bf16.mxu0 %v2662
        %2926 = vmatpush1.bf16.msra.mxu0 %v2661
        %2927 = vmatprep.subr.bf16.mxu0 %v2678
        %2928 = vmatpush1.bf16.msra.mxu0 %v2677
        %2929 = vmatprep.subr.bf16.mxu0 %v2694
        %2930 = vmatpush1.bf16.msra.mxu0 %v2693
        %2931 = vmatprep.subr.bf16.mxu0 0
        %2932 = vmatpush1.bf16.msra.mxu0 0
        %2933 = vmatprep.subr.bf16.mxu0 0
        %2934 = vmatpush1.bf16.msra.mxu0 0
        %2935 = vmatprep.subr.bf16.mxu0 0
        %2936 = vmatpush1.bf16.msra.mxu0 0
        %2937 = vmatprep.subr.bf16.mxu0 0
        %2938 = vmatpush1.bf16.msra.mxu0 0
        %2939 = vmatprep.subr.bf16.mxu0 0
        %2940 = vmatpush1.bf16.msra.mxu0 0
        %2941 = vmatprep.subr.bf16.mxu0 0
        %2942 = vmatpush1.bf16.msra.mxu0 0
        %2943 = vmatprep.subr.bf16.mxu0 0
        %2944 = vmatpush1.bf16.msra.mxu0 0
        %2945 = vmatprep.subr.bf16.mxu0 0
        %2946 = vmatpush1.bf16.msra.mxu0 0
        %2947 = vmatprep.mubr.bf16.mxu0 0
        %2948 = vmatmul.mubr.bf16.gmra.mrb[0].mxu0 %v2000
        %v2949 = vpop.f32.mrb[0].mxu0
        %v2950 = vadd.f32 %v2148, %v2949
        %v2951 = vpop.f32.mrb[0].mxu0
        %v2952 = vadd.f32 %v2152, %v2951
        %v2953 = vpop.f32.mrb[0].mxu0
        %v2954 = vpop.f32.mrb[0].mxu0
        %2955 = vdwg.mxu0
        %2956 = vmatprep.subr.bf16.mxu0 %v2584
        %2957 = vmatpush1.bf16.msra.mxu0 %v2583
        %2958 = vmatprep.subr.bf16.mxu0 %v2600
        %2959 = vmatpush1.bf16.msra.mxu0 %v2599
        %2960 = vmatprep.subr.bf16.mxu0 %v2616
        %2961 = vmatpush1.bf16.msra.mxu0 %v2615
        %2962 = vmatprep.subr.bf16.mxu0 %v2632
        %2963 = vmatpush1.bf16.msra.mxu0 %v2631
        %2964 = vmatprep.subr.bf16.mxu0 %v2648
        %2965 = vmatpush1.bf16.msra.mxu0 %v2647
        %2966 = vmatprep.subr.bf16.mxu0 %v2664
        %2967 = vmatpush1.bf16.msra.mxu0 %v2663
        %2968 = vmatprep.subr.bf16.mxu0 %v2680
        %2969 = vmatpush1.bf16.msra.mxu0 %v2679
        %2970 = vmatprep.subr.bf16.mxu0 %v2696
        %2971 = vmatpush1.bf16.msra.mxu0 %v2695
        %2972 = vmatprep.subr.bf16.mxu0 0
        %2973 = vmatpush1.bf16.msra.mxu0 0
        %2974 = vmatprep.subr.bf16.mxu0 0
        %2975 = vmatpush1.bf16.msra.mxu0 0
        %2976 = vmatprep.subr.bf16.mxu0 0
        %2977 = vmatpush1.bf16.msra.mxu0 0
        %2978 = vmatprep.subr.bf16.mxu0 0
        %2979 = vmatpush1.bf16.msra.mxu0 0
        %2980 = vmatprep.subr.bf16.mxu0 0
        %2981 = vmatpush1.bf16.msra.mxu0 0
        %2982 = vmatprep.subr.bf16.mxu0 0
        %2983 = vmatpush1.bf16.msra.mxu0 0
        %2984 = vmatprep.subr.bf16.mxu0 0
        %2985 = vmatpush1.bf16.msra.mxu0 0
        %2986 = vmatprep.subr.bf16.mxu0 0
        %2987 = vmatpush1.bf16.msra.mxu0 0
        %2988 = vmatprep.mubr.bf16.mxu0 0
        %2989 = vmatmul.mubr.bf16.gmra.mrb[0].mxu0 %v2000
        %v2990 = vpop.f32.mrb[0].mxu0
        %v2991 = vadd.f32 %v2156, %v2990
        %v2992 = vpop.f32.mrb[0].mxu0
        %v2993 = vadd.f32 %v2160, %v2992
        %v2994 = vpop.f32.mrb[0].mxu0
        %v2995 = vpop.f32.mrb[0].mxu0
        %2996 = vdwg.mxu0
        %2997 = vmatprep.subr.bf16.mxu0 %v2586
        %2998 = vmatpush1.bf16.msra.mxu0 %v2585
        %2999 = vmatprep.subr.bf16.mxu0 %v2602
        %3000 = vmatpush1.bf16.msra.mxu0 %v2601
        %3001 = vmatprep.subr.bf16.mxu0 %v2618
        %3002 = vmatpush1.bf16.msra.mxu0 %v2617
        %3003 = vmatprep.subr.bf16.mxu0 %v2634
        %3004 = vmatpush1.bf16.msra.mxu0 %v2633
        %3005 = vmatprep.subr.bf16.mxu0 %v2650
        %3006 = vmatpush1.bf16.msra.mxu0 %v2649
        %3007 = vmatprep.subr.bf16.mxu0 %v2666
        %3008 = vmatpush1.bf16.msra.mxu0 %v2665
        %3009 = vmatprep.subr.bf16.mxu0 %v2682
        %3010 = vmatpush1.bf16.msra.mxu0 %v2681
        %3011 = vmatprep.subr.bf16.mxu0 %v2698
        %3012 = vmatpush1.bf16.msra.mxu0 %v2697
        %3013 = vmatprep.subr.bf16.mxu0 0
        %3014 = vmatpush1.bf16.msra.mxu0 0
        %3015 = vmatprep.subr.bf16.mxu0 0
        %3016 = vmatpush1.bf16.msra.mxu0 0
        %3017 = vmatprep.subr.bf16.mxu0 0
        %3018 = vmatpush1.bf16.msra.mxu0 0
        %3019 = vmatprep.subr.bf16.mxu0 0
        %3020 = vmatpush1.bf16.msra.mxu0 0
        %3021 = vmatprep.subr.bf16.mxu0 0
        %3022 = vmatpush1.bf16.msra.mxu0 0
        %3023 = vmatprep.subr.bf16.mxu0 0
        %3024 = vmatpush1.bf16.msra.mxu0 0
        %3025 = vmatprep.subr.bf16.mxu0 0
        %3026 = vmatpush1.bf16.msra.mxu0 0
        %3027 = vmatprep.subr.bf16.mxu0 0
        %3028 = vmatpush1.bf16.msra.mxu0 0
        %3029 = vmatprep.mubr.bf16.mxu0 0
        %3030 = vmatmul.mubr.bf16.gmra.mrb[0].mxu0 %v2000
        %v3031 = vpop.f32.mrb[0].mxu0
        %v3032 = vadd.f32 %v2164, %v3031
        %v3033 = vpop.f32.mrb[0].mxu0
        %v3034 = vadd.f32 %v2168, %v3033
        %v3035 = vpop.f32.mrb[0].mxu0
        %v3036 = vpop.f32.mrb[0].mxu0
        %3037 = vdwg.mxu0
        %3038 = vmatprep.subr.bf16.mxu0 %v2588
        %3039 = vmatpush1.bf16.msra.mxu0 %v2587
        %3040 = vmatprep.subr.bf16.mxu0 %v2604
        %3041 = vmatpush1.bf16.msra.mxu0 %v2603
        %3042 = vmatprep.subr.bf16.mxu0 %v2620
        %3043 = vmatpush1.bf16.msra.mxu0 %v2619
        %3044 = vmatprep.subr.bf16.mxu0 %v2636
        %3045 = vmatpush1.bf16.msra.mxu0 %v2635
        %3046 = vmatprep.subr.bf16.mxu0 %v2652
        %3047 = vmatpush1.bf16.msra.mxu0 %v2651
        %3048 = vmatprep.subr.bf16.mxu0 %v2668
        %3049 = vmatpush1.bf16.msra.mxu0 %v2667
        %3050 = vmatprep.subr.bf16.mxu0 %v2684
        %3051 = vmatpush1.bf16.msra.mxu0 %v2683
        %3052 = vmatprep.subr.bf16.mxu0 %v2700
        %3053 = vmatpush1.bf16.msra.mxu0 %v2699
        %3054 = vmatprep.subr.bf16.mxu0 0
        %3055 = vmatpush1.bf16.msra.mxu0 0
        %3056 = vmatprep.subr.bf16.mxu0 0
        %3057 = vmatpush1.bf16.msra.mxu0 0
        %3058 = vmatprep.subr.bf16.mxu0 0
        %3059 = vmatpush1.bf16.msra.mxu0 0
        %3060 = vmatprep.subr.bf16.mxu0 0
        %3061 = vmatpush1.bf16.msra.mxu0 0
        %3062 = vmatprep.subr.bf16.mxu0 0
        %3063 = vmatpush1.bf16.msra.mxu0 0
        %3064 = vmatprep.subr.bf16.mxu0 0
        %3065 = vmatpush1.bf16.msra.mxu0 0
        %3066 = vmatprep.subr.bf16.mxu0 0
        %3067 = vmatpush1.bf16.msra.mxu0 0
        %3068 = vmatprep.subr.bf16.mxu0 0
        %3069 = vmatpush1.bf16.msra.mxu0 0
        %3070 = vmatprep.mubr.bf16.mxu0 0
        %3071 = vmatmul.mubr.bf16.gmra.mrb[0].mxu0 %v2000
        %v3072 = vpop.f32.mrb[0].mxu0
        %v3073 = vadd.f32 %v2172, %v3072
        %v3074 = vpop.f32.mrb[0].mxu0
        %v3075 = vadd.f32 %v2176, %v3074
        %v3076 = vpop.f32.mrb[0].mxu0
        %v3077 = vpop.f32.mrb[0].mxu0
        %3078 = vdwg.mxu0
        %3079 = vmatprep.subr.bf16.mxu0 %v2590
        %3080 = vmatpush1.bf16.msra.mxu0 %v2589
        %3081 = vmatprep.subr.bf16.mxu0 %v2606
        %3082 = vmatpush1.bf16.msra.mxu0 %v2605
        %3083 = vmatprep.subr.bf16.mxu0 %v2622
        %3084 = vmatpush1.bf16.msra.mxu0 %v2621
        %3085 = vmatprep.subr.bf16.mxu0 %v2638
        %3086 = vmatpush1.bf16.msra.mxu0 %v2637
        %3087 = vmatprep.subr.bf16.mxu0 %v2654
        %3088 = vmatpush1.bf16.msra.mxu0 %v2653
        %3089 = vmatprep.subr.bf16.mxu0 %v2670
        %3090 = vmatpush1.bf16.msra.mxu0 %v2669
        %3091 = vmatprep.subr.bf16.mxu0 %v2686
        %3092 = vmatpush1.bf16.msra.mxu0 %v2685
        %3093 = vmatprep.subr.bf16.mxu0 %v2702
        %3094 = vmatpush1.bf16.msra.mxu0 %v2701
        %3095 = vmatprep.subr.bf16.mxu0 0
        %3096 = vmatpush1.bf16.msra.mxu0 0
        %3097 = vmatprep.subr.bf16.mxu0 0
        %3098 = vmatpush1.bf16.msra.mxu0 0
        %3099 = vmatprep.subr.bf16.mxu0 0
        %3100 = vmatpush1.bf16.msra.mxu0 0
        %3101 = vmatprep.subr.bf16.mxu0 0
        %3102 = vmatpush1.bf16.msra.mxu0 0
        %3103 = vmatprep.subr.bf16.mxu0 0
        %3104 = vmatpush1.bf16.msra.mxu0 0
        %3105 = vmatprep.subr.bf16.mxu0 0
        %3106 = vmatpush1.bf16.msra.mxu0 0
        %3107 = vmatprep.subr.bf16.mxu0 0
        %3108 = vmatpush1.bf16.msra.mxu0 0
        %3109 = vmatprep.subr.bf16.mxu0 0
        %3110 = vmatpush1.bf16.msra.mxu0 0
        %3111 = vmatprep.mubr.bf16.mxu0 0
        %3112 = vmatmul.mubr.bf16.gmra.mrb[0].mxu0 %v2000
        %v3113 = vpop.f32.mrb[0].mxu0
        %v3114 = vadd.f32 %v2180, %v3113
        %v3115 = vpop.f32.mrb[0].mxu0
        %v3116 = vadd.f32 %v2184, %v3115
        %v3117 = vpop.f32.mrb[0].mxu0
        %v3118 = vpop.f32.mrb[0].mxu0
        %3119 = vdwg.mxu0
        %3120 = vmatprep.subr.bf16.mxu0 %v2592
        %3121 = vmatpush1.bf16.msra.mxu0 %v2591
        %3122 = vmatprep.subr.bf16.mxu0 %v2608
        %3123 = vmatpush1.bf16.msra.mxu0 %v2607
        %3124 = vmatprep.subr.bf16.mxu0 %v2624
        %3125 = vmatpush1.bf16.msra.mxu0 %v2623
        %3126 = vmatprep.subr.bf16.mxu0 %v2640
        %3127 = vmatpush1.bf16.msra.mxu0 %v2639
        %3128 = vmatprep.subr.bf16.mxu0 %v2656
        %3129 = vmatpush1.bf16.msra.mxu0 %v2655
        %3130 = vmatprep.subr.bf16.mxu0 %v2672
        %3131 = vmatpush1.bf16.msra.mxu0 %v2671
        %3132 = vmatprep.subr.bf16.mxu0 %v2688
        %3133 = vmatpush1.bf16.msra.mxu0 %v2687
        %3134 = vmatprep.subr.bf16.mxu0 %v2704
        %3135 = vmatpush1.bf16.msra.mxu0 %v2703
        %3136 = vmatprep.subr.bf16.mxu0 0
        %3137 = vmatpush1.bf16.msra.mxu0 0
        %3138 = vmatprep.subr.bf16.mxu0 0
        %3139 = vmatpush1.bf16.msra.mxu0 0
        %3140 = vmatprep.subr.bf16.mxu0 0
        %3141 = vmatpush1.bf16.msra.mxu0 0
        %3142 = vmatprep.subr.bf16.mxu0 0
        %3143 = vmatpush1.bf16.msra.mxu0 0
        %3144 = vmatprep.subr.bf16.mxu0 0
        %3145 = vmatpush1.bf16.msra.mxu0 0
        %3146 = vmatprep.subr.bf16.mxu0 0
        %3147 = vmatpush1.bf16.msra.mxu0 0
        %3148 = vmatprep.subr.bf16.mxu0 0
        %3149 = vmatpush1.bf16.msra.mxu0 0
        %3150 = vmatprep.subr.bf16.mxu0 0
        %3151 = vmatpush1.bf16.msra.mxu0 0
        %3152 = vmatprep.mubr.bf16.mxu0 0
        %3153 = vmatmul.mubr.bf16.gmra.mrb[0].mxu0 %v2000
        %v3154 = vpop.f32.mrb[0].mxu0
        %v3155 = vadd.f32 %v2188, %v3154
        %v3156 = vpop.f32.mrb[0].mxu0
        %v3157 = vadd.f32 %v2192, %v3156
        %v3158 = vpop.f32.mrb[0].mxu0
        %v3159 = vpop.f32.mrb[0].mxu0
        %3160 = vdwg.mxu0
        %v3161 = vmul.f32 %v2868, 2.0
        %v3162 = vmul.f32 %v2870, 2.0
        %v3163 = vmul.f32 %v2909, 2.0
        %v3164 = vmul.f32 %v2911, 2.0
        %v3165 = vmul.f32 %v2950, 2.0
        %v3166 = vmul.f32 %v2952, 2.0
        %v3167 = vmul.f32 %v2991, 2.0
        %v3168 = vmul.f32 %v2993, 2.0
        %v3169 = vmul.f32 %v3032, 2.0
        %v3170 = vmul.f32 %v3034, 2.0
        %v3171 = vmul.f32 %v3073, 2.0
        %v3172 = vmul.f32 %v3075, 2.0
        %v3173 = vmul.f32 %v3114, 2.0
        %v3174 = vmul.f32 %v3116, 2.0
        %v3175 = vmul.f32 %v3155, 2.0
        %v3176 = vmul.f32 %v3157, 2.0
        %v3177 = vxor.u32 %v3161, 2147483648
        %v3178 = vxor.u32 %v3162, 2147483648
        %v3179 = vxor.u32 %v3163, 2147483648
        %v3180 = vxor.u32 %v3164, 2147483648
        %v3181 = vxor.u32 %v3165, 2147483648
        %v3182 = vxor.u32 %v3166, 2147483648
        %v3183 = vxor.u32 %v3167, 2147483648
        %v3184 = vxor.u32 %v3168, 2147483648
        %v3185 = vxor.u32 %v3169, 2147483648
        %v3186 = vxor.u32 %v3170, 2147483648
        %v3187 = vxor.u32 %v3171, 2147483648
        %v3188 = vxor.u32 %v3172, 2147483648
        %v3189 = vxor.u32 %v3173, 2147483648
        %v3190 = vxor.u32 %v3174, 2147483648
        %v3191 = vxor.u32 %v3175, 2147483648
        %v3192 = vxor.u32 %v3176, 2147483648
        %v3193 = vmul.f32 %v3177, 1.442695
        %v3194 = vpow.pop %v3193
        %v3195 = vmul.f32 %v3178, 1.442695
        %v3196 = vpow.pop %v3195
        %v3197 = vmul.f32 %v3179, 1.442695
        %v3198 = vpow.pop %v3197
        %v3199 = vmul.f32 %v3180, 1.442695
        %v3200 = vpow.pop %v3199
        %v3201 = vmul.f32 %v3181, 1.442695
        %v3202 = vpow.pop %v3201
        %v3203 = vmul.f32 %v3182, 1.442695
        %v3204 = vpow.pop %v3203
        %v3205 = vmul.f32 %v3183, 1.442695
        %v3206 = vpow.pop %v3205
        %v3207 = vmul.f32 %v3184, 1.442695
        %v3208 = vpow.pop %v3207
        %v3209 = vmul.f32 %v3185, 1.442695
        %v3210 = vpow.pop %v3209
        %v3211 = vmul.f32 %v3186, 1.442695
        %v3212 = vpow.pop %v3211
        %v3213 = vmul.f32 %v3187, 1.442695
        %v3214 = vpow.pop %v3213
        %v3215 = vmul.f32 %v3188, 1.442695
        %v3216 = vpow.pop %v3215
        %v3217 = vmul.f32 %v3189, 1.442695
        %v3218 = vpow.pop %v3217
        %v3219 = vmul.f32 %v3190, 1.442695
        %v3220 = vpow.pop %v3219
        %v3221 = vmul.f32 %v3191, 1.442695
        %v3222 = vpow.pop %v3221
        %v3223 = vmul.f32 %v3192, 1.442695
        %v3224 = vpow.pop %v3223
        %v3225 = vadd.f32 %v3194, 1.0
        %v3226 = vadd.f32 %v3196, 1.0
        %v3227 = vadd.f32 %v3198, 1.0
        %v3228 = vadd.f32 %v3200, 1.0
        %v3229 = vadd.f32 %v3202, 1.0
        %v3230 = vadd.f32 %v3204, 1.0
        %v3231 = vadd.f32 %v3206, 1.0
        %v3232 = vadd.f32 %v3208, 1.0
        %v3233 = vadd.f32 %v3210, 1.0
        %v3234 = vadd.f32 %v3212, 1.0
        %v3235 = vadd.f32 %v3214, 1.0
        %v3236 = vadd.f32 %v3216, 1.0
        %v3237 = vadd.f32 %v3218, 1.0
        %v3238 = vadd.f32 %v3220, 1.0
        %v3239 = vadd.f32 %v3222, 1.0
        %v3240 = vadd.f32 %v3224, 1.0
        %v3241 = vrcp.pop %v3225
        %v3242 = vmul.f32 1.0, %v3241
        %v3243 = vrcp.pop %v3226
        %v3244 = vmul.f32 1.0, %v3243
        %v3245 = vrcp.pop %v3227
        %v3246 = vmul.f32 1.0, %v3245
        %v3247 = vrcp.pop %v3228
        %v3248 = vmul.f32 1.0, %v3247
        %v3249 = vrcp.pop %v3229
        %v3250 = vmul.f32 1.0, %v3249
        %v3251 = vrcp.pop %v3230
        %v3252 = vmul.f32 1.0, %v3251
        %v3253 = vrcp.pop %v3231
        %v3254 = vmul.f32 1.0, %v3253
        %v3255 = vrcp.pop %v3232
        %v3256 = vmul.f32 1.0, %v3255
        %v3257 = vrcp.pop %v3233
        %v3258 = vmul.f32 1.0, %v3257
        %v3259 = vrcp.pop %v3234
        %v3260 = vmul.f32 1.0, %v3259
        %v3261 = vrcp.pop %v3235
        %v3262 = vmul.f32 1.0, %v3261
        %v3263 = vrcp.pop %v3236
        %v3264 = vmul.f32 1.0, %v3263
        %v3265 = vrcp.pop %v3237
        %v3266 = vmul.f32 1.0, %v3265
        %v3267 = vrcp.pop %v3238
        %v3268 = vmul.f32 1.0, %v3267
        %v3269 = vrcp.pop %v3239
        %v3270 = vmul.f32 1.0, %v3269
        %v3271 = vrcp.pop %v3240
        %v3272 = vmul.f32 1.0, %v3271
        %v3289 = vcombine.low %v3242, %v3244
        %v3290 = vcombine.low %v3246, %v3248
        %v3292 = vunpack.c.l.s4 1983009808
        %v3293 = vunpack.c.0.s8 %v3292
        %v3294 = vlaneseq
        %v3295 = vshrl.u32 %v3294, 7
        %v3296 = vsub.s32 %v3293, %v3295
        %v3297 = vrot.slane %v3289, %v3296
        %v3299 = vunpack.c.l.s4 1983009808
        %v3300 = vunpack.c.0.s8 %v3299
        %v3301 = vlaneseq
        %v3302 = vshrl.u32 %v3301, 7
        %v3303 = vsub.s32 %v3300, %v3302
        %v3304 = vrot.slane %v3290, %v3303
        %v3305 = vcombine.low %v3297, %v3304
        %v3306 = vcombine.low %v3250, %v3252
        %v3307 = vcombine.low %v3254, %v3256
        %v3309 = vunpack.c.l.s4 1983009808
        %v3310 = vunpack.c.0.s8 %v3309
        %v3311 = vlaneseq
        %v3312 = vshrl.u32 %v3311, 7
        %v3313 = vsub.s32 %v3310, %v3312
        %v3314 = vrot.slane %v3306, %v3313
        %v3316 = vunpack.c.l.s4 1983009808
        %v3317 = vunpack.c.0.s8 %v3316
        %v3318 = vlaneseq
        %v3319 = vshrl.u32 %v3318, 7
        %v3320 = vsub.s32 %v3317, %v3319
        %v3321 = vrot.slane %v3307, %v3320
        %v3322 = vcombine.low %v3314, %v3321
        %v3323 = vcombine.low %v3258, %v3260
        %v3324 = vcombine.low %v3262, %v3264
        %v3326 = vunpack.c.l.s4 1983009808
        %v3327 = vunpack.c.0.s8 %v3326
        %v3328 = vlaneseq
        %v3329 = vshrl.u32 %v3328, 7
        %v3330 = vsub.s32 %v3327, %v3329
        %v3331 = vrot.slane %v3323, %v3330
        %v3333 = vunpack.c.l.s4 1983009808
        %v3334 = vunpack.c.0.s8 %v3333
        %v3335 = vlaneseq
        %v3336 = vshrl.u32 %v3335, 7
        %v3337 = vsub.s32 %v3334, %v3336
        %v3338 = vrot.slane %v3324, %v3337
        %v3339 = vcombine.low %v3331, %v3338
        %v3340 = vcombine.low %v3266, %v3268
        %v3341 = vcombine.low %v3270, %v3272
        %v3343 = vunpack.c.l.s4 1983009808
        %v3344 = vunpack.c.0.s8 %v3343
        %v3345 = vlaneseq
        %v3346 = vshrl.u32 %v3345, 7
        %v3347 = vsub.s32 %v3344, %v3346
        %v3348 = vrot.slane %v3340, %v3347
        %v3350 = vunpack.c.l.s4 1983009808
        %v3351 = vunpack.c.0.s8 %v3350
        %v3352 = vlaneseq
        %v3353 = vshrl.u32 %v3352, 7
        %v3354 = vsub.s32 %v3351, %v3353
        %v3355 = vrot.slane %v3341, %v3354
        %v3356 = vcombine.low %v3348, %v3355
        %v3361 = vmul.f32 %v436, %v3305
        %v3362 = vmul.f32 %v437, %v3322
        %v3363 = vmul.f32 %v438, %v3339
        %v3364 = vmul.f32 %v439, %v3356
        %3366 = vset.pattern.permute.xlu0 0
        %3367 = vperm.xlu0 %3366, %v634
        %v3368 = vpop.permute.xlu0 %3367
        %v3370 = vunpack.c.l.s4 269488144
        %v3371 = vunpack.c.0.s8 %v3370
        %v3372 = vlaneseq
        %v3373 = vshrl.u32 %v3372, 7
        %v3374 = vsub.s32 %v3371, %v3373
        %v3375 = vrot.slane %v3368, %v3374
        %v3377 = vmul.f32 %v3361, %v3375
        %v3378 = vmul.f32 %v3362, %v3375
        %v3379 = vmul.f32 %v3363, %v3375
        %v3380 = vmul.f32 %v3364, %v3375
        %v3385 = vcombine.high %v3377, %v3377
        %v3387 = vunpack.c.l.s4 1983009808
        %v3388 = vunpack.c.0.s8 %v3387
        %v3389 = vlaneseq
        %v3390 = vshrl.u32 %v3389, 7
        %v3391 = vsub.s32 %v3388, %v3390
        %v3392 = vrot.slane %v3377, %v3391
        %v3394 = vunpack.c.l.s4 1983009808
        %v3395 = vunpack.c.0.s8 %v3394
        %v3396 = vlaneseq
        %v3397 = vshrl.u32 %v3396, 7
        %v3398 = vsub.s32 %v3395, %v3397
        %v3399 = vrot.slane %v3385, %v3398
        %v3400 = vcombine.high %v3392, %v3392
        %v3401 = vcombine.high %v3399, %v3399
        %v3402 = vcombine.high %v3378, %v3378
        %v3404 = vunpack.c.l.s4 1983009808
        %v3405 = vunpack.c.0.s8 %v3404
        %v3406 = vlaneseq
        %v3407 = vshrl.u32 %v3406, 7
        %v3408 = vsub.s32 %v3405, %v3407
        %v3409 = vrot.slane %v3378, %v3408
        %v3411 = vunpack.c.l.s4 1983009808
        %v3412 = vunpack.c.0.s8 %v3411
        %v3413 = vlaneseq
        %v3414 = vshrl.u32 %v3413, 7
        %v3415 = vsub.s32 %v3412, %v3414
        %v3416 = vrot.slane %v3402, %v3415
        %v3417 = vcombine.high %v3409, %v3409
        %v3418 = vcombine.high %v3416, %v3416
        %v3419 = vcombine.high %v3379, %v3379
        %v3421 = vunpack.c.l.s4 1983009808
        %v3422 = vunpack.c.0.s8 %v3421
        %v3423 = vlaneseq
        %v3424 = vshrl.u32 %v3423, 7
        %v3425 = vsub.s32 %v3422, %v3424
        %v3426 = vrot.slane %v3379, %v3425
        %v3428 = vunpack.c.l.s4 1983009808
        %v3429 = vunpack.c.0.s8 %v3428
        %v3430 = vlaneseq
        %v3431 = vshrl.u32 %v3430, 7
        %v3432 = vsub.s32 %v3429, %v3431
        %v3433 = vrot.slane %v3419, %v3432
        %v3434 = vcombine.high %v3426, %v3426
        %v3435 = vcombine.high %v3433, %v3433
        %v3436 = vcombine.high %v3380, %v3380
        %v3438 = vunpack.c.l.s4 1983009808
        %v3439 = vunpack.c.0.s8 %v3438
        %v3440 = vlaneseq
        %v3441 = vshrl.u32 %v3440, 7
        %v3442 = vsub.s32 %v3439, %v3441
        %v3443 = vrot.slane %v3380, %v3442
        %v3445 = vunpack.c.l.s4 1983009808
        %v3446 = vunpack.c.0.s8 %v3445
        %v3447 = vlaneseq
        %v3448 = vshrl.u32 %v3447, 7
        %v3449 = vsub.s32 %v3446, %v3448
        %v3450 = vrot.slane %v3436, %v3449
        %v3451 = vcombine.high %v3443, %v3443
        %v3452 = vcombine.high %v3450, %v3450
        %v3469 = vpack.c.bf16 %v3392, %v3392
        %v3470 = vpack.c.bf16 %v3400, %v3400
        %v3471 = vpack.c.bf16 %v3399, %v3399
        %v3472 = vpack.c.bf16 %v3401, %v3401
        %v3473 = vpack.c.bf16 %v3409, %v3409
        %v3474 = vpack.c.bf16 %v3417, %v3417
        %v3475 = vpack.c.bf16 %v3416, %v3416
        %v3476 = vpack.c.bf16 %v3418, %v3418
        %v3477 = vpack.c.bf16 %v3426, %v3426
        %v3478 = vpack.c.bf16 %v3434, %v3434
        %v3479 = vpack.c.bf16 %v3433, %v3433
        %v3480 = vpack.c.bf16 %v3435, %v3435
        %v3481 = vpack.c.bf16 %v3443, %v3443
        %v3482 = vpack.c.bf16 %v3451, %v3451
        %v3483 = vpack.c.bf16 %v3450, %v3450
        %v3484 = vpack.c.bf16 %v3452, %v3452
        %v3485 = vld [vmem:[%s368] sm:$0xff]
        %v3486 = vld [vmem:[%s368 + $0x8] sm:$0xff]
        %v3487 = vld [vmem:[%s368 + $0x10] sm:$0xff]
        %v3488 = vld [vmem:[%s368 + $0x18] sm:$0xff]
        %v3489 = vld [vmem:[%s368 + $0x20] sm:$0xff]
        %v3490 = vld [vmem:[%s368 + $0x28] sm:$0xff]
        %v3491 = vld [vmem:[%s368 + $0x30] sm:$0xff]
        %v3492 = vld [vmem:[%s368 + $0x38] sm:$0xff]
        %v3493 = vld [vmem:[%s368 + $0x40] sm:$0xff]
        %v3494 = vld [vmem:[%s368 + $0x48] sm:$0xff]
        %v3495 = vld [vmem:[%s368 + $0x50] sm:$0xff]
        %v3496 = vld [vmem:[%s368 + $0x58] sm:$0xff]
        %v3497 = vld [vmem:[%s368 + $0x60] sm:$0xff]
        %v3498 = vld [vmem:[%s368 + $0x68] sm:$0xff]
        %v3499 = vld [vmem:[%s368 + $0x70] sm:$0xff]
        %v3500 = vld [vmem:[%s368 + $0x78] sm:$0xff]
        %v3501 = vld [vmem:[%s368 + $0x80] sm:$0xff]
        %v3502 = vld [vmem:[%s368 + $0x88] sm:$0xff]
        %v3503 = vld [vmem:[%s368 + $0x90] sm:$0xff]
        %v3504 = vld [vmem:[%s368 + $0x98] sm:$0xff]
        %v3505 = vld [vmem:[%s368 + $0xa0] sm:$0xff]
        %v3506 = vld [vmem:[%s368 + $0xa8] sm:$0xff]
        %v3507 = vld [vmem:[%s368 + $0xb0] sm:$0xff]
        %v3508 = vld [vmem:[%s368 + $0xb8] sm:$0xff]
        %v3509 = vld [vmem:[%s368 + $0xc0] sm:$0xff]
        %v3510 = vld [vmem:[%s368 + $0xc8] sm:$0xff]
        %v3511 = vld [vmem:[%s368 + $0xd0] sm:$0xff]
        %v3512 = vld [vmem:[%s368 + $0xd8] sm:$0xff]
        %v3513 = vld [vmem:[%s368 + $0xe0] sm:$0xff]
        %v3514 = vld [vmem:[%s368 + $0xe8] sm:$0xff]
        %v3515 = vld [vmem:[%s368 + $0xf0] sm:$0xff]
        %v3516 = vld [vmem:[%s368 + $0xf8] sm:$0xff]
        %v3517 = vld [vmem:[%s368 + $0x100] sm:$0xff]
        %v3518 = vld [vmem:[%s368 + $0x108] sm:$0xff]
        %v3519 = vld [vmem:[%s368 + $0x110] sm:$0xff]
        %v3520 = vld [vmem:[%s368 + $0x118] sm:$0xff]
        %v3521 = vld [vmem:[%s368 + $0x120] sm:$0xff]
        %v3522 = vld [vmem:[%s368 + $0x128] sm:$0xff]
        %v3523 = vld [vmem:[%s368 + $0x130] sm:$0xff]
        %v3524 = vld [vmem:[%s368 + $0x138] sm:$0xff]
        %v3525 = vld [vmem:[%s368 + $0x140] sm:$0xff]
        %v3526 = vld [vmem:[%s368 + $0x148] sm:$0xff]
        %v3527 = vld [vmem:[%s368 + $0x150] sm:$0xff]
        %v3528 = vld [vmem:[%s368 + $0x158] sm:$0xff]
        %v3529 = vld [vmem:[%s368 + $0x160] sm:$0xff]
        %v3530 = vld [vmem:[%s368 + $0x168] sm:$0xff]
        %v3531 = vld [vmem:[%s368 + $0x170] sm:$0xff]
        %v3532 = vld [vmem:[%s368 + $0x178] sm:$0xff]
        %v3533 = vld [vmem:[%s368 + $0x180] sm:$0xff]
        %v3534 = vld [vmem:[%s368 + $0x188] sm:$0xff]
        %v3535 = vld [vmem:[%s368 + $0x190] sm:$0xff]
        %v3536 = vld [vmem:[%s368 + $0x198] sm:$0xff]
        %v3537 = vld [vmem:[%s368 + $0x1a0] sm:$0xff]
        %v3538 = vld [vmem:[%s368 + $0x1a8] sm:$0xff]
        %v3539 = vld [vmem:[%s368 + $0x1b0] sm:$0xff]
        %v3540 = vld [vmem:[%s368 + $0x1b8] sm:$0xff]
        %v3541 = vld [vmem:[%s368 + $0x1c0] sm:$0xff]
        %v3542 = vld [vmem:[%s368 + $0x1c8] sm:$0xff]
        %v3543 = vld [vmem:[%s368 + $0x1d0] sm:$0xff]
        %v3544 = vld [vmem:[%s368 + $0x1d8] sm:$0xff]
        %v3545 = vld [vmem:[%s368 + $0x1e0] sm:$0xff]
        %v3546 = vld [vmem:[%s368 + $0x1e8] sm:$0xff]
        %v3547 = vld [vmem:[%s368 + $0x1f0] sm:$0xff]
        %v3548 = vld [vmem:[%s368 + $0x1f8] sm:$0xff]
        %v3549 = vld [vmem:[%s368 + $0x200] sm:$0xff]
        %v3550 = vld [vmem:[%s368 + $0x208] sm:$0xff]
        %v3551 = vld [vmem:[%s368 + $0x210] sm:$0xff]
        %v3552 = vld [vmem:[%s368 + $0x218] sm:$0xff]
        %v3553 = vld [vmem:[%s368 + $0x220] sm:$0xff]
        %v3554 = vld [vmem:[%s368 + $0x228] sm:$0xff]
        %v3555 = vld [vmem:[%s368 + $0x230] sm:$0xff]
        %v3556 = vld [vmem:[%s368 + $0x238] sm:$0xff]
        %v3557 = vld [vmem:[%s368 + $0x240] sm:$0xff]
        %v3558 = vld [vmem:[%s368 + $0x248] sm:$0xff]
        %v3559 = vld [vmem:[%s368 + $0x250] sm:$0xff]
        %v3560 = vld [vmem:[%s368 + $0x258] sm:$0xff]
        %v3561 = vld [vmem:[%s368 + $0x260] sm:$0xff]
        %v3562 = vld [vmem:[%s368 + $0x268] sm:$0xff]
        %v3563 = vld [vmem:[%s368 + $0x270] sm:$0xff]
        %v3564 = vld [vmem:[%s368 + $0x278] sm:$0xff]
        %v3565 = vld [vmem:[%s368 + $0x280] sm:$0xff]
        %v3566 = vld [vmem:[%s368 + $0x288] sm:$0xff]
        %v3567 = vld [vmem:[%s368 + $0x290] sm:$0xff]
        %v3568 = vld [vmem:[%s368 + $0x298] sm:$0xff]
        %v3569 = vld [vmem:[%s368 + $0x2a0] sm:$0xff]
        %v3570 = vld [vmem:[%s368 + $0x2a8] sm:$0xff]
        %v3571 = vld [vmem:[%s368 + $0x2b0] sm:$0xff]
        %v3572 = vld [vmem:[%s368 + $0x2b8] sm:$0xff]
        %v3573 = vld [vmem:[%s368 + $0x2c0] sm:$0xff]
        %v3574 = vld [vmem:[%s368 + $0x2c8] sm:$0xff]
        %v3575 = vld [vmem:[%s368 + $0x2d0] sm:$0xff]
        %v3576 = vld [vmem:[%s368 + $0x2d8] sm:$0xff]
        %v3577 = vld [vmem:[%s368 + $0x2e0] sm:$0xff]
        %v3578 = vld [vmem:[%s368 + $0x2e8] sm:$0xff]
        %v3579 = vld [vmem:[%s368 + $0x2f0] sm:$0xff]
        %v3580 = vld [vmem:[%s368 + $0x2f8] sm:$0xff]
        %v3581 = vld [vmem:[%s368 + $0x300] sm:$0xff]
        %v3582 = vld [vmem:[%s368 + $0x308] sm:$0xff]
        %v3583 = vld [vmem:[%s368 + $0x310] sm:$0xff]
        %v3584 = vld [vmem:[%s368 + $0x318] sm:$0xff]
        %v3585 = vld [vmem:[%s368 + $0x320] sm:$0xff]
        %v3586 = vld [vmem:[%s368 + $0x328] sm:$0xff]
        %v3587 = vld [vmem:[%s368 + $0x330] sm:$0xff]
        %v3588 = vld [vmem:[%s368 + $0x338] sm:$0xff]
        %v3589 = vld [vmem:[%s368 + $0x340] sm:$0xff]
        %v3590 = vld [vmem:[%s368 + $0x348] sm:$0xff]
        %v3591 = vld [vmem:[%s368 + $0x350] sm:$0xff]
        %v3592 = vld [vmem:[%s368 + $0x358] sm:$0xff]
        %v3593 = vld [vmem:[%s368 + $0x360] sm:$0xff]
        %v3594 = vld [vmem:[%s368 + $0x368] sm:$0xff]
        %v3595 = vld [vmem:[%s368 + $0x370] sm:$0xff]
        %v3596 = vld [vmem:[%s368 + $0x378] sm:$0xff]
        %v3597 = vld [vmem:[%s368 + $0x380] sm:$0xff]
        %v3598 = vld [vmem:[%s368 + $0x388] sm:$0xff]
        %v3599 = vld [vmem:[%s368 + $0x390] sm:$0xff]
        %v3600 = vld [vmem:[%s368 + $0x398] sm:$0xff]
        %v3601 = vld [vmem:[%s368 + $0x3a0] sm:$0xff]
        %v3602 = vld [vmem:[%s368 + $0x3a8] sm:$0xff]
        %v3603 = vld [vmem:[%s368 + $0x3b0] sm:$0xff]
        %v3604 = vld [vmem:[%s368 + $0x3b8] sm:$0xff]
        %v3605 = vld [vmem:[%s368 + $0x3c0] sm:$0xff]
        %v3606 = vld [vmem:[%s368 + $0x3c8] sm:$0xff]
        %v3607 = vld [vmem:[%s368 + $0x3d0] sm:$0xff]
        %v3608 = vld [vmem:[%s368 + $0x3d8] sm:$0xff]
        %v3609 = vld [vmem:[%s368 + $0x3e0] sm:$0xff]
        %v3610 = vld [vmem:[%s368 + $0x3e8] sm:$0xff]
        %v3611 = vld [vmem:[%s368 + $0x3f0] sm:$0xff]
        %v3612 = vld [vmem:[%s368 + $0x3f8] sm:$0xff]
        %v3613 = vld [vmem:[%s368 + $0x400] sm:$0xff]
        %v3614 = vld [vmem:[%s368 + $0x408] sm:$0xff]
        %v3615 = vld [vmem:[%s368 + $0x410] sm:$0xff]
        %v3616 = vld [vmem:[%s368 + $0x418] sm:$0xff]
        %v3617 = vld [vmem:[%s368 + $0x420] sm:$0xff]
        %v3618 = vld [vmem:[%s368 + $0x428] sm:$0xff]
        %v3619 = vld [vmem:[%s368 + $0x430] sm:$0xff]
        %v3620 = vld [vmem:[%s368 + $0x438] sm:$0xff]
        %v3621 = vld [vmem:[%s368 + $0x440] sm:$0xff]
        %v3622 = vld [vmem:[%s368 + $0x448] sm:$0xff]
        %v3623 = vld [vmem:[%s368 + $0x450] sm:$0xff]
        %v3624 = vld [vmem:[%s368 + $0x458] sm:$0xff]
        %v3625 = vld [vmem:[%s368 + $0x460] sm:$0xff]
        %v3626 = vld [vmem:[%s368 + $0x468] sm:$0xff]
        %v3627 = vld [vmem:[%s368 + $0x470] sm:$0xff]
        %v3628 = vld [vmem:[%s368 + $0x478] sm:$0xff]
        %v3629 = vld [vmem:[%s368 + $0x480] sm:$0xff]
        %v3630 = vld [vmem:[%s368 + $0x488] sm:$0xff]
        %v3631 = vld [vmem:[%s368 + $0x490] sm:$0xff]
        %v3632 = vld [vmem:[%s368 + $0x498] sm:$0xff]
        %v3633 = vld [vmem:[%s368 + $0x4a0] sm:$0xff]
        %v3634 = vld [vmem:[%s368 + $0x4a8] sm:$0xff]
        %v3635 = vld [vmem:[%s368 + $0x4b0] sm:$0xff]
        %v3636 = vld [vmem:[%s368 + $0x4b8] sm:$0xff]
        %v3637 = vld [vmem:[%s368 + $0x4c0] sm:$0xff]
        %v3638 = vld [vmem:[%s368 + $0x4c8] sm:$0xff]
        %v3639 = vld [vmem:[%s368 + $0x4d0] sm:$0xff]
        %v3640 = vld [vmem:[%s368 + $0x4d8] sm:$0xff]
        %v3641 = vld [vmem:[%s368 + $0x4e0] sm:$0xff]
        %v3642 = vld [vmem:[%s368 + $0x4e8] sm:$0xff]
        %v3643 = vld [vmem:[%s368 + $0x4f0] sm:$0xff]
        %v3644 = vld [vmem:[%s368 + $0x4f8] sm:$0xff]
        %v3645 = vld [vmem:[%s368 + $0x500] sm:$0xff]
        %v3646 = vld [vmem:[%s368 + $0x508] sm:$0xff]
        %v3647 = vld [vmem:[%s368 + $0x510] sm:$0xff]
        %v3648 = vld [vmem:[%s368 + $0x518] sm:$0xff]
        %v3649 = vld [vmem:[%s368 + $0x520] sm:$0xff]
        %v3650 = vld [vmem:[%s368 + $0x528] sm:$0xff]
        %v3651 = vld [vmem:[%s368 + $0x530] sm:$0xff]
        %v3652 = vld [vmem:[%s368 + $0x538] sm:$0xff]
        %v3653 = vld [vmem:[%s368 + $0x540] sm:$0xff]
        %v3654 = vld [vmem:[%s368 + $0x548] sm:$0xff]
        %v3655 = vld [vmem:[%s368 + $0x550] sm:$0xff]
        %v3656 = vld [vmem:[%s368 + $0x558] sm:$0xff]
        %v3657 = vld [vmem:[%s368 + $0x560] sm:$0xff]
        %v3658 = vld [vmem:[%s368 + $0x568] sm:$0xff]
        %v3659 = vld [vmem:[%s368 + $0x570] sm:$0xff]
        %v3660 = vld [vmem:[%s368 + $0x578] sm:$0xff]
        %v3661 = vld [vmem:[%s368 + $0x580] sm:$0xff]
        %v3662 = vld [vmem:[%s368 + $0x588] sm:$0xff]
        %v3663 = vld [vmem:[%s368 + $0x590] sm:$0xff]
        %v3664 = vld [vmem:[%s368 + $0x598] sm:$0xff]
        %v3665 = vld [vmem:[%s368 + $0x5a0] sm:$0xff]
        %v3666 = vld [vmem:[%s368 + $0x5a8] sm:$0xff]
        %v3667 = vld [vmem:[%s368 + $0x5b0] sm:$0xff]
        %v3668 = vld [vmem:[%s368 + $0x5b8] sm:$0xff]
        %v3669 = vld [vmem:[%s368 + $0x5c0] sm:$0xff]
        %v3670 = vld [vmem:[%s368 + $0x5c8] sm:$0xff]
        %v3671 = vld [vmem:[%s368 + $0x5d0] sm:$0xff]
        %v3672 = vld [vmem:[%s368 + $0x5d8] sm:$0xff]
        %v3673 = vld [vmem:[%s368 + $0x5e0] sm:$0xff]
        %v3674 = vld [vmem:[%s368 + $0x5e8] sm:$0xff]
        %v3675 = vld [vmem:[%s368 + $0x5f0] sm:$0xff]
        %v3676 = vld [vmem:[%s368 + $0x5f8] sm:$0xff]
        %v3677 = vld [vmem:[%s368 + $0x600] sm:$0xff]
        %v3678 = vld [vmem:[%s368 + $0x608] sm:$0xff]
        %v3679 = vld [vmem:[%s368 + $0x610] sm:$0xff]
        %v3680 = vld [vmem:[%s368 + $0x618] sm:$0xff]
        %v3681 = vld [vmem:[%s368 + $0x620] sm:$0xff]
        %v3682 = vld [vmem:[%s368 + $0x628] sm:$0xff]
        %v3683 = vld [vmem:[%s368 + $0x630] sm:$0xff]
        %v3684 = vld [vmem:[%s368 + $0x638] sm:$0xff]
        %v3685 = vld [vmem:[%s368 + $0x640] sm:$0xff]
        %v3686 = vld [vmem:[%s368 + $0x648] sm:$0xff]
        %v3687 = vld [vmem:[%s368 + $0x650] sm:$0xff]
        %v3688 = vld [vmem:[%s368 + $0x658] sm:$0xff]
        %v3689 = vld [vmem:[%s368 + $0x660] sm:$0xff]
        %v3690 = vld [vmem:[%s368 + $0x668] sm:$0xff]
        %v3691 = vld [vmem:[%s368 + $0x670] sm:$0xff]
        %v3692 = vld [vmem:[%s368 + $0x678] sm:$0xff]
        %v3693 = vld [vmem:[%s368 + $0x680] sm:$0xff]
        %v3694 = vld [vmem:[%s368 + $0x688] sm:$0xff]
        %v3695 = vld [vmem:[%s368 + $0x690] sm:$0xff]
        %v3696 = vld [vmem:[%s368 + $0x698] sm:$0xff]
        %v3697 = vld [vmem:[%s368 + $0x6a0] sm:$0xff]
        %v3698 = vld [vmem:[%s368 + $0x6a8] sm:$0xff]
        %v3699 = vld [vmem:[%s368 + $0x6b0] sm:$0xff]
        %v3700 = vld [vmem:[%s368 + $0x6b8] sm:$0xff]
        %v3701 = vld [vmem:[%s368 + $0x6c0] sm:$0xff]
        %v3702 = vld [vmem:[%s368 + $0x6c8] sm:$0xff]
        %v3703 = vld [vmem:[%s368 + $0x6d0] sm:$0xff]
        %v3704 = vld [vmem:[%s368 + $0x6d8] sm:$0xff]
        %v3705 = vld [vmem:[%s368 + $0x6e0] sm:$0xff]
        %v3706 = vld [vmem:[%s368 + $0x6e8] sm:$0xff]
        %v3707 = vld [vmem:[%s368 + $0x6f0] sm:$0xff]
        %v3708 = vld [vmem:[%s368 + $0x6f8] sm:$0xff]
        %v3709 = vld [vmem:[%s368 + $0x700] sm:$0xff]
        %v3710 = vld [vmem:[%s368 + $0x708] sm:$0xff]
        %v3711 = vld [vmem:[%s368 + $0x710] sm:$0xff]
        %v3712 = vld [vmem:[%s368 + $0x718] sm:$0xff]
        %v3713 = vld [vmem:[%s368 + $0x720] sm:$0xff]
        %v3714 = vld [vmem:[%s368 + $0x728] sm:$0xff]
        %v3715 = vld [vmem:[%s368 + $0x730] sm:$0xff]
        %v3716 = vld [vmem:[%s368 + $0x738] sm:$0xff]
        %v3717 = vld [vmem:[%s368 + $0x740] sm:$0xff]
        %v3718 = vld [vmem:[%s368 + $0x748] sm:$0xff]
        %v3719 = vld [vmem:[%s368 + $0x750] sm:$0xff]
        %v3720 = vld [vmem:[%s368 + $0x758] sm:$0xff]
        %v3721 = vld [vmem:[%s368 + $0x760] sm:$0xff]
        %v3722 = vld [vmem:[%s368 + $0x768] sm:$0xff]
        %v3723 = vld [vmem:[%s368 + $0x770] sm:$0xff]
        %v3724 = vld [vmem:[%s368 + $0x778] sm:$0xff]
        %v3725 = vld [vmem:[%s368 + $0x780] sm:$0xff]
        %v3726 = vld [vmem:[%s368 + $0x788] sm:$0xff]
        %v3727 = vld [vmem:[%s368 + $0x790] sm:$0xff]
        %v3728 = vld [vmem:[%s368 + $0x798] sm:$0xff]
        %v3729 = vld [vmem:[%s368 + $0x7a0] sm:$0xff]
        %v3730 = vld [vmem:[%s368 + $0x7a8] sm:$0xff]
        %v3731 = vld [vmem:[%s368 + $0x7b0] sm:$0xff]
        %v3732 = vld [vmem:[%s368 + $0x7b8] sm:$0xff]
        %v3733 = vld [vmem:[%s368 + $0x7c0] sm:$0xff]
        %v3734 = vld [vmem:[%s368 + $0x7c8] sm:$0xff]
        %v3735 = vld [vmem:[%s368 + $0x7d0] sm:$0xff]
        %v3736 = vld [vmem:[%s368 + $0x7d8] sm:$0xff]
        %v3737 = vld [vmem:[%s368 + $0x7e0] sm:$0xff]
        %v3738 = vld [vmem:[%s368 + $0x7e8] sm:$0xff]
        %v3739 = vld [vmem:[%s368 + $0x7f0] sm:$0xff]
        %v3740 = vld [vmem:[%s368 + $0x7f8] sm:$0xff]
        %v3741 = vld [vmem:[%s368 + $0x800] sm:$0xff]
        %v3742 = vld [vmem:[%s368 + $0x808] sm:$0xff]
        %v3743 = vld [vmem:[%s368 + $0x810] sm:$0xff]
        %v3744 = vld [vmem:[%s368 + $0x818] sm:$0xff]
        %v3745 = vld [vmem:[%s368 + $0x820] sm:$0xff]
        %v3746 = vld [vmem:[%s368 + $0x828] sm:$0xff]
        %v3747 = vld [vmem:[%s368 + $0x830] sm:$0xff]
        %v3748 = vld [vmem:[%s368 + $0x838] sm:$0xff]
        %v3749 = vld [vmem:[%s368 + $0x840] sm:$0xff]
        %v3750 = vld [vmem:[%s368 + $0x848] sm:$0xff]
        %v3751 = vld [vmem:[%s368 + $0x850] sm:$0xff]
        %v3752 = vld [vmem:[%s368 + $0x858] sm:$0xff]
        %v3753 = vld [vmem:[%s368 + $0x860] sm:$0xff]
        %v3754 = vld [vmem:[%s368 + $0x868] sm:$0xff]
        %v3755 = vld [vmem:[%s368 + $0x870] sm:$0xff]
        %v3756 = vld [vmem:[%s368 + $0x878] sm:$0xff]
        %v3757 = vld [vmem:[%s368 + $0x880] sm:$0xff]
        %v3758 = vld [vmem:[%s368 + $0x888] sm:$0xff]
        %v3759 = vld [vmem:[%s368 + $0x890] sm:$0xff]
        %v3760 = vld [vmem:[%s368 + $0x898] sm:$0xff]
        %v3761 = vld [vmem:[%s368 + $0x8a0] sm:$0xff]
        %v3762 = vld [vmem:[%s368 + $0x8a8] sm:$0xff]
        %v3763 = vld [vmem:[%s368 + $0x8b0] sm:$0xff]
        %v3764 = vld [vmem:[%s368 + $0x8b8] sm:$0xff]
        %v3765 = vld [vmem:[%s368 + $0x8c0] sm:$0xff]
        %v3766 = vld [vmem:[%s368 + $0x8c8] sm:$0xff]
        %v3767 = vld [vmem:[%s368 + $0x8d0] sm:$0xff]
        %v3768 = vld [vmem:[%s368 + $0x8d8] sm:$0xff]
        %v3769 = vld [vmem:[%s368 + $0x8e0] sm:$0xff]
        %v3770 = vld [vmem:[%s368 + $0x8e8] sm:$0xff]
        %v3771 = vld [vmem:[%s368 + $0x8f0] sm:$0xff]
        %v3772 = vld [vmem:[%s368 + $0x8f8] sm:$0xff]
        %v3773 = vld [vmem:[%s368 + $0x900] sm:$0xff]
        %v3774 = vld [vmem:[%s368 + $0x908] sm:$0xff]
        %v3775 = vld [vmem:[%s368 + $0x910] sm:$0xff]
        %v3776 = vld [vmem:[%s368 + $0x918] sm:$0xff]
        %v3777 = vld [vmem:[%s368 + $0x920] sm:$0xff]
        %v3778 = vld [vmem:[%s368 + $0x928] sm:$0xff]
        %v3779 = vld [vmem:[%s368 + $0x930] sm:$0xff]
        %v3780 = vld [vmem:[%s368 + $0x938] sm:$0xff]
        %v3781 = vld [vmem:[%s368 + $0x940] sm:$0xff]
        %v3782 = vld [vmem:[%s368 + $0x948] sm:$0xff]
        %v3783 = vld [vmem:[%s368 + $0x950] sm:$0xff]
        %v3784 = vld [vmem:[%s368 + $0x958] sm:$0xff]
        %v3785 = vld [vmem:[%s368 + $0x960] sm:$0xff]
        %v3786 = vld [vmem:[%s368 + $0x968] sm:$0xff]
        %v3787 = vld [vmem:[%s368 + $0x970] sm:$0xff]
        %v3788 = vld [vmem:[%s368 + $0x978] sm:$0xff]
        %v3789 = vld [vmem:[%s368 + $0x980] sm:$0xff]
        %v3790 = vld [vmem:[%s368 + $0x988] sm:$0xff]
        %v3791 = vld [vmem:[%s368 + $0x990] sm:$0xff]
        %v3792 = vld [vmem:[%s368 + $0x998] sm:$0xff]
        %v3793 = vld [vmem:[%s368 + $0x9a0] sm:$0xff]
        %v3794 = vld [vmem:[%s368 + $0x9a8] sm:$0xff]
        %v3795 = vld [vmem:[%s368 + $0x9b0] sm:$0xff]
        %v3796 = vld [vmem:[%s368 + $0x9b8] sm:$0xff]
        %v3797 = vld [vmem:[%s368 + $0x9c0] sm:$0xff]
        %v3798 = vld [vmem:[%s368 + $0x9c8] sm:$0xff]
        %v3799 = vld [vmem:[%s368 + $0x9d0] sm:$0xff]
        %v3800 = vld [vmem:[%s368 + $0x9d8] sm:$0xff]
        %v3801 = vld [vmem:[%s368 + $0x9e0] sm:$0xff]
        %v3802 = vld [vmem:[%s368 + $0x9e8] sm:$0xff]
        %v3803 = vld [vmem:[%s368 + $0x9f0] sm:$0xff]
        %v3804 = vld [vmem:[%s368 + $0x9f8] sm:$0xff]
        %v3805 = vld [vmem:[%s368 + $0xa00] sm:$0xff]
        %v3806 = vld [vmem:[%s368 + $0xa08] sm:$0xff]
        %v3807 = vld [vmem:[%s368 + $0xa10] sm:$0xff]
        %v3808 = vld [vmem:[%s368 + $0xa18] sm:$0xff]
        %v3809 = vld [vmem:[%s368 + $0xa20] sm:$0xff]
        %v3810 = vld [vmem:[%s368 + $0xa28] sm:$0xff]
        %v3811 = vld [vmem:[%s368 + $0xa30] sm:$0xff]
        %v3812 = vld [vmem:[%s368 + $0xa38] sm:$0xff]
        %v3813 = vld [vmem:[%s368 + $0xa40] sm:$0xff]
        %v3814 = vld [vmem:[%s368 + $0xa48] sm:$0xff]
        %v3815 = vld [vmem:[%s368 + $0xa50] sm:$0xff]
        %v3816 = vld [vmem:[%s368 + $0xa58] sm:$0xff]
        %v3817 = vld [vmem:[%s368 + $0xa60] sm:$0xff]
        %v3818 = vld [vmem:[%s368 + $0xa68] sm:$0xff]
        %v3819 = vld [vmem:[%s368 + $0xa70] sm:$0xff]
        %v3820 = vld [vmem:[%s368 + $0xa78] sm:$0xff]
        %v3821 = vld [vmem:[%s368 + $0xa80] sm:$0xff]
        %v3822 = vld [vmem:[%s368 + $0xa88] sm:$0xff]
        %v3823 = vld [vmem:[%s368 + $0xa90] sm:$0xff]
        %v3824 = vld [vmem:[%s368 + $0xa98] sm:$0xff]
        %v3825 = vld [vmem:[%s368 + $0xaa0] sm:$0xff]
        %v3826 = vld [vmem:[%s368 + $0xaa8] sm:$0xff]
        %v3827 = vld [vmem:[%s368 + $0xab0] sm:$0xff]
        %v3828 = vld [vmem:[%s368 + $0xab8] sm:$0xff]
        %v3829 = vld [vmem:[%s368 + $0xac0] sm:$0xff]
        %v3830 = vld [vmem:[%s368 + $0xac8] sm:$0xff]
        %v3831 = vld [vmem:[%s368 + $0xad0] sm:$0xff]
        %v3832 = vld [vmem:[%s368 + $0xad8] sm:$0xff]
        %v3833 = vld [vmem:[%s368 + $0xae0] sm:$0xff]
        %v3834 = vld [vmem:[%s368 + $0xae8] sm:$0xff]
        %v3835 = vld [vmem:[%s368 + $0xaf0] sm:$0xff]
        %v3836 = vld [vmem:[%s368 + $0xaf8] sm:$0xff]
        %v3837 = vld [vmem:[%s368 + $0xb00] sm:$0xff]
        %v3838 = vld [vmem:[%s368 + $0xb08] sm:$0xff]
        %v3839 = vld [vmem:[%s368 + $0xb10] sm:$0xff]
        %v3840 = vld [vmem:[%s368 + $0xb18] sm:$0xff]
        %v3841 = vld [vmem:[%s368 + $0xb20] sm:$0xff]
        %v3842 = vld [vmem:[%s368 + $0xb28] sm:$0xff]
        %v3843 = vld [vmem:[%s368 + $0xb30] sm:$0xff]
        %v3844 = vld [vmem:[%s368 + $0xb38] sm:$0xff]
        %v3845 = vld [vmem:[%s368 + $0xb40] sm:$0xff]
        %v3846 = vld [vmem:[%s368 + $0xb48] sm:$0xff]
        %v3847 = vld [vmem:[%s368 + $0xb50] sm:$0xff]
        %v3848 = vld [vmem:[%s368 + $0xb58] sm:$0xff]
        %v3849 = vld [vmem:[%s368 + $0xb60] sm:$0xff]
        %v3850 = vld [vmem:[%s368 + $0xb68] sm:$0xff]
        %v3851 = vld [vmem:[%s368 + $0xb70] sm:$0xff]
        %v3852 = vld [vmem:[%s368 + $0xb78] sm:$0xff]
        %v3853 = vld [vmem:[%s368 + $0xb80] sm:$0xff]
        %v3854 = vld [vmem:[%s368 + $0xb88] sm:$0xff]
        %v3855 = vld [vmem:[%s368 + $0xb90] sm:$0xff]
        %v3856 = vld [vmem:[%s368 + $0xb98] sm:$0xff]
        %v3857 = vld [vmem:[%s368 + $0xba0] sm:$0xff]
        %v3858 = vld [vmem:[%s368 + $0xba8] sm:$0xff]
        %v3859 = vld [vmem:[%s368 + $0xbb0] sm:$0xff]
        %v3860 = vld [vmem:[%s368 + $0xbb8] sm:$0xff]
        %v3861 = vld [vmem:[%s368 + $0xbc0] sm:$0xff]
        %v3862 = vld [vmem:[%s368 + $0xbc8] sm:$0xff]
        %v3863 = vld [vmem:[%s368 + $0xbd0] sm:$0xff]
        %v3864 = vld [vmem:[%s368 + $0xbd8] sm:$0xff]
        %v3865 = vld [vmem:[%s368 + $0xbe0] sm:$0xff]
        %v3866 = vld [vmem:[%s368 + $0xbe8] sm:$0xff]
        %v3867 = vld [vmem:[%s368 + $0xbf0] sm:$0xff]
        %v3868 = vld [vmem:[%s368 + $0xbf8] sm:$0xff]
        %v3869 = vld [vmem:[%s368 + $0xc00] sm:$0xff]
        %v3870 = vld [vmem:[%s368 + $0xc08] sm:$0xff]
        %v3871 = vld [vmem:[%s368 + $0xc10] sm:$0xff]
        %v3872 = vld [vmem:[%s368 + $0xc18] sm:$0xff]
        %v3873 = vld [vmem:[%s368 + $0xc20] sm:$0xff]
        %v3874 = vld [vmem:[%s368 + $0xc28] sm:$0xff]
        %v3875 = vld [vmem:[%s368 + $0xc30] sm:$0xff]
        %v3876 = vld [vmem:[%s368 + $0xc38] sm:$0xff]
        %v3877 = vld [vmem:[%s368 + $0xc40] sm:$0xff]
        %v3878 = vld [vmem:[%s368 + $0xc48] sm:$0xff]
        %v3879 = vld [vmem:[%s368 + $0xc50] sm:$0xff]
        %v3880 = vld [vmem:[%s368 + $0xc58] sm:$0xff]
        %v3881 = vld [vmem:[%s368 + $0xc60] sm:$0xff]
        %v3882 = vld [vmem:[%s368 + $0xc68] sm:$0xff]
        %v3883 = vld [vmem:[%s368 + $0xc70] sm:$0xff]
        %v3884 = vld [vmem:[%s368 + $0xc78] sm:$0xff]
        %v3885 = vld [vmem:[%s368 + $0xc80] sm:$0xff]
        %v3886 = vld [vmem:[%s368 + $0xc88] sm:$0xff]
        %v3887 = vld [vmem:[%s368 + $0xc90] sm:$0xff]
        %v3888 = vld [vmem:[%s368 + $0xc98] sm:$0xff]
        %v3889 = vld [vmem:[%s368 + $0xca0] sm:$0xff]
        %v3890 = vld [vmem:[%s368 + $0xca8] sm:$0xff]
        %v3891 = vld [vmem:[%s368 + $0xcb0] sm:$0xff]
        %v3892 = vld [vmem:[%s368 + $0xcb8] sm:$0xff]
        %v3893 = vld [vmem:[%s368 + $0xcc0] sm:$0xff]
        %v3894 = vld [vmem:[%s368 + $0xcc8] sm:$0xff]
        %v3895 = vld [vmem:[%s368 + $0xcd0] sm:$0xff]
        %v3896 = vld [vmem:[%s368 + $0xcd8] sm:$0xff]
        %v3897 = vld [vmem:[%s368 + $0xce0] sm:$0xff]
        %v3898 = vld [vmem:[%s368 + $0xce8] sm:$0xff]
        %v3899 = vld [vmem:[%s368 + $0xcf0] sm:$0xff]
        %v3900 = vld [vmem:[%s368 + $0xcf8] sm:$0xff]
        %v3901 = vld [vmem:[%s368 + $0xd00] sm:$0xff]
        %v3902 = vld [vmem:[%s368 + $0xd08] sm:$0xff]
        %v3903 = vld [vmem:[%s368 + $0xd10] sm:$0xff]
        %v3904 = vld [vmem:[%s368 + $0xd18] sm:$0xff]
        %v3905 = vld [vmem:[%s368 + $0xd20] sm:$0xff]
        %v3906 = vld [vmem:[%s368 + $0xd28] sm:$0xff]
        %v3907 = vld [vmem:[%s368 + $0xd30] sm:$0xff]
        %v3908 = vld [vmem:[%s368 + $0xd38] sm:$0xff]
        %v3909 = vld [vmem:[%s368 + $0xd40] sm:$0xff]
        %v3910 = vld [vmem:[%s368 + $0xd48] sm:$0xff]
        %v3911 = vld [vmem:[%s368 + $0xd50] sm:$0xff]
        %v3912 = vld [vmem:[%s368 + $0xd58] sm:$0xff]
        %v3913 = vld [vmem:[%s368 + $0xd60] sm:$0xff]
        %v3914 = vld [vmem:[%s368 + $0xd68] sm:$0xff]
        %v3915 = vld [vmem:[%s368 + $0xd70] sm:$0xff]
        %v3916 = vld [vmem:[%s368 + $0xd78] sm:$0xff]
        %v3917 = vld [vmem:[%s368 + $0xd80] sm:$0xff]
        %v3918 = vld [vmem:[%s368 + $0xd88] sm:$0xff]
        %v3919 = vld [vmem:[%s368 + $0xd90] sm:$0xff]
        %v3920 = vld [vmem:[%s368 + $0xd98] sm:$0xff]
        %v3921 = vld [vmem:[%s368 + $0xda0] sm:$0xff]
        %v3922 = vld [vmem:[%s368 + $0xda8] sm:$0xff]
        %v3923 = vld [vmem:[%s368 + $0xdb0] sm:$0xff]
        %v3924 = vld [vmem:[%s368 + $0xdb8] sm:$0xff]
        %v3925 = vld [vmem:[%s368 + $0xdc0] sm:$0xff]
        %v3926 = vld [vmem:[%s368 + $0xdc8] sm:$0xff]
        %v3927 = vld [vmem:[%s368 + $0xdd0] sm:$0xff]
        %v3928 = vld [vmem:[%s368 + $0xdd8] sm:$0xff]
        %v3929 = vld [vmem:[%s368 + $0xde0] sm:$0xff]
        %v3930 = vld [vmem:[%s368 + $0xde8] sm:$0xff]
        %v3931 = vld [vmem:[%s368 + $0xdf0] sm:$0xff]
        %v3932 = vld [vmem:[%s368 + $0xdf8] sm:$0xff]
        %v3933 = vld [vmem:[%s368 + $0xe00] sm:$0xff]
        %v3934 = vld [vmem:[%s368 + $0xe08] sm:$0xff]
        %v3935 = vld [vmem:[%s368 + $0xe10] sm:$0xff]
        %v3936 = vld [vmem:[%s368 + $0xe18] sm:$0xff]
        %v3937 = vld [vmem:[%s368 + $0xe20] sm:$0xff]
        %v3938 = vld [vmem:[%s368 + $0xe28] sm:$0xff]
        %v3939 = vld [vmem:[%s368 + $0xe30] sm:$0xff]
        %v3940 = vld [vmem:[%s368 + $0xe38] sm:$0xff]
        %v3941 = vld [vmem:[%s368 + $0xe40] sm:$0xff]
        %v3942 = vld [vmem:[%s368 + $0xe48] sm:$0xff]
        %v3943 = vld [vmem:[%s368 + $0xe50] sm:$0xff]
        %v3944 = vld [vmem:[%s368 + $0xe58] sm:$0xff]
        %v3945 = vld [vmem:[%s368 + $0xe60] sm:$0xff]
        %v3946 = vld [vmem:[%s368 + $0xe68] sm:$0xff]
        %v3947 = vld [vmem:[%s368 + $0xe70] sm:$0xff]
        %v3948 = vld [vmem:[%s368 + $0xe78] sm:$0xff]
        %v3949 = vld [vmem:[%s368 + $0xe80] sm:$0xff]
        %v3950 = vld [vmem:[%s368 + $0xe88] sm:$0xff]
        %v3951 = vld [vmem:[%s368 + $0xe90] sm:$0xff]
        %v3952 = vld [vmem:[%s368 + $0xe98] sm:$0xff]
        %v3953 = vld [vmem:[%s368 + $0xea0] sm:$0xff]
        %v3954 = vld [vmem:[%s368 + $0xea8] sm:$0xff]
        %v3955 = vld [vmem:[%s368 + $0xeb0] sm:$0xff]
        %v3956 = vld [vmem:[%s368 + $0xeb8] sm:$0xff]
        %v3957 = vld [vmem:[%s368 + $0xec0] sm:$0xff]
        %v3958 = vld [vmem:[%s368 + $0xec8] sm:$0xff]
        %v3959 = vld [vmem:[%s368 + $0xed0] sm:$0xff]
        %v3960 = vld [vmem:[%s368 + $0xed8] sm:$0xff]
        %v3961 = vld [vmem:[%s368 + $0xee0] sm:$0xff]
        %v3962 = vld [vmem:[%s368 + $0xee8] sm:$0xff]
        %v3963 = vld [vmem:[%s368 + $0xef0] sm:$0xff]
        %v3964 = vld [vmem:[%s368 + $0xef8] sm:$0xff]
        %v3965 = vld [vmem:[%s368 + $0xf00] sm:$0xff]
        %v3966 = vld [vmem:[%s368 + $0xf08] sm:$0xff]
        %v3967 = vld [vmem:[%s368 + $0xf10] sm:$0xff]
        %v3968 = vld [vmem:[%s368 + $0xf18] sm:$0xff]
        %v3969 = vld [vmem:[%s368 + $0xf20] sm:$0xff]
        %v3970 = vld [vmem:[%s368 + $0xf28] sm:$0xff]
        %v3971 = vld [vmem:[%s368 + $0xf30] sm:$0xff]
        %v3972 = vld [vmem:[%s368 + $0xf38] sm:$0xff]
        %v3973 = vld [vmem:[%s368 + $0xf40] sm:$0xff]
        %v3974 = vld [vmem:[%s368 + $0xf48] sm:$0xff]
        %v3975 = vld [vmem:[%s368 + $0xf50] sm:$0xff]
        %v3976 = vld [vmem:[%s368 + $0xf58] sm:$0xff]
        %v3977 = vld [vmem:[%s368 + $0xf60] sm:$0xff]
        %v3978 = vld [vmem:[%s368 + $0xf68] sm:$0xff]
        %v3979 = vld [vmem:[%s368 + $0xf70] sm:$0xff]
        %v3980 = vld [vmem:[%s368 + $0xf78] sm:$0xff]
        %v3981 = vld [vmem:[%s368 + $0xf80] sm:$0xff]
        %v3982 = vld [vmem:[%s368 + $0xf88] sm:$0xff]
        %v3983 = vld [vmem:[%s368 + $0xf90] sm:$0xff]
        %v3984 = vld [vmem:[%s368 + $0xf98] sm:$0xff]
        %v3985 = vld [vmem:[%s368 + $0xfa0] sm:$0xff]
        %v3986 = vld [vmem:[%s368 + $0xfa8] sm:$0xff]
        %v3987 = vld [vmem:[%s368 + $0xfb0] sm:$0xff]
        %v3988 = vld [vmem:[%s368 + $0xfb8] sm:$0xff]
        %v3989 = vld [vmem:[%s368 + $0xfc0] sm:$0xff]
        %v3990 = vld [vmem:[%s368 + $0xfc8] sm:$0xff]
        %v3991 = vld [vmem:[%s368 + $0xfd0] sm:$0xff]
        %v3992 = vld [vmem:[%s368 + $0xfd8] sm:$0xff]
        %v3993 = vld [vmem:[%s368 + $0xfe0] sm:$0xff]
        %v3994 = vld [vmem:[%s368 + $0xfe8] sm:$0xff]
        %v3995 = vld [vmem:[%s368 + $0xff0] sm:$0xff]
        %v3996 = vld [vmem:[%s368 + $0xff8] sm:$0xff]
        %v3997 = vlaneseq
        %v3998 = vshrl.u32 %v3997, 7
        %v3999 = vsub.s32 1, %v3998
        %v4000 = vrot.slane %v440, %v3999
        %v4001 = vlaneseq
        %v4002 = vshrl.u32 %v4001, 7
        %v4003 = vsub.s32 1, %v4002
        %v4004 = vrot.slane %v441, %v4003
        %v4005 = vlaneseq
        %v4006 = vshrl.u32 %v4005, 7
        %v4007 = vsub.s32 1, %v4006
        %v4008 = vrot.slane %v442, %v4007
        %v4009 = vlaneseq
        %v4010 = vshrl.u32 %v4009, 7
        %v4011 = vsub.s32 1, %v4010
        %v4012 = vrot.slane %v443, %v4011
        %v4525 = vunpack.c.l.b16 %v3485
        %v4526 = vunpack.c.h.b16 %v3485
        %v4527 = vunpack.c.l.b16 %v3486
        %v4528 = vunpack.c.h.b16 %v3486
        %v4529 = vunpack.c.l.b16 %v3487
        %v4530 = vunpack.c.h.b16 %v3487
        %v4531 = vunpack.c.l.b16 %v3488
        %v4532 = vunpack.c.h.b16 %v3488
        %v4533 = vunpack.c.l.b16 %v3489
        %v4534 = vunpack.c.h.b16 %v3489
        %v4535 = vunpack.c.l.b16 %v3490
        %v4536 = vunpack.c.h.b16 %v3490
        %v4537 = vunpack.c.l.b16 %v3491
        %v4538 = vunpack.c.h.b16 %v3491
        %v4539 = vunpack.c.l.b16 %v3492
        %v4540 = vunpack.c.h.b16 %v3492
        %v4541 = vunpack.c.l.b16 %v3493
        %v4542 = vunpack.c.h.b16 %v3493
        %v4543 = vunpack.c.l.b16 %v3494
        %v4544 = vunpack.c.h.b16 %v3494
        %v4545 = vunpack.c.l.b16 %v3495
        %v4546 = vunpack.c.h.b16 %v3495
        %v4547 = vunpack.c.l.b16 %v3496
        %v4548 = vunpack.c.h.b16 %v3496
        %v4549 = vunpack.c.l.b16 %v3497
        %v4550 = vunpack.c.h.b16 %v3497
        %v4551 = vunpack.c.l.b16 %v3498
        %v4552 = vunpack.c.h.b16 %v3498
        %v4553 = vunpack.c.l.b16 %v3499
        %v4554 = vunpack.c.h.b16 %v3499
        %v4555 = vunpack.c.l.b16 %v3500
        %v4556 = vunpack.c.h.b16 %v3500
        %v4557 = vunpack.c.l.b16 %v3501
        %v4558 = vunpack.c.h.b16 %v3501
        %v4559 = vunpack.c.l.b16 %v3502
        %v4560 = vunpack.c.h.b16 %v3502
        %v4561 = vunpack.c.l.b16 %v3503
        %v4562 = vunpack.c.h.b16 %v3503
        %v4563 = vunpack.c.l.b16 %v3504
        %v4564 = vunpack.c.h.b16 %v3504
        %v4565 = vunpack.c.l.b16 %v3505
        %v4566 = vunpack.c.h.b16 %v3505
        %v4567 = vunpack.c.l.b16 %v3506
        %v4568 = vunpack.c.h.b16 %v3506
        %v4569 = vunpack.c.l.b16 %v3507
        %v4570 = vunpack.c.h.b16 %v3507
        %v4571 = vunpack.c.l.b16 %v3508
        %v4572 = vunpack.c.h.b16 %v3508
        %v4573 = vunpack.c.l.b16 %v3509
        %v4574 = vunpack.c.h.b16 %v3509
        %v4575 = vunpack.c.l.b16 %v3510
        %v4576 = vunpack.c.h.b16 %v3510
        %v4577 = vunpack.c.l.b16 %v3511
        %v4578 = vunpack.c.h.b16 %v3511
        %v4579 = vunpack.c.l.b16 %v3512
        %v4580 = vunpack.c.h.b16 %v3512
        %v4581 = vunpack.c.l.b16 %v3513
        %v4582 = vunpack.c.h.b16 %v3513
        %v4583 = vunpack.c.l.b16 %v3514
        %v4584 = vunpack.c.h.b16 %v3514
        %v4585 = vunpack.c.l.b16 %v3515
        %v4586 = vunpack.c.h.b16 %v3515
        %v4587 = vunpack.c.l.b16 %v3516
        %v4588 = vunpack.c.h.b16 %v3516
        %v4589 = vunpack.c.l.b16 %v3517
        %v4590 = vunpack.c.h.b16 %v3517
        %v4591 = vunpack.c.l.b16 %v3518
        %v4592 = vunpack.c.h.b16 %v3518
        %v4593 = vunpack.c.l.b16 %v3519
        %v4594 = vunpack.c.h.b16 %v3519
        %v4595 = vunpack.c.l.b16 %v3520
        %v4596 = vunpack.c.h.b16 %v3520
        %v4597 = vunpack.c.l.b16 %v3521
        %v4598 = vunpack.c.h.b16 %v3521
        %v4599 = vunpack.c.l.b16 %v3522
        %v4600 = vunpack.c.h.b16 %v3522
        %v4601 = vunpack.c.l.b16 %v3523
        %v4602 = vunpack.c.h.b16 %v3523
        %v4603 = vunpack.c.l.b16 %v3524
        %v4604 = vunpack.c.h.b16 %v3524
        %v4605 = vunpack.c.l.b16 %v3525
        %v4606 = vunpack.c.h.b16 %v3525
        %v4607 = vunpack.c.l.b16 %v3526
        %v4608 = vunpack.c.h.b16 %v3526
        %v4609 = vunpack.c.l.b16 %v3527
        %v4610 = vunpack.c.h.b16 %v3527
        %v4611 = vunpack.c.l.b16 %v3528
        %v4612 = vunpack.c.h.b16 %v3528
        %v4613 = vunpack.c.l.b16 %v3529
        %v4614 = vunpack.c.h.b16 %v3529
        %v4615 = vunpack.c.l.b16 %v3530
        %v4616 = vunpack.c.h.b16 %v3530
        %v4617 = vunpack.c.l.b16 %v3531
        %v4618 = vunpack.c.h.b16 %v3531
        %v4619 = vunpack.c.l.b16 %v3532
        %v4620 = vunpack.c.h.b16 %v3532
        %v4621 = vunpack.c.l.b16 %v3533
        %v4622 = vunpack.c.h.b16 %v3533
        %v4623 = vunpack.c.l.b16 %v3534
        %v4624 = vunpack.c.h.b16 %v3534
        %v4625 = vunpack.c.l.b16 %v3535
        %v4626 = vunpack.c.h.b16 %v3535
        %v4627 = vunpack.c.l.b16 %v3536
        %v4628 = vunpack.c.h.b16 %v3536
        %v4629 = vunpack.c.l.b16 %v3537
        %v4630 = vunpack.c.h.b16 %v3537
        %v4631 = vunpack.c.l.b16 %v3538
        %v4632 = vunpack.c.h.b16 %v3538
        %v4633 = vunpack.c.l.b16 %v3539
        %v4634 = vunpack.c.h.b16 %v3539
        %v4635 = vunpack.c.l.b16 %v3540
        %v4636 = vunpack.c.h.b16 %v3540
        %v4637 = vunpack.c.l.b16 %v3541
        %v4638 = vunpack.c.h.b16 %v3541
        %v4639 = vunpack.c.l.b16 %v3542
        %v4640 = vunpack.c.h.b16 %v3542
        %v4641 = vunpack.c.l.b16 %v3543
        %v4642 = vunpack.c.h.b16 %v3543
        %v4643 = vunpack.c.l.b16 %v3544
        %v4644 = vunpack.c.h.b16 %v3544
        %v4645 = vunpack.c.l.b16 %v3545
        %v4646 = vunpack.c.h.b16 %v3545
        %v4647 = vunpack.c.l.b16 %v3546
        %v4648 = vunpack.c.h.b16 %v3546
        %v4649 = vunpack.c.l.b16 %v3547
        %v4650 = vunpack.c.h.b16 %v3547
        %v4651 = vunpack.c.l.b16 %v3548
        %v4652 = vunpack.c.h.b16 %v3548
        %v4653 = vunpack.c.l.b16 %v3549
        %v4654 = vunpack.c.h.b16 %v3549
        %v4655 = vunpack.c.l.b16 %v3550
        %v4656 = vunpack.c.h.b16 %v3550
        %v4657 = vunpack.c.l.b16 %v3551
        %v4658 = vunpack.c.h.b16 %v3551
        %v4659 = vunpack.c.l.b16 %v3552
        %v4660 = vunpack.c.h.b16 %v3552
        %v4661 = vunpack.c.l.b16 %v3553
        %v4662 = vunpack.c.h.b16 %v3553
        %v4663 = vunpack.c.l.b16 %v3554
        %v4664 = vunpack.c.h.b16 %v3554
        %v4665 = vunpack.c.l.b16 %v3555
        %v4666 = vunpack.c.h.b16 %v3555
        %v4667 = vunpack.c.l.b16 %v3556
        %v4668 = vunpack.c.h.b16 %v3556
        %v4669 = vunpack.c.l.b16 %v3557
        %v4670 = vunpack.c.h.b16 %v3557
        %v4671 = vunpack.c.l.b16 %v3558
        %v4672 = vunpack.c.h.b16 %v3558
        %v4673 = vunpack.c.l.b16 %v3559
        %v4674 = vunpack.c.h.b16 %v3559
        %v4675 = vunpack.c.l.b16 %v3560
        %v4676 = vunpack.c.h.b16 %v3560
        %v4677 = vunpack.c.l.b16 %v3561
        %v4678 = vunpack.c.h.b16 %v3561
        %v4679 = vunpack.c.l.b16 %v3562
        %v4680 = vunpack.c.h.b16 %v3562
        %v4681 = vunpack.c.l.b16 %v3563
        %v4682 = vunpack.c.h.b16 %v3563
        %v4683 = vunpack.c.l.b16 %v3564
        %v4684 = vunpack.c.h.b16 %v3564
        %v4685 = vunpack.c.l.b16 %v3565
        %v4686 = vunpack.c.h.b16 %v3565
        %v4687 = vunpack.c.l.b16 %v3566
        %v4688 = vunpack.c.h.b16 %v3566
        %v4689 = vunpack.c.l.b16 %v3567
        %v4690 = vunpack.c.h.b16 %v3567
        %v4691 = vunpack.c.l.b16 %v3568
        %v4692 = vunpack.c.h.b16 %v3568
        %v4693 = vunpack.c.l.b16 %v3569
        %v4694 = vunpack.c.h.b16 %v3569
        %v4695 = vunpack.c.l.b16 %v3570
        %v4696 = vunpack.c.h.b16 %v3570
        %v4697 = vunpack.c.l.b16 %v3571
        %v4698 = vunpack.c.h.b16 %v3571
        %v4699 = vunpack.c.l.b16 %v3572
        %v4700 = vunpack.c.h.b16 %v3572
        %v4701 = vunpack.c.l.b16 %v3573
        %v4702 = vunpack.c.h.b16 %v3573
        %v4703 = vunpack.c.l.b16 %v3574
        %v4704 = vunpack.c.h.b16 %v3574
        %v4705 = vunpack.c.l.b16 %v3575
        %v4706 = vunpack.c.h.b16 %v3575
        %v4707 = vunpack.c.l.b16 %v3576
        %v4708 = vunpack.c.h.b16 %v3576
        %v4709 = vunpack.c.l.b16 %v3577
        %v4710 = vunpack.c.h.b16 %v3577
        %v4711 = vunpack.c.l.b16 %v3578
        %v4712 = vunpack.c.h.b16 %v3578
        %v4713 = vunpack.c.l.b16 %v3579
        %v4714 = vunpack.c.h.b16 %v3579
        %v4715 = vunpack.c.l.b16 %v3580
        %v4716 = vunpack.c.h.b16 %v3580
        %v4717 = vunpack.c.l.b16 %v3581
        %v4718 = vunpack.c.h.b16 %v3581
        %v4719 = vunpack.c.l.b16 %v3582
        %v4720 = vunpack.c.h.b16 %v3582
        %v4721 = vunpack.c.l.b16 %v3583
        %v4722 = vunpack.c.h.b16 %v3583
        %v4723 = vunpack.c.l.b16 %v3584
        %v4724 = vunpack.c.h.b16 %v3584
        %v4725 = vunpack.c.l.b16 %v3585
        %v4726 = vunpack.c.h.b16 %v3585
        %v4727 = vunpack.c.l.b16 %v3586
        %v4728 = vunpack.c.h.b16 %v3586
        %v4729 = vunpack.c.l.b16 %v3587
        %v4730 = vunpack.c.h.b16 %v3587
        %v4731 = vunpack.c.l.b16 %v3588
        %v4732 = vunpack.c.h.b16 %v3588
        %v4733 = vunpack.c.l.b16 %v3589
        %v4734 = vunpack.c.h.b16 %v3589
        %v4735 = vunpack.c.l.b16 %v3590
        %v4736 = vunpack.c.h.b16 %v3590
        %v4737 = vunpack.c.l.b16 %v3591
        %v4738 = vunpack.c.h.b16 %v3591
        %v4739 = vunpack.c.l.b16 %v3592
        %v4740 = vunpack.c.h.b16 %v3592
        %v4741 = vunpack.c.l.b16 %v3593
        %v4742 = vunpack.c.h.b16 %v3593
        %v4743 = vunpack.c.l.b16 %v3594
        %v4744 = vunpack.c.h.b16 %v3594
        %v4745 = vunpack.c.l.b16 %v3595
        %v4746 = vunpack.c.h.b16 %v3595
        %v4747 = vunpack.c.l.b16 %v3596
        %v4748 = vunpack.c.h.b16 %v3596
        %v4749 = vunpack.c.l.b16 %v3597
        %v4750 = vunpack.c.h.b16 %v3597
        %v4751 = vunpack.c.l.b16 %v3598
        %v4752 = vunpack.c.h.b16 %v3598
        %v4753 = vunpack.c.l.b16 %v3599
        %v4754 = vunpack.c.h.b16 %v3599
        %v4755 = vunpack.c.l.b16 %v3600
        %v4756 = vunpack.c.h.b16 %v3600
        %v4757 = vunpack.c.l.b16 %v3601
        %v4758 = vunpack.c.h.b16 %v3601
        %v4759 = vunpack.c.l.b16 %v3602
        %v4760 = vunpack.c.h.b16 %v3602
        %v4761 = vunpack.c.l.b16 %v3603
        %v4762 = vunpack.c.h.b16 %v3603
        %v4763 = vunpack.c.l.b16 %v3604
        %v4764 = vunpack.c.h.b16 %v3604
        %v4765 = vunpack.c.l.b16 %v3605
        %v4766 = vunpack.c.h.b16 %v3605
        %v4767 = vunpack.c.l.b16 %v3606
        %v4768 = vunpack.c.h.b16 %v3606
        %v4769 = vunpack.c.l.b16 %v3607
        %v4770 = vunpack.c.h.b16 %v3607
        %v4771 = vunpack.c.l.b16 %v3608
        %v4772 = vunpack.c.h.b16 %v3608
        %v4773 = vunpack.c.l.b16 %v3609
        %v4774 = vunpack.c.h.b16 %v3609
        %v4775 = vunpack.c.l.b16 %v3610
        %v4776 = vunpack.c.h.b16 %v3610
        %v4777 = vunpack.c.l.b16 %v3611
        %v4778 = vunpack.c.h.b16 %v3611
        %v4779 = vunpack.c.l.b16 %v3612
        %v4780 = vunpack.c.h.b16 %v3612
        %v4781 = vunpack.c.l.b16 %v3613
        %v4782 = vunpack.c.h.b16 %v3613
        %v4783 = vunpack.c.l.b16 %v3614
        %v4784 = vunpack.c.h.b16 %v3614
        %v4785 = vunpack.c.l.b16 %v3615
        %v4786 = vunpack.c.h.b16 %v3615
        %v4787 = vunpack.c.l.b16 %v3616
        %v4788 = vunpack.c.h.b16 %v3616
        %v4789 = vunpack.c.l.b16 %v3617
        %v4790 = vunpack.c.h.b16 %v3617
        %v4791 = vunpack.c.l.b16 %v3618
        %v4792 = vunpack.c.h.b16 %v3618
        %v4793 = vunpack.c.l.b16 %v3619
        %v4794 = vunpack.c.h.b16 %v3619
        %v4795 = vunpack.c.l.b16 %v3620
        %v4796 = vunpack.c.h.b16 %v3620
        %v4797 = vunpack.c.l.b16 %v3621
        %v4798 = vunpack.c.h.b16 %v3621
        %v4799 = vunpack.c.l.b16 %v3622
        %v4800 = vunpack.c.h.b16 %v3622
        %v4801 = vunpack.c.l.b16 %v3623
        %v4802 = vunpack.c.h.b16 %v3623
        %v4803 = vunpack.c.l.b16 %v3624
        %v4804 = vunpack.c.h.b16 %v3624
        %v4805 = vunpack.c.l.b16 %v3625
        %v4806 = vunpack.c.h.b16 %v3625
        %v4807 = vunpack.c.l.b16 %v3626
        %v4808 = vunpack.c.h.b16 %v3626
        %v4809 = vunpack.c.l.b16 %v3627
        %v4810 = vunpack.c.h.b16 %v3627
        %v4811 = vunpack.c.l.b16 %v3628
        %v4812 = vunpack.c.h.b16 %v3628
        %v4813 = vunpack.c.l.b16 %v3629
        %v4814 = vunpack.c.h.b16 %v3629
        %v4815 = vunpack.c.l.b16 %v3630
        %v4816 = vunpack.c.h.b16 %v3630
        %v4817 = vunpack.c.l.b16 %v3631
        %v4818 = vunpack.c.h.b16 %v3631
        %v4819 = vunpack.c.l.b16 %v3632
        %v4820 = vunpack.c.h.b16 %v3632
        %v4821 = vunpack.c.l.b16 %v3633
        %v4822 = vunpack.c.h.b16 %v3633
        %v4823 = vunpack.c.l.b16 %v3634
        %v4824 = vunpack.c.h.b16 %v3634
        %v4825 = vunpack.c.l.b16 %v3635
        %v4826 = vunpack.c.h.b16 %v3635
        %v4827 = vunpack.c.l.b16 %v3636
        %v4828 = vunpack.c.h.b16 %v3636
        %v4829 = vunpack.c.l.b16 %v3637
        %v4830 = vunpack.c.h.b16 %v3637
        %v4831 = vunpack.c.l.b16 %v3638
        %v4832 = vunpack.c.h.b16 %v3638
        %v4833 = vunpack.c.l.b16 %v3639
        %v4834 = vunpack.c.h.b16 %v3639
        %v4835 = vunpack.c.l.b16 %v3640
        %v4836 = vunpack.c.h.b16 %v3640
        %v4837 = vunpack.c.l.b16 %v3641
        %v4838 = vunpack.c.h.b16 %v3641
        %v4839 = vunpack.c.l.b16 %v3642
        %v4840 = vunpack.c.h.b16 %v3642
        %v4841 = vunpack.c.l.b16 %v3643
        %v4842 = vunpack.c.h.b16 %v3643
        %v4843 = vunpack.c.l.b16 %v3644
        %v4844 = vunpack.c.h.b16 %v3644
        %v4845 = vunpack.c.l.b16 %v3645
        %v4846 = vunpack.c.h.b16 %v3645
        %v4847 = vunpack.c.l.b16 %v3646
        %v4848 = vunpack.c.h.b16 %v3646
        %v4849 = vunpack.c.l.b16 %v3647
        %v4850 = vunpack.c.h.b16 %v3647
        %v4851 = vunpack.c.l.b16 %v3648
        %v4852 = vunpack.c.h.b16 %v3648
        %v4853 = vunpack.c.l.b16 %v3649
        %v4854 = vunpack.c.h.b16 %v3649
        %v4855 = vunpack.c.l.b16 %v3650
        %v4856 = vunpack.c.h.b16 %v3650
        %v4857 = vunpack.c.l.b16 %v3651
        %v4858 = vunpack.c.h.b16 %v3651
        %v4859 = vunpack.c.l.b16 %v3652
        %v4860 = vunpack.c.h.b16 %v3652
        %v4861 = vunpack.c.l.b16 %v3653
        %v4862 = vunpack.c.h.b16 %v3653
        %v4863 = vunpack.c.l.b16 %v3654
        %v4864 = vunpack.c.h.b16 %v3654
        %v4865 = vunpack.c.l.b16 %v3655
        %v4866 = vunpack.c.h.b16 %v3655
        %v4867 = vunpack.c.l.b16 %v3656
        %v4868 = vunpack.c.h.b16 %v3656
        %v4869 = vunpack.c.l.b16 %v3657
        %v4870 = vunpack.c.h.b16 %v3657
        %v4871 = vunpack.c.l.b16 %v3658
        %v4872 = vunpack.c.h.b16 %v3658
        %v4873 = vunpack.c.l.b16 %v3659
        %v4874 = vunpack.c.h.b16 %v3659
        %v4875 = vunpack.c.l.b16 %v3660
        %v4876 = vunpack.c.h.b16 %v3660
        %v4877 = vunpack.c.l.b16 %v3661
        %v4878 = vunpack.c.h.b16 %v3661
        %v4879 = vunpack.c.l.b16 %v3662
        %v4880 = vunpack.c.h.b16 %v3662
        %v4881 = vunpack.c.l.b16 %v3663
        %v4882 = vunpack.c.h.b16 %v3663
        %v4883 = vunpack.c.l.b16 %v3664
        %v4884 = vunpack.c.h.b16 %v3664
        %v4885 = vunpack.c.l.b16 %v3665
        %v4886 = vunpack.c.h.b16 %v3665
        %v4887 = vunpack.c.l.b16 %v3666
        %v4888 = vunpack.c.h.b16 %v3666
        %v4889 = vunpack.c.l.b16 %v3667
        %v4890 = vunpack.c.h.b16 %v3667
        %v4891 = vunpack.c.l.b16 %v3668
        %v4892 = vunpack.c.h.b16 %v3668
        %v4893 = vunpack.c.l.b16 %v3669
        %v4894 = vunpack.c.h.b16 %v3669
        %v4895 = vunpack.c.l.b16 %v3670
        %v4896 = vunpack.c.h.b16 %v3670
        %v4897 = vunpack.c.l.b16 %v3671
        %v4898 = vunpack.c.h.b16 %v3671
        %v4899 = vunpack.c.l.b16 %v3672
        %v4900 = vunpack.c.h.b16 %v3672
        %v4901 = vunpack.c.l.b16 %v3673
        %v4902 = vunpack.c.h.b16 %v3673
        %v4903 = vunpack.c.l.b16 %v3674
        %v4904 = vunpack.c.h.b16 %v3674
        %v4905 = vunpack.c.l.b16 %v3675
        %v4906 = vunpack.c.h.b16 %v3675
        %v4907 = vunpack.c.l.b16 %v3676
        %v4908 = vunpack.c.h.b16 %v3676
        %v4909 = vunpack.c.l.b16 %v3677
        %v4910 = vunpack.c.h.b16 %v3677
        %v4911 = vunpack.c.l.b16 %v3678
        %v4912 = vunpack.c.h.b16 %v3678
        %v4913 = vunpack.c.l.b16 %v3679
        %v4914 = vunpack.c.h.b16 %v3679
        %v4915 = vunpack.c.l.b16 %v3680
        %v4916 = vunpack.c.h.b16 %v3680
        %v4917 = vunpack.c.l.b16 %v3681
        %v4918 = vunpack.c.h.b16 %v3681
        %v4919 = vunpack.c.l.b16 %v3682
        %v4920 = vunpack.c.h.b16 %v3682
        %v4921 = vunpack.c.l.b16 %v3683
        %v4922 = vunpack.c.h.b16 %v3683
        %v4923 = vunpack.c.l.b16 %v3684
        %v4924 = vunpack.c.h.b16 %v3684
        %v4925 = vunpack.c.l.b16 %v3685
        %v4926 = vunpack.c.h.b16 %v3685
        %v4927 = vunpack.c.l.b16 %v3686
        %v4928 = vunpack.c.h.b16 %v3686
        %v4929 = vunpack.c.l.b16 %v3687
        %v4930 = vunpack.c.h.b16 %v3687
        %v4931 = vunpack.c.l.b16 %v3688
        %v4932 = vunpack.c.h.b16 %v3688
        %v4933 = vunpack.c.l.b16 %v3689
        %v4934 = vunpack.c.h.b16 %v3689
        %v4935 = vunpack.c.l.b16 %v3690
        %v4936 = vunpack.c.h.b16 %v3690
        %v4937 = vunpack.c.l.b16 %v3691
        %v4938 = vunpack.c.h.b16 %v3691
        %v4939 = vunpack.c.l.b16 %v3692
        %v4940 = vunpack.c.h.b16 %v3692
        %v4941 = vunpack.c.l.b16 %v3693
        %v4942 = vunpack.c.h.b16 %v3693
        %v4943 = vunpack.c.l.b16 %v3694
        %v4944 = vunpack.c.h.b16 %v3694
        %v4945 = vunpack.c.l.b16 %v3695
        %v4946 = vunpack.c.h.b16 %v3695
        %v4947 = vunpack.c.l.b16 %v3696
        %v4948 = vunpack.c.h.b16 %v3696
        %v4949 = vunpack.c.l.b16 %v3697
        %v4950 = vunpack.c.h.b16 %v3697
        %v4951 = vunpack.c.l.b16 %v3698
        %v4952 = vunpack.c.h.b16 %v3698
        %v4953 = vunpack.c.l.b16 %v3699
        %v4954 = vunpack.c.h.b16 %v3699
        %v4955 = vunpack.c.l.b16 %v3700
        %v4956 = vunpack.c.h.b16 %v3700
        %v4957 = vunpack.c.l.b16 %v3701
        %v4958 = vunpack.c.h.b16 %v3701
        %v4959 = vunpack.c.l.b16 %v3702
        %v4960 = vunpack.c.h.b16 %v3702
        %v4961 = vunpack.c.l.b16 %v3703
        %v4962 = vunpack.c.h.b16 %v3703
        %v4963 = vunpack.c.l.b16 %v3704
        %v4964 = vunpack.c.h.b16 %v3704
        %v4965 = vunpack.c.l.b16 %v3705
        %v4966 = vunpack.c.h.b16 %v3705
        %v4967 = vunpack.c.l.b16 %v3706
        %v4968 = vunpack.c.h.b16 %v3706
        %v4969 = vunpack.c.l.b16 %v3707
        %v4970 = vunpack.c.h.b16 %v3707
        %v4971 = vunpack.c.l.b16 %v3708
        %v4972 = vunpack.c.h.b16 %v3708
        %v4973 = vunpack.c.l.b16 %v3709
        %v4974 = vunpack.c.h.b16 %v3709
        %v4975 = vunpack.c.l.b16 %v3710
        %v4976 = vunpack.c.h.b16 %v3710
        %v4977 = vunpack.c.l.b16 %v3711
        %v4978 = vunpack.c.h.b16 %v3711
        %v4979 = vunpack.c.l.b16 %v3712
        %v4980 = vunpack.c.h.b16 %v3712
        %v4981 = vunpack.c.l.b16 %v3713
        %v4982 = vunpack.c.h.b16 %v3713
        %v4983 = vunpack.c.l.b16 %v3714
        %v4984 = vunpack.c.h.b16 %v3714
        %v4985 = vunpack.c.l.b16 %v3715
        %v4986 = vunpack.c.h.b16 %v3715
        %v4987 = vunpack.c.l.b16 %v3716
        %v4988 = vunpack.c.h.b16 %v3716
        %v4989 = vunpack.c.l.b16 %v3717
        %v4990 = vunpack.c.h.b16 %v3717
        %v4991 = vunpack.c.l.b16 %v3718
        %v4992 = vunpack.c.h.b16 %v3718
        %v4993 = vunpack.c.l.b16 %v3719
        %v4994 = vunpack.c.h.b16 %v3719
        %v4995 = vunpack.c.l.b16 %v3720
        %v4996 = vunpack.c.h.b16 %v3720
        %v4997 = vunpack.c.l.b16 %v3721
        %v4998 = vunpack.c.h.b16 %v3721
        %v4999 = vunpack.c.l.b16 %v3722
        %v5000 = vunpack.c.h.b16 %v3722
        %v5001 = vunpack.c.l.b16 %v3723
        %v5002 = vunpack.c.h.b16 %v3723
        %v5003 = vunpack.c.l.b16 %v3724
        %v5004 = vunpack.c.h.b16 %v3724
        %v5005 = vunpack.c.l.b16 %v3725
        %v5006 = vunpack.c.h.b16 %v3725
        %v5007 = vunpack.c.l.b16 %v3726
        %v5008 = vunpack.c.h.b16 %v3726
        %v5009 = vunpack.c.l.b16 %v3727
        %v5010 = vunpack.c.h.b16 %v3727
        %v5011 = vunpack.c.l.b16 %v3728
        %v5012 = vunpack.c.h.b16 %v3728
        %v5013 = vunpack.c.l.b16 %v3729
        %v5014 = vunpack.c.h.b16 %v3729
        %v5015 = vunpack.c.l.b16 %v3730
        %v5016 = vunpack.c.h.b16 %v3730
        %v5017 = vunpack.c.l.b16 %v3731
        %v5018 = vunpack.c.h.b16 %v3731
        %v5019 = vunpack.c.l.b16 %v3732
        %v5020 = vunpack.c.h.b16 %v3732
        %v5021 = vunpack.c.l.b16 %v3733
        %v5022 = vunpack.c.h.b16 %v3733
        %v5023 = vunpack.c.l.b16 %v3734
        %v5024 = vunpack.c.h.b16 %v3734
        %v5025 = vunpack.c.l.b16 %v3735
        %v5026 = vunpack.c.h.b16 %v3735
        %v5027 = vunpack.c.l.b16 %v3736
        %v5028 = vunpack.c.h.b16 %v3736
        %v5029 = vunpack.c.l.b16 %v3737
        %v5030 = vunpack.c.h.b16 %v3737
        %v5031 = vunpack.c.l.b16 %v3738
        %v5032 = vunpack.c.h.b16 %v3738
        %v5033 = vunpack.c.l.b16 %v3739
        %v5034 = vunpack.c.h.b16 %v3739
        %v5035 = vunpack.c.l.b16 %v3740
        %v5036 = vunpack.c.h.b16 %v3740
        %v5037 = vunpack.c.l.b16 %v3741
        %v5038 = vunpack.c.h.b16 %v3741
        %v5039 = vunpack.c.l.b16 %v3742
        %v5040 = vunpack.c.h.b16 %v3742
        %v5041 = vunpack.c.l.b16 %v3743
        %v5042 = vunpack.c.h.b16 %v3743
        %v5043 = vunpack.c.l.b16 %v3744
        %v5044 = vunpack.c.h.b16 %v3744
        %v5045 = vunpack.c.l.b16 %v3745
        %v5046 = vunpack.c.h.b16 %v3745
        %v5047 = vunpack.c.l.b16 %v3746
        %v5048 = vunpack.c.h.b16 %v3746
        %v5049 = vunpack.c.l.b16 %v3747
        %v5050 = vunpack.c.h.b16 %v3747
        %v5051 = vunpack.c.l.b16 %v3748
        %v5052 = vunpack.c.h.b16 %v3748
        %v5053 = vunpack.c.l.b16 %v3749
        %v5054 = vunpack.c.h.b16 %v3749
        %v5055 = vunpack.c.l.b16 %v3750
        %v5056 = vunpack.c.h.b16 %v3750
        %v5057 = vunpack.c.l.b16 %v3751
        %v5058 = vunpack.c.h.b16 %v3751
        %v5059 = vunpack.c.l.b16 %v3752
        %v5060 = vunpack.c.h.b16 %v3752
        %v5061 = vunpack.c.l.b16 %v3753
        %v5062 = vunpack.c.h.b16 %v3753
        %v5063 = vunpack.c.l.b16 %v3754
        %v5064 = vunpack.c.h.b16 %v3754
        %v5065 = vunpack.c.l.b16 %v3755
        %v5066 = vunpack.c.h.b16 %v3755
        %v5067 = vunpack.c.l.b16 %v3756
        %v5068 = vunpack.c.h.b16 %v3756
        %v5069 = vunpack.c.l.b16 %v3757
        %v5070 = vunpack.c.h.b16 %v3757
        %v5071 = vunpack.c.l.b16 %v3758
        %v5072 = vunpack.c.h.b16 %v3758
        %v5073 = vunpack.c.l.b16 %v3759
        %v5074 = vunpack.c.h.b16 %v3759
        %v5075 = vunpack.c.l.b16 %v3760
        %v5076 = vunpack.c.h.b16 %v3760
        %v5077 = vunpack.c.l.b16 %v3761
        %v5078 = vunpack.c.h.b16 %v3761
        %v5079 = vunpack.c.l.b16 %v3762
        %v5080 = vunpack.c.h.b16 %v3762
        %v5081 = vunpack.c.l.b16 %v3763
        %v5082 = vunpack.c.h.b16 %v3763
        %v5083 = vunpack.c.l.b16 %v3764
        %v5084 = vunpack.c.h.b16 %v3764
        %v5085 = vunpack.c.l.b16 %v3765
        %v5086 = vunpack.c.h.b16 %v3765
        %v5087 = vunpack.c.l.b16 %v3766
        %v5088 = vunpack.c.h.b16 %v3766
        %v5089 = vunpack.c.l.b16 %v3767
        %v5090 = vunpack.c.h.b16 %v3767
        %v5091 = vunpack.c.l.b16 %v3768
        %v5092 = vunpack.c.h.b16 %v3768
        %v5093 = vunpack.c.l.b16 %v3769
        %v5094 = vunpack.c.h.b16 %v3769
        %v5095 = vunpack.c.l.b16 %v3770
        %v5096 = vunpack.c.h.b16 %v3770
        %v5097 = vunpack.c.l.b16 %v3771
        %v5098 = vunpack.c.h.b16 %v3771
        %v5099 = vunpack.c.l.b16 %v3772
        %v5100 = vunpack.c.h.b16 %v3772
        %v5101 = vunpack.c.l.b16 %v3773
        %v5102 = vunpack.c.h.b16 %v3773
        %v5103 = vunpack.c.l.b16 %v3774
        %v5104 = vunpack.c.h.b16 %v3774
        %v5105 = vunpack.c.l.b16 %v3775
        %v5106 = vunpack.c.h.b16 %v3775
        %v5107 = vunpack.c.l.b16 %v3776
        %v5108 = vunpack.c.h.b16 %v3776
        %v5109 = vunpack.c.l.b16 %v3777
        %v5110 = vunpack.c.h.b16 %v3777
        %v5111 = vunpack.c.l.b16 %v3778
        %v5112 = vunpack.c.h.b16 %v3778
        %v5113 = vunpack.c.l.b16 %v3779
        %v5114 = vunpack.c.h.b16 %v3779
        %v5115 = vunpack.c.l.b16 %v3780
        %v5116 = vunpack.c.h.b16 %v3780
        %v5117 = vunpack.c.l.b16 %v3781
        %v5118 = vunpack.c.h.b16 %v3781
        %v5119 = vunpack.c.l.b16 %v3782
        %v5120 = vunpack.c.h.b16 %v3782
        %v5121 = vunpack.c.l.b16 %v3783
        %v5122 = vunpack.c.h.b16 %v3783
        %v5123 = vunpack.c.l.b16 %v3784
        %v5124 = vunpack.c.h.b16 %v3784
        %v5125 = vunpack.c.l.b16 %v3785
        %v5126 = vunpack.c.h.b16 %v3785
        %v5127 = vunpack.c.l.b16 %v3786
        %v5128 = vunpack.c.h.b16 %v3786
        %v5129 = vunpack.c.l.b16 %v3787
        %v5130 = vunpack.c.h.b16 %v3787
        %v5131 = vunpack.c.l.b16 %v3788
        %v5132 = vunpack.c.h.b16 %v3788
        %v5133 = vunpack.c.l.b16 %v3789
        %v5134 = vunpack.c.h.b16 %v3789
        %v5135 = vunpack.c.l.b16 %v3790
        %v5136 = vunpack.c.h.b16 %v3790
        %v5137 = vunpack.c.l.b16 %v3791
        %v5138 = vunpack.c.h.b16 %v3791
        %v5139 = vunpack.c.l.b16 %v3792
        %v5140 = vunpack.c.h.b16 %v3792
        %v5141 = vunpack.c.l.b16 %v3793
        %v5142 = vunpack.c.h.b16 %v3793
        %v5143 = vunpack.c.l.b16 %v3794
        %v5144 = vunpack.c.h.b16 %v3794
        %v5145 = vunpack.c.l.b16 %v3795
        %v5146 = vunpack.c.h.b16 %v3795
        %v5147 = vunpack.c.l.b16 %v3796
        %v5148 = vunpack.c.h.b16 %v3796
        %v5149 = vunpack.c.l.b16 %v3797
        %v5150 = vunpack.c.h.b16 %v3797
        %v5151 = vunpack.c.l.b16 %v3798
        %v5152 = vunpack.c.h.b16 %v3798
        %v5153 = vunpack.c.l.b16 %v3799
        %v5154 = vunpack.c.h.b16 %v3799
        %v5155 = vunpack.c.l.b16 %v3800
        %v5156 = vunpack.c.h.b16 %v3800
        %v5157 = vunpack.c.l.b16 %v3801
        %v5158 = vunpack.c.h.b16 %v3801
        %v5159 = vunpack.c.l.b16 %v3802
        %v5160 = vunpack.c.h.b16 %v3802
        %v5161 = vunpack.c.l.b16 %v3803
        %v5162 = vunpack.c.h.b16 %v3803
        %v5163 = vunpack.c.l.b16 %v3804
        %v5164 = vunpack.c.h.b16 %v3804
        %v5165 = vunpack.c.l.b16 %v3805
        %v5166 = vunpack.c.h.b16 %v3805
        %v5167 = vunpack.c.l.b16 %v3806
        %v5168 = vunpack.c.h.b16 %v3806
        %v5169 = vunpack.c.l.b16 %v3807
        %v5170 = vunpack.c.h.b16 %v3807
        %v5171 = vunpack.c.l.b16 %v3808
        %v5172 = vunpack.c.h.b16 %v3808
        %v5173 = vunpack.c.l.b16 %v3809
        %v5174 = vunpack.c.h.b16 %v3809
        %v5175 = vunpack.c.l.b16 %v3810
        %v5176 = vunpack.c.h.b16 %v3810
        %v5177 = vunpack.c.l.b16 %v3811
        %v5178 = vunpack.c.h.b16 %v3811
        %v5179 = vunpack.c.l.b16 %v3812
        %v5180 = vunpack.c.h.b16 %v3812
        %v5181 = vunpack.c.l.b16 %v3813
        %v5182 = vunpack.c.h.b16 %v3813
        %v5183 = vunpack.c.l.b16 %v3814
        %v5184 = vunpack.c.h.b16 %v3814
        %v5185 = vunpack.c.l.b16 %v3815
        %v5186 = vunpack.c.h.b16 %v3815
        %v5187 = vunpack.c.l.b16 %v3816
        %v5188 = vunpack.c.h.b16 %v3816
        %v5189 = vunpack.c.l.b16 %v3817
        %v5190 = vunpack.c.h.b16 %v3817
        %v5191 = vunpack.c.l.b16 %v3818
        %v5192 = vunpack.c.h.b16 %v3818
        %v5193 = vunpack.c.l.b16 %v3819
        %v5194 = vunpack.c.h.b16 %v3819
        %v5195 = vunpack.c.l.b16 %v3820
        %v5196 = vunpack.c.h.b16 %v3820
        %v5197 = vunpack.c.l.b16 %v3821
        %v5198 = vunpack.c.h.b16 %v3821
        %v5199 = vunpack.c.l.b16 %v3822
        %v5200 = vunpack.c.h.b16 %v3822
        %v5201 = vunpack.c.l.b16 %v3823
        %v5202 = vunpack.c.h.b16 %v3823
        %v5203 = vunpack.c.l.b16 %v3824
        %v5204 = vunpack.c.h.b16 %v3824
        %v5205 = vunpack.c.l.b16 %v3825
        %v5206 = vunpack.c.h.b16 %v3825
        %v5207 = vunpack.c.l.b16 %v3826
        %v5208 = vunpack.c.h.b16 %v3826
        %v5209 = vunpack.c.l.b16 %v3827
        %v5210 = vunpack.c.h.b16 %v3827
        %v5211 = vunpack.c.l.b16 %v3828
        %v5212 = vunpack.c.h.b16 %v3828
        %v5213 = vunpack.c.l.b16 %v3829
        %v5214 = vunpack.c.h.b16 %v3829
        %v5215 = vunpack.c.l.b16 %v3830
        %v5216 = vunpack.c.h.b16 %v3830
        %v5217 = vunpack.c.l.b16 %v3831
        %v5218 = vunpack.c.h.b16 %v3831
        %v5219 = vunpack.c.l.b16 %v3832
        %v5220 = vunpack.c.h.b16 %v3832
        %v5221 = vunpack.c.l.b16 %v3833
        %v5222 = vunpack.c.h.b16 %v3833
        %v5223 = vunpack.c.l.b16 %v3834
        %v5224 = vunpack.c.h.b16 %v3834
        %v5225 = vunpack.c.l.b16 %v3835
        %v5226 = vunpack.c.h.b16 %v3835
        %v5227 = vunpack.c.l.b16 %v3836
        %v5228 = vunpack.c.h.b16 %v3836
        %v5229 = vunpack.c.l.b16 %v3837
        %v5230 = vunpack.c.h.b16 %v3837
        %v5231 = vunpack.c.l.b16 %v3838
        %v5232 = vunpack.c.h.b16 %v3838
        %v5233 = vunpack.c.l.b16 %v3839
        %v5234 = vunpack.c.h.b16 %v3839
        %v5235 = vunpack.c.l.b16 %v3840
        %v5236 = vunpack.c.h.b16 %v3840
        %v5237 = vunpack.c.l.b16 %v3841
        %v5238 = vunpack.c.h.b16 %v3841
        %v5239 = vunpack.c.l.b16 %v3842
        %v5240 = vunpack.c.h.b16 %v3842
        %v5241 = vunpack.c.l.b16 %v3843
        %v5242 = vunpack.c.h.b16 %v3843
        %v5243 = vunpack.c.l.b16 %v3844
        %v5244 = vunpack.c.h.b16 %v3844
        %v5245 = vunpack.c.l.b16 %v3845
        %v5246 = vunpack.c.h.b16 %v3845
        %v5247 = vunpack.c.l.b16 %v3846
        %v5248 = vunpack.c.h.b16 %v3846
        %v5249 = vunpack.c.l.b16 %v3847
        %v5250 = vunpack.c.h.b16 %v3847
        %v5251 = vunpack.c.l.b16 %v3848
        %v5252 = vunpack.c.h.b16 %v3848
        %v5253 = vunpack.c.l.b16 %v3849
        %v5254 = vunpack.c.h.b16 %v3849
        %v5255 = vunpack.c.l.b16 %v3850
        %v5256 = vunpack.c.h.b16 %v3850
        %v5257 = vunpack.c.l.b16 %v3851
        %v5258 = vunpack.c.h.b16 %v3851
        %v5259 = vunpack.c.l.b16 %v3852
        %v5260 = vunpack.c.h.b16 %v3852
        %v5261 = vunpack.c.l.b16 %v3853
        %v5262 = vunpack.c.h.b16 %v3853
        %v5263 = vunpack.c.l.b16 %v3854
        %v5264 = vunpack.c.h.b16 %v3854
        %v5265 = vunpack.c.l.b16 %v3855
        %v5266 = vunpack.c.h.b16 %v3855
        %v5267 = vunpack.c.l.b16 %v3856
        %v5268 = vunpack.c.h.b16 %v3856
        %v5269 = vunpack.c.l.b16 %v3857
        %v5270 = vunpack.c.h.b16 %v3857
        %v5271 = vunpack.c.l.b16 %v3858
        %v5272 = vunpack.c.h.b16 %v3858
        %v5273 = vunpack.c.l.b16 %v3859
        %v5274 = vunpack.c.h.b16 %v3859
        %v5275 = vunpack.c.l.b16 %v3860
        %v5276 = vunpack.c.h.b16 %v3860
        %v5277 = vunpack.c.l.b16 %v3861
        %v5278 = vunpack.c.h.b16 %v3861
        %v5279 = vunpack.c.l.b16 %v3862
        %v5280 = vunpack.c.h.b16 %v3862
        %v5281 = vunpack.c.l.b16 %v3863
        %v5282 = vunpack.c.h.b16 %v3863
        %v5283 = vunpack.c.l.b16 %v3864
        %v5284 = vunpack.c.h.b16 %v3864
        %v5285 = vunpack.c.l.b16 %v3865
        %v5286 = vunpack.c.h.b16 %v3865
        %v5287 = vunpack.c.l.b16 %v3866
        %v5288 = vunpack.c.h.b16 %v3866
        %v5289 = vunpack.c.l.b16 %v3867
        %v5290 = vunpack.c.h.b16 %v3867
        %v5291 = vunpack.c.l.b16 %v3868
        %v5292 = vunpack.c.h.b16 %v3868
        %v5293 = vunpack.c.l.b16 %v3869
        %v5294 = vunpack.c.h.b16 %v3869
        %v5295 = vunpack.c.l.b16 %v3870
        %v5296 = vunpack.c.h.b16 %v3870
        %v5297 = vunpack.c.l.b16 %v3871
        %v5298 = vunpack.c.h.b16 %v3871
        %v5299 = vunpack.c.l.b16 %v3872
        %v5300 = vunpack.c.h.b16 %v3872
        %v5301 = vunpack.c.l.b16 %v3873
        %v5302 = vunpack.c.h.b16 %v3873
        %v5303 = vunpack.c.l.b16 %v3874
        %v5304 = vunpack.c.h.b16 %v3874
        %v5305 = vunpack.c.l.b16 %v3875
        %v5306 = vunpack.c.h.b16 %v3875
        %v5307 = vunpack.c.l.b16 %v3876
        %v5308 = vunpack.c.h.b16 %v3876
        %v5309 = vunpack.c.l.b16 %v3877
        %v5310 = vunpack.c.h.b16 %v3877
        %v5311 = vunpack.c.l.b16 %v3878
        %v5312 = vunpack.c.h.b16 %v3878
        %v5313 = vunpack.c.l.b16 %v3879
        %v5314 = vunpack.c.h.b16 %v3879
        %v5315 = vunpack.c.l.b16 %v3880
        %v5316 = vunpack.c.h.b16 %v3880
        %v5317 = vunpack.c.l.b16 %v3881
        %v5318 = vunpack.c.h.b16 %v3881
        %v5319 = vunpack.c.l.b16 %v3882
        %v5320 = vunpack.c.h.b16 %v3882
        %v5321 = vunpack.c.l.b16 %v3883
        %v5322 = vunpack.c.h.b16 %v3883
        %v5323 = vunpack.c.l.b16 %v3884
        %v5324 = vunpack.c.h.b16 %v3884
        %v5325 = vunpack.c.l.b16 %v3885
        %v5326 = vunpack.c.h.b16 %v3885
        %v5327 = vunpack.c.l.b16 %v3886
        %v5328 = vunpack.c.h.b16 %v3886
        %v5329 = vunpack.c.l.b16 %v3887
        %v5330 = vunpack.c.h.b16 %v3887
        %v5331 = vunpack.c.l.b16 %v3888
        %v5332 = vunpack.c.h.b16 %v3888
        %v5333 = vunpack.c.l.b16 %v3889
        %v5334 = vunpack.c.h.b16 %v3889
        %v5335 = vunpack.c.l.b16 %v3890
        %v5336 = vunpack.c.h.b16 %v3890
        %v5337 = vunpack.c.l.b16 %v3891
        %v5338 = vunpack.c.h.b16 %v3891
        %v5339 = vunpack.c.l.b16 %v3892
        %v5340 = vunpack.c.h.b16 %v3892
        %v5341 = vunpack.c.l.b16 %v3893
        %v5342 = vunpack.c.h.b16 %v3893
        %v5343 = vunpack.c.l.b16 %v3894
        %v5344 = vunpack.c.h.b16 %v3894
        %v5345 = vunpack.c.l.b16 %v3895
        %v5346 = vunpack.c.h.b16 %v3895
        %v5347 = vunpack.c.l.b16 %v3896
        %v5348 = vunpack.c.h.b16 %v3896
        %v5349 = vunpack.c.l.b16 %v3897
        %v5350 = vunpack.c.h.b16 %v3897
        %v5351 = vunpack.c.l.b16 %v3898
        %v5352 = vunpack.c.h.b16 %v3898
        %v5353 = vunpack.c.l.b16 %v3899
        %v5354 = vunpack.c.h.b16 %v3899
        %v5355 = vunpack.c.l.b16 %v3900
        %v5356 = vunpack.c.h.b16 %v3900
        %v5357 = vunpack.c.l.b16 %v3901
        %v5358 = vunpack.c.h.b16 %v3901
        %v5359 = vunpack.c.l.b16 %v3902
        %v5360 = vunpack.c.h.b16 %v3902
        %v5361 = vunpack.c.l.b16 %v3903
        %v5362 = vunpack.c.h.b16 %v3903
        %v5363 = vunpack.c.l.b16 %v3904
        %v5364 = vunpack.c.h.b16 %v3904
        %v5365 = vunpack.c.l.b16 %v3905
        %v5366 = vunpack.c.h.b16 %v3905
        %v5367 = vunpack.c.l.b16 %v3906
        %v5368 = vunpack.c.h.b16 %v3906
        %v5369 = vunpack.c.l.b16 %v3907
        %v5370 = vunpack.c.h.b16 %v3907
        %v5371 = vunpack.c.l.b16 %v3908
        %v5372 = vunpack.c.h.b16 %v3908
        %v5373 = vunpack.c.l.b16 %v3909
        %v5374 = vunpack.c.h.b16 %v3909
        %v5375 = vunpack.c.l.b16 %v3910
        %v5376 = vunpack.c.h.b16 %v3910
        %v5377 = vunpack.c.l.b16 %v3911
        %v5378 = vunpack.c.h.b16 %v3911
        %v5379 = vunpack.c.l.b16 %v3912
        %v5380 = vunpack.c.h.b16 %v3912
        %v5381 = vunpack.c.l.b16 %v3913
        %v5382 = vunpack.c.h.b16 %v3913
        %v5383 = vunpack.c.l.b16 %v3914
        %v5384 = vunpack.c.h.b16 %v3914
        %v5385 = vunpack.c.l.b16 %v3915
        %v5386 = vunpack.c.h.b16 %v3915
        %v5387 = vunpack.c.l.b16 %v3916
        %v5388 = vunpack.c.h.b16 %v3916
        %v5389 = vunpack.c.l.b16 %v3917
        %v5390 = vunpack.c.h.b16 %v3917
        %v5391 = vunpack.c.l.b16 %v3918
        %v5392 = vunpack.c.h.b16 %v3918
        %v5393 = vunpack.c.l.b16 %v3919
        %v5394 = vunpack.c.h.b16 %v3919
        %v5395 = vunpack.c.l.b16 %v3920
        %v5396 = vunpack.c.h.b16 %v3920
        %v5397 = vunpack.c.l.b16 %v3921
        %v5398 = vunpack.c.h.b16 %v3921
        %v5399 = vunpack.c.l.b16 %v3922
        %v5400 = vunpack.c.h.b16 %v3922
        %v5401 = vunpack.c.l.b16 %v3923
        %v5402 = vunpack.c.h.b16 %v3923
        %v5403 = vunpack.c.l.b16 %v3924
        %v5404 = vunpack.c.h.b16 %v3924
        %v5405 = vunpack.c.l.b16 %v3925
        %v5406 = vunpack.c.h.b16 %v3925
        %v5407 = vunpack.c.l.b16 %v3926
        %v5408 = vunpack.c.h.b16 %v3926
        %v5409 = vunpack.c.l.b16 %v3927
        %v5410 = vunpack.c.h.b16 %v3927
        %v5411 = vunpack.c.l.b16 %v3928
        %v5412 = vunpack.c.h.b16 %v3928
        %v5413 = vunpack.c.l.b16 %v3929
        %v5414 = vunpack.c.h.b16 %v3929
        %v5415 = vunpack.c.l.b16 %v3930
        %v5416 = vunpack.c.h.b16 %v3930
        %v5417 = vunpack.c.l.b16 %v3931
        %v5418 = vunpack.c.h.b16 %v3931
        %v5419 = vunpack.c.l.b16 %v3932
        %v5420 = vunpack.c.h.b16 %v3932
        %v5421 = vunpack.c.l.b16 %v3933
        %v5422 = vunpack.c.h.b16 %v3933
        %v5423 = vunpack.c.l.b16 %v3934
        %v5424 = vunpack.c.h.b16 %v3934
        %v5425 = vunpack.c.l.b16 %v3935
        %v5426 = vunpack.c.h.b16 %v3935
        %v5427 = vunpack.c.l.b16 %v3936
        %v5428 = vunpack.c.h.b16 %v3936
        %v5429 = vunpack.c.l.b16 %v3937
        %v5430 = vunpack.c.h.b16 %v3937
        %v5431 = vunpack.c.l.b16 %v3938
        %v5432 = vunpack.c.h.b16 %v3938
        %v5433 = vunpack.c.l.b16 %v3939
        %v5434 = vunpack.c.h.b16 %v3939
        %v5435 = vunpack.c.l.b16 %v3940
        %v5436 = vunpack.c.h.b16 %v3940
        %v5437 = vunpack.c.l.b16 %v3941
        %v5438 = vunpack.c.h.b16 %v3941
        %v5439 = vunpack.c.l.b16 %v3942
        %v5440 = vunpack.c.h.b16 %v3942
        %v5441 = vunpack.c.l.b16 %v3943
        %v5442 = vunpack.c.h.b16 %v3943
        %v5443 = vunpack.c.l.b16 %v3944
        %v5444 = vunpack.c.h.b16 %v3944
        %v5445 = vunpack.c.l.b16 %v3945
        %v5446 = vunpack.c.h.b16 %v3945
        %v5447 = vunpack.c.l.b16 %v3946
        %v5448 = vunpack.c.h.b16 %v3946
        %v5449 = vunpack.c.l.b16 %v3947
        %v5450 = vunpack.c.h.b16 %v3947
        %v5451 = vunpack.c.l.b16 %v3948
        %v5452 = vunpack.c.h.b16 %v3948
        %v5453 = vunpack.c.l.b16 %v3949
        %v5454 = vunpack.c.h.b16 %v3949
        %v5455 = vunpack.c.l.b16 %v3950
        %v5456 = vunpack.c.h.b16 %v3950
        %v5457 = vunpack.c.l.b16 %v3951
        %v5458 = vunpack.c.h.b16 %v3951
        %v5459 = vunpack.c.l.b16 %v3952
        %v5460 = vunpack.c.h.b16 %v3952
        %v5461 = vunpack.c.l.b16 %v3953
        %v5462 = vunpack.c.h.b16 %v3953
        %v5463 = vunpack.c.l.b16 %v3954
        %v5464 = vunpack.c.h.b16 %v3954
        %v5465 = vunpack.c.l.b16 %v3955
        %v5466 = vunpack.c.h.b16 %v3955
        %v5467 = vunpack.c.l.b16 %v3956
        %v5468 = vunpack.c.h.b16 %v3956
        %v5469 = vunpack.c.l.b16 %v3957
        %v5470 = vunpack.c.h.b16 %v3957
        %v5471 = vunpack.c.l.b16 %v3958
        %v5472 = vunpack.c.h.b16 %v3958
        %v5473 = vunpack.c.l.b16 %v3959
        %v5474 = vunpack.c.h.b16 %v3959
        %v5475 = vunpack.c.l.b16 %v3960
        %v5476 = vunpack.c.h.b16 %v3960
        %v5477 = vunpack.c.l.b16 %v3961
        %v5478 = vunpack.c.h.b16 %v3961
        %v5479 = vunpack.c.l.b16 %v3962
        %v5480 = vunpack.c.h.b16 %v3962
        %v5481 = vunpack.c.l.b16 %v3963
        %v5482 = vunpack.c.h.b16 %v3963
        %v5483 = vunpack.c.l.b16 %v3964
        %v5484 = vunpack.c.h.b16 %v3964
        %v5485 = vunpack.c.l.b16 %v3965
        %v5486 = vunpack.c.h.b16 %v3965
        %v5487 = vunpack.c.l.b16 %v3966
        %v5488 = vunpack.c.h.b16 %v3966
        %v5489 = vunpack.c.l.b16 %v3967
        %v5490 = vunpack.c.h.b16 %v3967
        %v5491 = vunpack.c.l.b16 %v3968
        %v5492 = vunpack.c.h.b16 %v3968
        %v5493 = vunpack.c.l.b16 %v3969
        %v5494 = vunpack.c.h.b16 %v3969
        %v5495 = vunpack.c.l.b16 %v3970
        %v5496 = vunpack.c.h.b16 %v3970
        %v5497 = vunpack.c.l.b16 %v3971
        %v5498 = vunpack.c.h.b16 %v3971
        %v5499 = vunpack.c.l.b16 %v3972
        %v5500 = vunpack.c.h.b16 %v3972
        %v5501 = vunpack.c.l.b16 %v3973
        %v5502 = vunpack.c.h.b16 %v3973
        %v5503 = vunpack.c.l.b16 %v3974
        %v5504 = vunpack.c.h.b16 %v3974
        %v5505 = vunpack.c.l.b16 %v3975
        %v5506 = vunpack.c.h.b16 %v3975
        %v5507 = vunpack.c.l.b16 %v3976
        %v5508 = vunpack.c.h.b16 %v3976
        %v5509 = vunpack.c.l.b16 %v3977
        %v5510 = vunpack.c.h.b16 %v3977
        %v5511 = vunpack.c.l.b16 %v3978
        %v5512 = vunpack.c.h.b16 %v3978
        %v5513 = vunpack.c.l.b16 %v3979
        %v5514 = vunpack.c.h.b16 %v3979
        %v5515 = vunpack.c.l.b16 %v3980
        %v5516 = vunpack.c.h.b16 %v3980
        %v5517 = vunpack.c.l.b16 %v3981
        %v5518 = vunpack.c.h.b16 %v3981
        %v5519 = vunpack.c.l.b16 %v3982
        %v5520 = vunpack.c.h.b16 %v3982
        %v5521 = vunpack.c.l.b16 %v3983
        %v5522 = vunpack.c.h.b16 %v3983
        %v5523 = vunpack.c.l.b16 %v3984
        %v5524 = vunpack.c.h.b16 %v3984
        %v5525 = vunpack.c.l.b16 %v3985
        %v5526 = vunpack.c.h.b16 %v3985
        %v5527 = vunpack.c.l.b16 %v3986
        %v5528 = vunpack.c.h.b16 %v3986
        %v5529 = vunpack.c.l.b16 %v3987
        %v5530 = vunpack.c.h.b16 %v3987
        %v5531 = vunpack.c.l.b16 %v3988
        %v5532 = vunpack.c.h.b16 %v3988
        %v5533 = vunpack.c.l.b16 %v3989
        %v5534 = vunpack.c.h.b16 %v3989
        %v5535 = vunpack.c.l.b16 %v3990
        %v5536 = vunpack.c.h.b16 %v3990
        %v5537 = vunpack.c.l.b16 %v3991
        %v5538 = vunpack.c.h.b16 %v3991
        %v5539 = vunpack.c.l.b16 %v3992
        %v5540 = vunpack.c.h.b16 %v3992
        %v5541 = vunpack.c.l.b16 %v3993
        %v5542 = vunpack.c.h.b16 %v3993
        %v5543 = vunpack.c.l.b16 %v3994
        %v5544 = vunpack.c.h.b16 %v3994
        %v5545 = vunpack.c.l.b16 %v3995
        %v5546 = vunpack.c.h.b16 %v3995
        %v5547 = vunpack.c.l.b16 %v3996
        %v5548 = vunpack.c.h.b16 %v3996
        %v5549 = vpack.c.b16 %v4529, %v4525
        %v5550 = vpack.c.b16 %v4530, %v4526
        %v5551 = vpack.c.b16 %v4531, %v4527
        %v5552 = vpack.c.b16 %v4532, %v4528
        %v5553 = vpack.c.b16 %v4537, %v4533
        %v5554 = vpack.c.b16 %v4538, %v4534
        %v5555 = vpack.c.b16 %v4539, %v4535
        %v5556 = vpack.c.b16 %v4540, %v4536
        %v5557 = vpack.c.b16 %v4545, %v4541
        %v5558 = vpack.c.b16 %v4546, %v4542
        %v5559 = vpack.c.b16 %v4547, %v4543
        %v5560 = vpack.c.b16 %v4548, %v4544
        %v5561 = vpack.c.b16 %v4553, %v4549
        %v5562 = vpack.c.b16 %v4554, %v4550
        %v5563 = vpack.c.b16 %v4555, %v4551
        %v5564 = vpack.c.b16 %v4556, %v4552
        %v5565 = vpack.c.b16 %v4561, %v4557
        %v5566 = vpack.c.b16 %v4562, %v4558
        %v5567 = vpack.c.b16 %v4563, %v4559
        %v5568 = vpack.c.b16 %v4564, %v4560
        %v5569 = vpack.c.b16 %v4569, %v4565
        %v5570 = vpack.c.b16 %v4570, %v4566
        %v5571 = vpack.c.b16 %v4571, %v4567
        %v5572 = vpack.c.b16 %v4572, %v4568
        %v5573 = vpack.c.b16 %v4577, %v4573
        %v5574 = vpack.c.b16 %v4578, %v4574
        %v5575 = vpack.c.b16 %v4579, %v4575
        %v5576 = vpack.c.b16 %v4580, %v4576
        %v5577 = vpack.c.b16 %v4585, %v4581
        %v5578 = vpack.c.b16 %v4586, %v4582
        %v5579 = vpack.c.b16 %v4587, %v4583
        %v5580 = vpack.c.b16 %v4588, %v4584
        %v5581 = vpack.c.b16 %v4593, %v4589
        %v5582 = vpack.c.b16 %v4594, %v4590
        %v5583 = vpack.c.b16 %v4595, %v4591
        %v5584 = vpack.c.b16 %v4596, %v4592
        %v5585 = vpack.c.b16 %v4601, %v4597
        %v5586 = vpack.c.b16 %v4602, %v4598
        %v5587 = vpack.c.b16 %v4603, %v4599
        %v5588 = vpack.c.b16 %v4604, %v4600
        %v5589 = vpack.c.b16 %v4609, %v4605
        %v5590 = vpack.c.b16 %v4610, %v4606
        %v5591 = vpack.c.b16 %v4611, %v4607
        %v5592 = vpack.c.b16 %v4612, %v4608
        %v5593 = vpack.c.b16 %v4617, %v4613
        %v5594 = vpack.c.b16 %v4618, %v4614
        %v5595 = vpack.c.b16 %v4619, %v4615
        %v5596 = vpack.c.b16 %v4620, %v4616
        %v5597 = vpack.c.b16 %v4625, %v4621
        %v5598 = vpack.c.b16 %v4626, %v4622
        %v5599 = vpack.c.b16 %v4627, %v4623
        %v5600 = vpack.c.b16 %v4628, %v4624
        %v5601 = vpack.c.b16 %v4633, %v4629
        %v5602 = vpack.c.b16 %v4634, %v4630
        %v5603 = vpack.c.b16 %v4635, %v4631
        %v5604 = vpack.c.b16 %v4636, %v4632
        %v5605 = vpack.c.b16 %v4641, %v4637
        %v5606 = vpack.c.b16 %v4642, %v4638
        %v5607 = vpack.c.b16 %v4643, %v4639
        %v5608 = vpack.c.b16 %v4644, %v4640
        %v5609 = vpack.c.b16 %v4649, %v4645
        %v5610 = vpack.c.b16 %v4650, %v4646
        %v5611 = vpack.c.b16 %v4651, %v4647
        %v5612 = vpack.c.b16 %v4652, %v4648
        %v5613 = vpack.c.b16 %v4657, %v4653
        %v5614 = vpack.c.b16 %v4658, %v4654
        %v5615 = vpack.c.b16 %v4659, %v4655
        %v5616 = vpack.c.b16 %v4660, %v4656
        %v5617 = vpack.c.b16 %v4665, %v4661
        %v5618 = vpack.c.b16 %v4666, %v4662
        %v5619 = vpack.c.b16 %v4667, %v4663
        %v5620 = vpack.c.b16 %v4668, %v4664
        %v5621 = vpack.c.b16 %v4673, %v4669
        %v5622 = vpack.c.b16 %v4674, %v4670
        %v5623 = vpack.c.b16 %v4675, %v4671
        %v5624 = vpack.c.b16 %v4676, %v4672
        %v5625 = vpack.c.b16 %v4681, %v4677
        %v5626 = vpack.c.b16 %v4682, %v4678
        %v5627 = vpack.c.b16 %v4683, %v4679
        %v5628 = vpack.c.b16 %v4684, %v4680
        %v5629 = vpack.c.b16 %v4689, %v4685
        %v5630 = vpack.c.b16 %v4690, %v4686
        %v5631 = vpack.c.b16 %v4691, %v4687
        %v5632 = vpack.c.b16 %v4692, %v4688
        %v5633 = vpack.c.b16 %v4697, %v4693
        %v5634 = vpack.c.b16 %v4698, %v4694
        %v5635 = vpack.c.b16 %v4699, %v4695
        %v5636 = vpack.c.b16 %v4700, %v4696
        %v5637 = vpack.c.b16 %v4705, %v4701
        %v5638 = vpack.c.b16 %v4706, %v4702
        %v5639 = vpack.c.b16 %v4707, %v4703
        %v5640 = vpack.c.b16 %v4708, %v4704
        %v5641 = vpack.c.b16 %v4713, %v4709
        %v5642 = vpack.c.b16 %v4714, %v4710
        %v5643 = vpack.c.b16 %v4715, %v4711
        %v5644 = vpack.c.b16 %v4716, %v4712
        %v5645 = vpack.c.b16 %v4721, %v4717
        %v5646 = vpack.c.b16 %v4722, %v4718
        %v5647 = vpack.c.b16 %v4723, %v4719
        %v5648 = vpack.c.b16 %v4724, %v4720
        %v5649 = vpack.c.b16 %v4729, %v4725
        %v5650 = vpack.c.b16 %v4730, %v4726
        %v5651 = vpack.c.b16 %v4731, %v4727
        %v5652 = vpack.c.b16 %v4732, %v4728
        %v5653 = vpack.c.b16 %v4737, %v4733
        %v5654 = vpack.c.b16 %v4738, %v4734
        %v5655 = vpack.c.b16 %v4739, %v4735
        %v5656 = vpack.c.b16 %v4740, %v4736
        %v5657 = vpack.c.b16 %v4745, %v4741
        %v5658 = vpack.c.b16 %v4746, %v4742
        %v5659 = vpack.c.b16 %v4747, %v4743
        %v5660 = vpack.c.b16 %v4748, %v4744
        %v5661 = vpack.c.b16 %v4753, %v4749
        %v5662 = vpack.c.b16 %v4754, %v4750
        %v5663 = vpack.c.b16 %v4755, %v4751
        %v5664 = vpack.c.b16 %v4756, %v4752
        %v5665 = vpack.c.b16 %v4761, %v4757
        %v5666 = vpack.c.b16 %v4762, %v4758
        %v5667 = vpack.c.b16 %v4763, %v4759
        %v5668 = vpack.c.b16 %v4764, %v4760
        %v5669 = vpack.c.b16 %v4769, %v4765
        %v5670 = vpack.c.b16 %v4770, %v4766
        %v5671 = vpack.c.b16 %v4771, %v4767
        %v5672 = vpack.c.b16 %v4772, %v4768
        %v5673 = vpack.c.b16 %v4777, %v4773
        %v5674 = vpack.c.b16 %v4778, %v4774
        %v5675 = vpack.c.b16 %v4779, %v4775
        %v5676 = vpack.c.b16 %v4780, %v4776
        %v5677 = vpack.c.b16 %v4785, %v4781
        %v5678 = vpack.c.b16 %v4786, %v4782
        %v5679 = vpack.c.b16 %v4787, %v4783
        %v5680 = vpack.c.b16 %v4788, %v4784
        %v5681 = vpack.c.b16 %v4793, %v4789
        %v5682 = vpack.c.b16 %v4794, %v4790
        %v5683 = vpack.c.b16 %v4795, %v4791
        %v5684 = vpack.c.b16 %v4796, %v4792
        %v5685 = vpack.c.b16 %v4801, %v4797
        %v5686 = vpack.c.b16 %v4802, %v4798
        %v5687 = vpack.c.b16 %v4803, %v4799
        %v5688 = vpack.c.b16 %v4804, %v4800
        %v5689 = vpack.c.b16 %v4809, %v4805
        %v5690 = vpack.c.b16 %v4810, %v4806
        %v5691 = vpack.c.b16 %v4811, %v4807
        %v5692 = vpack.c.b16 %v4812, %v4808
        %v5693 = vpack.c.b16 %v4817, %v4813
        %v5694 = vpack.c.b16 %v4818, %v4814
        %v5695 = vpack.c.b16 %v4819, %v4815
        %v5696 = vpack.c.b16 %v4820, %v4816
        %v5697 = vpack.c.b16 %v4825, %v4821
        %v5698 = vpack.c.b16 %v4826, %v4822
        %v5699 = vpack.c.b16 %v4827, %v4823
        %v5700 = vpack.c.b16 %v4828, %v4824
        %v5701 = vpack.c.b16 %v4833, %v4829
        %v5702 = vpack.c.b16 %v4834, %v4830
        %v5703 = vpack.c.b16 %v4835, %v4831
        %v5704 = vpack.c.b16 %v4836, %v4832
        %v5705 = vpack.c.b16 %v4841, %v4837
        %v5706 = vpack.c.b16 %v4842, %v4838
        %v5707 = vpack.c.b16 %v4843, %v4839
        %v5708 = vpack.c.b16 %v4844, %v4840
        %v5709 = vpack.c.b16 %v4849, %v4845
        %v5710 = vpack.c.b16 %v4850, %v4846
        %v5711 = vpack.c.b16 %v4851, %v4847
        %v5712 = vpack.c.b16 %v4852, %v4848
        %v5713 = vpack.c.b16 %v4857, %v4853
        %v5714 = vpack.c.b16 %v4858, %v4854
        %v5715 = vpack.c.b16 %v4859, %v4855
        %v5716 = vpack.c.b16 %v4860, %v4856
        %v5717 = vpack.c.b16 %v4865, %v4861
        %v5718 = vpack.c.b16 %v4866, %v4862
        %v5719 = vpack.c.b16 %v4867, %v4863
        %v5720 = vpack.c.b16 %v4868, %v4864
        %v5721 = vpack.c.b16 %v4873, %v4869
        %v5722 = vpack.c.b16 %v4874, %v4870
        %v5723 = vpack.c.b16 %v4875, %v4871
        %v5724 = vpack.c.b16 %v4876, %v4872
        %v5725 = vpack.c.b16 %v4881, %v4877
        %v5726 = vpack.c.b16 %v4882, %v4878
        %v5727 = vpack.c.b16 %v4883, %v4879
        %v5728 = vpack.c.b16 %v4884, %v4880
        %v5729 = vpack.c.b16 %v4889, %v4885
        %v5730 = vpack.c.b16 %v4890, %v4886
        %v5731 = vpack.c.b16 %v4891, %v4887
        %v5732 = vpack.c.b16 %v4892, %v4888
        %v5733 = vpack.c.b16 %v4897, %v4893
        %v5734 = vpack.c.b16 %v4898, %v4894
        %v5735 = vpack.c.b16 %v4899, %v4895
        %v5736 = vpack.c.b16 %v4900, %v4896
        %v5737 = vpack.c.b16 %v4905, %v4901
        %v5738 = vpack.c.b16 %v4906, %v4902
        %v5739 = vpack.c.b16 %v4907, %v4903
        %v5740 = vpack.c.b16 %v4908, %v4904
        %v5741 = vpack.c.b16 %v4913, %v4909
        %v5742 = vpack.c.b16 %v4914, %v4910
        %v5743 = vpack.c.b16 %v4915, %v4911
        %v5744 = vpack.c.b16 %v4916, %v4912
        %v5745 = vpack.c.b16 %v4921, %v4917
        %v5746 = vpack.c.b16 %v4922, %v4918
        %v5747 = vpack.c.b16 %v4923, %v4919
        %v5748 = vpack.c.b16 %v4924, %v4920
        %v5749 = vpack.c.b16 %v4929, %v4925
        %v5750 = vpack.c.b16 %v4930, %v4926
        %v5751 = vpack.c.b16 %v4931, %v4927
        %v5752 = vpack.c.b16 %v4932, %v4928
        %v5753 = vpack.c.b16 %v4937, %v4933
        %v5754 = vpack.c.b16 %v4938, %v4934
        %v5755 = vpack.c.b16 %v4939, %v4935
        %v5756 = vpack.c.b16 %v4940, %v4936
        %v5757 = vpack.c.b16 %v4945, %v4941
        %v5758 = vpack.c.b16 %v4946, %v4942
        %v5759 = vpack.c.b16 %v4947, %v4943
        %v5760 = vpack.c.b16 %v4948, %v4944
        %v5761 = vpack.c.b16 %v4953, %v4949
        %v5762 = vpack.c.b16 %v4954, %v4950
        %v5763 = vpack.c.b16 %v4955, %v4951
        %v5764 = vpack.c.b16 %v4956, %v4952
        %v5765 = vpack.c.b16 %v4961, %v4957
        %v5766 = vpack.c.b16 %v4962, %v4958
        %v5767 = vpack.c.b16 %v4963, %v4959
        %v5768 = vpack.c.b16 %v4964, %v4960
        %v5769 = vpack.c.b16 %v4969, %v4965
        %v5770 = vpack.c.b16 %v4970, %v4966
        %v5771 = vpack.c.b16 %v4971, %v4967
        %v5772 = vpack.c.b16 %v4972, %v4968
        %v5773 = vpack.c.b16 %v4977, %v4973
        %v5774 = vpack.c.b16 %v4978, %v4974
        %v5775 = vpack.c.b16 %v4979, %v4975
        %v5776 = vpack.c.b16 %v4980, %v4976
        %v5777 = vpack.c.b16 %v4985, %v4981
        %v5778 = vpack.c.b16 %v4986, %v4982
        %v5779 = vpack.c.b16 %v4987, %v4983
        %v5780 = vpack.c.b16 %v4988, %v4984
        %v5781 = vpack.c.b16 %v4993, %v4989
        %v5782 = vpack.c.b16 %v4994, %v4990
        %v5783 = vpack.c.b16 %v4995, %v4991
        %v5784 = vpack.c.b16 %v4996, %v4992
        %v5785 = vpack.c.b16 %v5001, %v4997
        %v5786 = vpack.c.b16 %v5002, %v4998
        %v5787 = vpack.c.b16 %v5003, %v4999
        %v5788 = vpack.c.b16 %v5004, %v5000
        %v5789 = vpack.c.b16 %v5009, %v5005
        %v5790 = vpack.c.b16 %v5010, %v5006
        %v5791 = vpack.c.b16 %v5011, %v5007
        %v5792 = vpack.c.b16 %v5012, %v5008
        %v5793 = vpack.c.b16 %v5017, %v5013
        %v5794 = vpack.c.b16 %v5018, %v5014
        %v5795 = vpack.c.b16 %v5019, %v5015
        %v5796 = vpack.c.b16 %v5020, %v5016
        %v5797 = vpack.c.b16 %v5025, %v5021
        %v5798 = vpack.c.b16 %v5026, %v5022
        %v5799 = vpack.c.b16 %v5027, %v5023
        %v5800 = vpack.c.b16 %v5028, %v5024
        %v5801 = vpack.c.b16 %v5033, %v5029
        %v5802 = vpack.c.b16 %v5034, %v5030
        %v5803 = vpack.c.b16 %v5035, %v5031
        %v5804 = vpack.c.b16 %v5036, %v5032
        %v5805 = vpack.c.b16 %v5041, %v5037
        %v5806 = vpack.c.b16 %v5042, %v5038
        %v5807 = vpack.c.b16 %v5043, %v5039
        %v5808 = vpack.c.b16 %v5044, %v5040
        %v5809 = vpack.c.b16 %v5049, %v5045
        %v5810 = vpack.c.b16 %v5050, %v5046
        %v5811 = vpack.c.b16 %v5051, %v5047
        %v5812 = vpack.c.b16 %v5052, %v5048
        %v5813 = vpack.c.b16 %v5057, %v5053
        %v5814 = vpack.c.b16 %v5058, %v5054
        %v5815 = vpack.c.b16 %v5059, %v5055
        %v5816 = vpack.c.b16 %v5060, %v5056
        %v5817 = vpack.c.b16 %v5065, %v5061
        %v5818 = vpack.c.b16 %v5066, %v5062
        %v5819 = vpack.c.b16 %v5067, %v5063
        %v5820 = vpack.c.b16 %v5068, %v5064
        %v5821 = vpack.c.b16 %v5073, %v5069
        %v5822 = vpack.c.b16 %v5074, %v5070
        %v5823 = vpack.c.b16 %v5075, %v5071
        %v5824 = vpack.c.b16 %v5076, %v5072
        %v5825 = vpack.c.b16 %v5081, %v5077
        %v5826 = vpack.c.b16 %v5082, %v5078
        %v5827 = vpack.c.b16 %v5083, %v5079
        %v5828 = vpack.c.b16 %v5084, %v5080
        %v5829 = vpack.c.b16 %v5089, %v5085
        %v5830 = vpack.c.b16 %v5090, %v5086
        %v5831 = vpack.c.b16 %v5091, %v5087
        %v5832 = vpack.c.b16 %v5092, %v5088
        %v5833 = vpack.c.b16 %v5097, %v5093
        %v5834 = vpack.c.b16 %v5098, %v5094
        %v5835 = vpack.c.b16 %v5099, %v5095
        %v5836 = vpack.c.b16 %v5100, %v5096
        %v5837 = vpack.c.b16 %v5105, %v5101
        %v5838 = vpack.c.b16 %v5106, %v5102
        %v5839 = vpack.c.b16 %v5107, %v5103
        %v5840 = vpack.c.b16 %v5108, %v5104
        %v5841 = vpack.c.b16 %v5113, %v5109
        %v5842 = vpack.c.b16 %v5114, %v5110
        %v5843 = vpack.c.b16 %v5115, %v5111
        %v5844 = vpack.c.b16 %v5116, %v5112
        %v5845 = vpack.c.b16 %v5121, %v5117
        %v5846 = vpack.c.b16 %v5122, %v5118
        %v5847 = vpack.c.b16 %v5123, %v5119
        %v5848 = vpack.c.b16 %v5124, %v5120
        %v5849 = vpack.c.b16 %v5129, %v5125
        %v5850 = vpack.c.b16 %v5130, %v5126
        %v5851 = vpack.c.b16 %v5131, %v5127
        %v5852 = vpack.c.b16 %v5132, %v5128
        %v5853 = vpack.c.b16 %v5137, %v5133
        %v5854 = vpack.c.b16 %v5138, %v5134
        %v5855 = vpack.c.b16 %v5139, %v5135
        %v5856 = vpack.c.b16 %v5140, %v5136
        %v5857 = vpack.c.b16 %v5145, %v5141
        %v5858 = vpack.c.b16 %v5146, %v5142
        %v5859 = vpack.c.b16 %v5147, %v5143
        %v5860 = vpack.c.b16 %v5148, %v5144
        %v5861 = vpack.c.b16 %v5153, %v5149
        %v5862 = vpack.c.b16 %v5154, %v5150
        %v5863 = vpack.c.b16 %v5155, %v5151
        %v5864 = vpack.c.b16 %v5156, %v5152
        %v5865 = vpack.c.b16 %v5161, %v5157
        %v5866 = vpack.c.b16 %v5162, %v5158
        %v5867 = vpack.c.b16 %v5163, %v5159
        %v5868 = vpack.c.b16 %v5164, %v5160
        %v5869 = vpack.c.b16 %v5169, %v5165
        %v5870 = vpack.c.b16 %v5170, %v5166
        %v5871 = vpack.c.b16 %v5171, %v5167
        %v5872 = vpack.c.b16 %v5172, %v5168
        %v5873 = vpack.c.b16 %v5177, %v5173
        %v5874 = vpack.c.b16 %v5178, %v5174
        %v5875 = vpack.c.b16 %v5179, %v5175
        %v5876 = vpack.c.b16 %v5180, %v5176
        %v5877 = vpack.c.b16 %v5185, %v5181
        %v5878 = vpack.c.b16 %v5186, %v5182
        %v5879 = vpack.c.b16 %v5187, %v5183
        %v5880 = vpack.c.b16 %v5188, %v5184
        %v5881 = vpack.c.b16 %v5193, %v5189
        %v5882 = vpack.c.b16 %v5194, %v5190
        %v5883 = vpack.c.b16 %v5195, %v5191
        %v5884 = vpack.c.b16 %v5196, %v5192
        %v5885 = vpack.c.b16 %v5201, %v5197
        %v5886 = vpack.c.b16 %v5202, %v5198
        %v5887 = vpack.c.b16 %v5203, %v5199
        %v5888 = vpack.c.b16 %v5204, %v5200
        %v5889 = vpack.c.b16 %v5209, %v5205
        %v5890 = vpack.c.b16 %v5210, %v5206
        %v5891 = vpack.c.b16 %v5211, %v5207
        %v5892 = vpack.c.b16 %v5212, %v5208
        %v5893 = vpack.c.b16 %v5217, %v5213
        %v5894 = vpack.c.b16 %v5218, %v5214
        %v5895 = vpack.c.b16 %v5219, %v5215
        %v5896 = vpack.c.b16 %v5220, %v5216
        %v5897 = vpack.c.b16 %v5225, %v5221
        %v5898 = vpack.c.b16 %v5226, %v5222
        %v5899 = vpack.c.b16 %v5227, %v5223
        %v5900 = vpack.c.b16 %v5228, %v5224
        %v5901 = vpack.c.b16 %v5233, %v5229
        %v5902 = vpack.c.b16 %v5234, %v5230
        %v5903 = vpack.c.b16 %v5235, %v5231
        %v5904 = vpack.c.b16 %v5236, %v5232
        %v5905 = vpack.c.b16 %v5241, %v5237
        %v5906 = vpack.c.b16 %v5242, %v5238
        %v5907 = vpack.c.b16 %v5243, %v5239
        %v5908 = vpack.c.b16 %v5244, %v5240
        %v5909 = vpack.c.b16 %v5249, %v5245
        %v5910 = vpack.c.b16 %v5250, %v5246
        %v5911 = vpack.c.b16 %v5251, %v5247
        %v5912 = vpack.c.b16 %v5252, %v5248
        %v5913 = vpack.c.b16 %v5257, %v5253
        %v5914 = vpack.c.b16 %v5258, %v5254
        %v5915 = vpack.c.b16 %v5259, %v5255
        %v5916 = vpack.c.b16 %v5260, %v5256
        %v5917 = vpack.c.b16 %v5265, %v5261
        %v5918 = vpack.c.b16 %v5266, %v5262
        %v5919 = vpack.c.b16 %v5267, %v5263
        %v5920 = vpack.c.b16 %v5268, %v5264
        %v5921 = vpack.c.b16 %v5273, %v5269
        %v5922 = vpack.c.b16 %v5274, %v5270
        %v5923 = vpack.c.b16 %v5275, %v5271
        %v5924 = vpack.c.b16 %v5276, %v5272
        %v5925 = vpack.c.b16 %v5281, %v5277
        %v5926 = vpack.c.b16 %v5282, %v5278
        %v5927 = vpack.c.b16 %v5283, %v5279
        %v5928 = vpack.c.b16 %v5284, %v5280
        %v5929 = vpack.c.b16 %v5289, %v5285
        %v5930 = vpack.c.b16 %v5290, %v5286
        %v5931 = vpack.c.b16 %v5291, %v5287
        %v5932 = vpack.c.b16 %v5292, %v5288
        %v5933 = vpack.c.b16 %v5297, %v5293
        %v5934 = vpack.c.b16 %v5298, %v5294
        %v5935 = vpack.c.b16 %v5299, %v5295
        %v5936 = vpack.c.b16 %v5300, %v5296
        %v5937 = vpack.c.b16 %v5305, %v5301
        %v5938 = vpack.c.b16 %v5306, %v5302
        %v5939 = vpack.c.b16 %v5307, %v5303
        %v5940 = vpack.c.b16 %v5308, %v5304
        %v5941 = vpack.c.b16 %v5313, %v5309
        %v5942 = vpack.c.b16 %v5314, %v5310
        %v5943 = vpack.c.b16 %v5315, %v5311
        %v5944 = vpack.c.b16 %v5316, %v5312
        %v5945 = vpack.c.b16 %v5321, %v5317
        %v5946 = vpack.c.b16 %v5322, %v5318
        %v5947 = vpack.c.b16 %v5323, %v5319
        %v5948 = vpack.c.b16 %v5324, %v5320
        %v5949 = vpack.c.b16 %v5329, %v5325
        %v5950 = vpack.c.b16 %v5330, %v5326
        %v5951 = vpack.c.b16 %v5331, %v5327
        %v5952 = vpack.c.b16 %v5332, %v5328
        %v5953 = vpack.c.b16 %v5337, %v5333
        %v5954 = vpack.c.b16 %v5338, %v5334
        %v5955 = vpack.c.b16 %v5339, %v5335
        %v5956 = vpack.c.b16 %v5340, %v5336
        %v5957 = vpack.c.b16 %v5345, %v5341
        %v5958 = vpack.c.b16 %v5346, %v5342
        %v5959 = vpack.c.b16 %v5347, %v5343
        %v5960 = vpack.c.b16 %v5348, %v5344
        %v5961 = vpack.c.b16 %v5353, %v5349
        %v5962 = vpack.c.b16 %v5354, %v5350
        %v5963 = vpack.c.b16 %v5355, %v5351
        %v5964 = vpack.c.b16 %v5356, %v5352
        %v5965 = vpack.c.b16 %v5361, %v5357
        %v5966 = vpack.c.b16 %v5362, %v5358
        %v5967 = vpack.c.b16 %v5363, %v5359
        %v5968 = vpack.c.b16 %v5364, %v5360
        %v5969 = vpack.c.b16 %v5369, %v5365
        %v5970 = vpack.c.b16 %v5370, %v5366
        %v5971 = vpack.c.b16 %v5371, %v5367
        %v5972 = vpack.c.b16 %v5372, %v5368
        %v5973 = vpack.c.b16 %v5377, %v5373
        %v5974 = vpack.c.b16 %v5378, %v5374
        %v5975 = vpack.c.b16 %v5379, %v5375
        %v5976 = vpack.c.b16 %v5380, %v5376
        %v5977 = vpack.c.b16 %v5385, %v5381
        %v5978 = vpack.c.b16 %v5386, %v5382
        %v5979 = vpack.c.b16 %v5387, %v5383
        %v5980 = vpack.c.b16 %v5388, %v5384
        %v5981 = vpack.c.b16 %v5393, %v5389
        %v5982 = vpack.c.b16 %v5394, %v5390
        %v5983 = vpack.c.b16 %v5395, %v5391
        %v5984 = vpack.c.b16 %v5396, %v5392
        %v5985 = vpack.c.b16 %v5401, %v5397
        %v5986 = vpack.c.b16 %v5402, %v5398
        %v5987 = vpack.c.b16 %v5403, %v5399
        %v5988 = vpack.c.b16 %v5404, %v5400
        %v5989 = vpack.c.b16 %v5409, %v5405
        %v5990 = vpack.c.b16 %v5410, %v5406
        %v5991 = vpack.c.b16 %v5411, %v5407
        %v5992 = vpack.c.b16 %v5412, %v5408
        %v5993 = vpack.c.b16 %v5417, %v5413
        %v5994 = vpack.c.b16 %v5418, %v5414
        %v5995 = vpack.c.b16 %v5419, %v5415
        %v5996 = vpack.c.b16 %v5420, %v5416
        %v5997 = vpack.c.b16 %v5425, %v5421
        %v5998 = vpack.c.b16 %v5426, %v5422
        %v5999 = vpack.c.b16 %v5427, %v5423
        %v6000 = vpack.c.b16 %v5428, %v5424
        %v6001 = vpack.c.b16 %v5433, %v5429
        %v6002 = vpack.c.b16 %v5434, %v5430
        %v6003 = vpack.c.b16 %v5435, %v5431
        %v6004 = vpack.c.b16 %v5436, %v5432
        %v6005 = vpack.c.b16 %v5441, %v5437
        %v6006 = vpack.c.b16 %v5442, %v5438
        %v6007 = vpack.c.b16 %v5443, %v5439
        %v6008 = vpack.c.b16 %v5444, %v5440
        %v6009 = vpack.c.b16 %v5449, %v5445
        %v6010 = vpack.c.b16 %v5450, %v5446
        %v6011 = vpack.c.b16 %v5451, %v5447
        %v6012 = vpack.c.b16 %v5452, %v5448
        %v6013 = vpack.c.b16 %v5457, %v5453
        %v6014 = vpack.c.b16 %v5458, %v5454
        %v6015 = vpack.c.b16 %v5459, %v5455
        %v6016 = vpack.c.b16 %v5460, %v5456
        %v6017 = vpack.c.b16 %v5465, %v5461
        %v6018 = vpack.c.b16 %v5466, %v5462
        %v6019 = vpack.c.b16 %v5467, %v5463
        %v6020 = vpack.c.b16 %v5468, %v5464
        %v6021 = vpack.c.b16 %v5473, %v5469
        %v6022 = vpack.c.b16 %v5474, %v5470
        %v6023 = vpack.c.b16 %v5475, %v5471
        %v6024 = vpack.c.b16 %v5476, %v5472
        %v6025 = vpack.c.b16 %v5481, %v5477
        %v6026 = vpack.c.b16 %v5482, %v5478
        %v6027 = vpack.c.b16 %v5483, %v5479
        %v6028 = vpack.c.b16 %v5484, %v5480
        %v6029 = vpack.c.b16 %v5489, %v5485
        %v6030 = vpack.c.b16 %v5490, %v5486
        %v6031 = vpack.c.b16 %v5491, %v5487
        %v6032 = vpack.c.b16 %v5492, %v5488
        %v6033 = vpack.c.b16 %v5497, %v5493
        %v6034 = vpack.c.b16 %v5498, %v5494
        %v6035 = vpack.c.b16 %v5499, %v5495
        %v6036 = vpack.c.b16 %v5500, %v5496
        %v6037 = vpack.c.b16 %v5505, %v5501
        %v6038 = vpack.c.b16 %v5506, %v5502
        %v6039 = vpack.c.b16 %v5507, %v5503
        %v6040 = vpack.c.b16 %v5508, %v5504
        %v6041 = vpack.c.b16 %v5513, %v5509
        %v6042 = vpack.c.b16 %v5514, %v5510
        %v6043 = vpack.c.b16 %v5515, %v5511
        %v6044 = vpack.c.b16 %v5516, %v5512
        %v6045 = vpack.c.b16 %v5521, %v5517
        %v6046 = vpack.c.b16 %v5522, %v5518
        %v6047 = vpack.c.b16 %v5523, %v5519
        %v6048 = vpack.c.b16 %v5524, %v5520
        %v6049 = vpack.c.b16 %v5529, %v5525
        %v6050 = vpack.c.b16 %v5530, %v5526
        %v6051 = vpack.c.b16 %v5531, %v5527
        %v6052 = vpack.c.b16 %v5532, %v5528
        %v6053 = vpack.c.b16 %v5537, %v5533
        %v6054 = vpack.c.b16 %v5538, %v5534
        %v6055 = vpack.c.b16 %v5539, %v5535
        %v6056 = vpack.c.b16 %v5540, %v5536
        %v6057 = vpack.c.b16 %v5545, %v5541
        %v6058 = vpack.c.b16 %v5546, %v5542
        %v6059 = vpack.c.b16 %v5547, %v5543
        %v6060 = vpack.c.b16 %v5548, %v5544
        %6573 = vmatprep.subr.bf16.mxu0 %v5550
        %6574 = vmatpush1.bf16.msra.mxu0 %v5549
        %6575 = vmatprep.subr.bf16.mxu0 %v5554
        %6576 = vmatpush1.bf16.msra.mxu0 %v5553
        %6577 = vmatprep.subr.bf16.mxu0 %v5558
        %6578 = vmatpush1.bf16.msra.mxu0 %v5557
        %6579 = vmatprep.subr.bf16.mxu0 %v5562
        %6580 = vmatpush1.bf16.msra.mxu0 %v5561
        %6581 = vmatprep.subr.bf16.mxu0 %v5566
        %6582 = vmatpush1.bf16.msra.mxu0 %v5565
        %6583 = vmatprep.subr.bf16.mxu0 %v5570
        %6584 = vmatpush1.bf16.msra.mxu0 %v5569
        %6585 = vmatprep.subr.bf16.mxu0 %v5574
        %6586 = vmatpush1.bf16.msra.mxu0 %v5573
        %6587 = vmatprep.subr.bf16.mxu0 %v5578
        %6588 = vmatpush1.bf16.msra.mxu0 %v5577
        %6589 = vmatprep.subr.bf16.mxu0 %v5582
        %6590 = vmatpush1.bf16.msra.mxu0 %v5581
        %6591 = vmatprep.subr.bf16.mxu0 %v5586
        %6592 = vmatpush1.bf16.msra.mxu0 %v5585
        %6593 = vmatprep.subr.bf16.mxu0 %v5590
        %6594 = vmatpush1.bf16.msra.mxu0 %v5589
        %6595 = vmatprep.subr.bf16.mxu0 %v5594
        %6596 = vmatpush1.bf16.msra.mxu0 %v5593
        %6597 = vmatprep.subr.bf16.mxu0 %v5598
        %6598 = vmatpush1.bf16.msra.mxu0 %v5597
        %6599 = vmatprep.subr.bf16.mxu0 %v5602
        %6600 = vmatpush1.bf16.msra.mxu0 %v5601
        %6601 = vmatprep.subr.bf16.mxu0 %v5606
        %6602 = vmatpush1.bf16.msra.mxu0 %v5605
        %6603 = vmatprep.subr.bf16.mxu0 %v5610
        %6604 = vmatpush1.bf16.msra.mxu0 %v5609
        %6605 = vmatprep.mubr.bf16.mxu0 %v3470
        %6606 = vmatmul.mubr.bf16.gmra.mrb[0].mxu0 %v3469
        %v6607 = vpop.f32.mrb[0].mxu0
        %v6608 = vadd.f32 %v4000, %v6607
        %v6609 = vpop.f32.mrb[0].mxu0
        %v6610 = vadd.f32 %v4004, %v6609
        %v6611 = vpop.f32.mrb[0].mxu0
        %v6612 = vpop.f32.mrb[0].mxu0
        %6613 = vdwg.mxu0
        %6614 = vmatprep.subr.bf16.mxu0 %v5614
        %6615 = vmatpush1.bf16.msra.mxu0 %v5613
        %6616 = vmatprep.subr.bf16.mxu0 %v5618
        %6617 = vmatpush1.bf16.msra.mxu0 %v5617
        %6618 = vmatprep.subr.bf16.mxu0 %v5622
        %6619 = vmatpush1.bf16.msra.mxu0 %v5621
        %6620 = vmatprep.subr.bf16.mxu0 %v5626
        %6621 = vmatpush1.bf16.msra.mxu0 %v5625
        %6622 = vmatprep.subr.bf16.mxu0 %v5630
        %6623 = vmatpush1.bf16.msra.mxu0 %v5629
        %6624 = vmatprep.subr.bf16.mxu0 %v5634
        %6625 = vmatpush1.bf16.msra.mxu0 %v5633
        %6626 = vmatprep.subr.bf16.mxu0 %v5638
        %6627 = vmatpush1.bf16.msra.mxu0 %v5637
        %6628 = vmatprep.subr.bf16.mxu0 %v5642
        %6629 = vmatpush1.bf16.msra.mxu0 %v5641
        %6630 = vmatprep.subr.bf16.mxu0 %v5646
        %6631 = vmatpush1.bf16.msra.mxu0 %v5645
        %6632 = vmatprep.subr.bf16.mxu0 %v5650
        %6633 = vmatpush1.bf16.msra.mxu0 %v5649
        %6634 = vmatprep.subr.bf16.mxu0 %v5654
        %6635 = vmatpush1.bf16.msra.mxu0 %v5653
        %6636 = vmatprep.subr.bf16.mxu0 %v5658
        %6637 = vmatpush1.bf16.msra.mxu0 %v5657
        %6638 = vmatprep.subr.bf16.mxu0 %v5662
        %6639 = vmatpush1.bf16.msra.mxu0 %v5661
        %6640 = vmatprep.subr.bf16.mxu0 %v5666
        %6641 = vmatpush1.bf16.msra.mxu0 %v5665
        %6642 = vmatprep.subr.bf16.mxu0 %v5670
        %6643 = vmatpush1.bf16.msra.mxu0 %v5669
        %6644 = vmatprep.subr.bf16.mxu0 %v5674
        %6645 = vmatpush1.bf16.msra.mxu0 %v5673
        %6646 = vmatprep.mubr.bf16.mxu0 %v3472
        %6647 = vmatmul.mubr.bf16.gmra.mrb[0].mxu0 %v3471
        %v6648 = vpop.f32.mrb[0].mxu0
        %v6649 = vadd.f32 %v6608, %v6648
        %v6650 = vpop.f32.mrb[0].mxu0
        %v6651 = vadd.f32 %v6610, %v6650
        %v6652 = vpop.f32.mrb[0].mxu0
        %v6653 = vpop.f32.mrb[0].mxu0
        %6654 = vdwg.mxu0
        %6655 = vmatprep.subr.bf16.mxu0 %v5678
        %6656 = vmatpush1.bf16.msra.mxu0 %v5677
        %6657 = vmatprep.subr.bf16.mxu0 %v5682
        %6658 = vmatpush1.bf16.msra.mxu0 %v5681
        %6659 = vmatprep.subr.bf16.mxu0 %v5686
        %6660 = vmatpush1.bf16.msra.mxu0 %v5685
        %6661 = vmatprep.subr.bf16.mxu0 %v5690
        %6662 = vmatpush1.bf16.msra.mxu0 %v5689
        %6663 = vmatprep.subr.bf16.mxu0 %v5694
        %6664 = vmatpush1.bf16.msra.mxu0 %v5693
        %6665 = vmatprep.subr.bf16.mxu0 %v5698
        %6666 = vmatpush1.bf16.msra.mxu0 %v5697
        %6667 = vmatprep.subr.bf16.mxu0 %v5702
        %6668 = vmatpush1.bf16.msra.mxu0 %v5701
        %6669 = vmatprep.subr.bf16.mxu0 %v5706
        %6670 = vmatpush1.bf16.msra.mxu0 %v5705
        %6671 = vmatprep.subr.bf16.mxu0 %v5710
        %6672 = vmatpush1.bf16.msra.mxu0 %v5709
        %6673 = vmatprep.subr.bf16.mxu0 %v5714
        %6674 = vmatpush1.bf16.msra.mxu0 %v5713
        %6675 = vmatprep.subr.bf16.mxu0 %v5718
        %6676 = vmatpush1.bf16.msra.mxu0 %v5717
        %6677 = vmatprep.subr.bf16.mxu0 %v5722
        %6678 = vmatpush1.bf16.msra.mxu0 %v5721
        %6679 = vmatprep.subr.bf16.mxu0 %v5726
        %6680 = vmatpush1.bf16.msra.mxu0 %v5725
        %6681 = vmatprep.subr.bf16.mxu0 %v5730
        %6682 = vmatpush1.bf16.msra.mxu0 %v5729
        %6683 = vmatprep.subr.bf16.mxu0 %v5734
        %6684 = vmatpush1.bf16.msra.mxu0 %v5733
        %6685 = vmatprep.subr.bf16.mxu0 %v5738
        %6686 = vmatpush1.bf16.msra.mxu0 %v5737
        %6687 = vmatprep.mubr.bf16.mxu0 %v3474
        %6688 = vmatmul.mubr.bf16.gmra.mrb[0].mxu0 %v3473
        %v6689 = vpop.f32.mrb[0].mxu0
        %v6690 = vadd.f32 %v6649, %v6689
        %v6691 = vpop.f32.mrb[0].mxu0
        %v6692 = vadd.f32 %v6651, %v6691
        %v6693 = vpop.f32.mrb[0].mxu0
        %v6694 = vpop.f32.mrb[0].mxu0
        %6695 = vdwg.mxu0
        %6696 = vmatprep.subr.bf16.mxu0 %v5742
        %6697 = vmatpush1.bf16.msra.mxu0 %v5741
        %6698 = vmatprep.subr.bf16.mxu0 %v5746
        %6699 = vmatpush1.bf16.msra.mxu0 %v5745
        %6700 = vmatprep.subr.bf16.mxu0 %v5750
        %6701 = vmatpush1.bf16.msra.mxu0 %v5749
        %6702 = vmatprep.subr.bf16.mxu0 %v5754
        %6703 = vmatpush1.bf16.msra.mxu0 %v5753
        %6704 = vmatprep.subr.bf16.mxu0 %v5758
        %6705 = vmatpush1.bf16.msra.mxu0 %v5757
        %6706 = vmatprep.subr.bf16.mxu0 %v5762
        %6707 = vmatpush1.bf16.msra.mxu0 %v5761
        %6708 = vmatprep.subr.bf16.mxu0 %v5766
        %6709 = vmatpush1.bf16.msra.mxu0 %v5765
        %6710 = vmatprep.subr.bf16.mxu0 %v5770
        %6711 = vmatpush1.bf16.msra.mxu0 %v5769
        %6712 = vmatprep.subr.bf16.mxu0 %v5774
        %6713 = vmatpush1.bf16.msra.mxu0 %v5773
        %6714 = vmatprep.subr.bf16.mxu0 %v5778
        %6715 = vmatpush1.bf16.msra.mxu0 %v5777
        %6716 = vmatprep.subr.bf16.mxu0 %v5782
        %6717 = vmatpush1.bf16.msra.mxu0 %v5781
        %6718 = vmatprep.subr.bf16.mxu0 %v5786
        %6719 = vmatpush1.bf16.msra.mxu0 %v5785
        %6720 = vmatprep.subr.bf16.mxu0 %v5790
        %6721 = vmatpush1.bf16.msra.mxu0 %v5789
        %6722 = vmatprep.subr.bf16.mxu0 %v5794
        %6723 = vmatpush1.bf16.msra.mxu0 %v5793
        %6724 = vmatprep.subr.bf16.mxu0 %v5798
        %6725 = vmatpush1.bf16.msra.mxu0 %v5797
        %6726 = vmatprep.subr.bf16.mxu0 %v5802
        %6727 = vmatpush1.bf16.msra.mxu0 %v5801
        %6728 = vmatprep.mubr.bf16.mxu0 %v3476
        %6729 = vmatmul.mubr.bf16.gmra.mrb[0].mxu0 %v3475
        %v6730 = vpop.f32.mrb[0].mxu0
        %v6731 = vadd.f32 %v6690, %v6730
        %v6732 = vpop.f32.mrb[0].mxu0
        %v6733 = vadd.f32 %v6692, %v6732
        %v6734 = vpop.f32.mrb[0].mxu0
        %v6735 = vpop.f32.mrb[0].mxu0
        %6736 = vdwg.mxu0
        %6737 = vmatprep.subr.bf16.mxu0 %v5806
        %6738 = vmatpush1.bf16.msra.mxu0 %v5805
        %6739 = vmatprep.subr.bf16.mxu0 %v5810
        %6740 = vmatpush1.bf16.msra.mxu0 %v5809
        %6741 = vmatprep.subr.bf16.mxu0 %v5814
        %6742 = vmatpush1.bf16.msra.mxu0 %v5813
        %6743 = vmatprep.subr.bf16.mxu0 %v5818
        %6744 = vmatpush1.bf16.msra.mxu0 %v5817
        %6745 = vmatprep.subr.bf16.mxu0 %v5822
        %6746 = vmatpush1.bf16.msra.mxu0 %v5821
        %6747 = vmatprep.subr.bf16.mxu0 %v5826
        %6748 = vmatpush1.bf16.msra.mxu0 %v5825
        %6749 = vmatprep.subr.bf16.mxu0 %v5830
        %6750 = vmatpush1.bf16.msra.mxu0 %v5829
        %6751 = vmatprep.subr.bf16.mxu0 %v5834
        %6752 = vmatpush1.bf16.msra.mxu0 %v5833
        %6753 = vmatprep.subr.bf16.mxu0 %v5838
        %6754 = vmatpush1.bf16.msra.mxu0 %v5837
        %6755 = vmatprep.subr.bf16.mxu0 %v5842
        %6756 = vmatpush1.bf16.msra.mxu0 %v5841
        %6757 = vmatprep.subr.bf16.mxu0 %v5846
        %6758 = vmatpush1.bf16.msra.mxu0 %v5845
        %6759 = vmatprep.subr.bf16.mxu0 %v5850
        %6760 = vmatpush1.bf16.msra.mxu0 %v5849
        %6761 = vmatprep.subr.bf16.mxu0 %v5854
        %6762 = vmatpush1.bf16.msra.mxu0 %v5853
        %6763 = vmatprep.subr.bf16.mxu0 %v5858
        %6764 = vmatpush1.bf16.msra.mxu0 %v5857
        %6765 = vmatprep.subr.bf16.mxu0 %v5862
        %6766 = vmatpush1.bf16.msra.mxu0 %v5861
        %6767 = vmatprep.subr.bf16.mxu0 %v5866
        %6768 = vmatpush1.bf16.msra.mxu0 %v5865
        %6769 = vmatprep.mubr.bf16.mxu0 %v3478
        %6770 = vmatmul.mubr.bf16.gmra.mrb[0].mxu0 %v3477
        %v6771 = vpop.f32.mrb[0].mxu0
        %v6772 = vadd.f32 %v6731, %v6771
        %v6773 = vpop.f32.mrb[0].mxu0
        %v6774 = vadd.f32 %v6733, %v6773
        %v6775 = vpop.f32.mrb[0].mxu0
        %v6776 = vpop.f32.mrb[0].mxu0
        %6777 = vdwg.mxu0
        %6778 = vmatprep.subr.bf16.mxu0 %v5870
        %6779 = vmatpush1.bf16.msra.mxu0 %v5869
        %6780 = vmatprep.subr.bf16.mxu0 %v5874
        %6781 = vmatpush1.bf16.msra.mxu0 %v5873
        %6782 = vmatprep.subr.bf16.mxu0 %v5878
        %6783 = vmatpush1.bf16.msra.mxu0 %v5877
        %6784 = vmatprep.subr.bf16.mxu0 %v5882
        %6785 = vmatpush1.bf16.msra.mxu0 %v5881
        %6786 = vmatprep.subr.bf16.mxu0 %v5886
        %6787 = vmatpush1.bf16.msra.mxu0 %v5885
        %6788 = vmatprep.subr.bf16.mxu0 %v5890
        %6789 = vmatpush1.bf16.msra.mxu0 %v5889
        %6790 = vmatprep.subr.bf16.mxu0 %v5894
        %6791 = vmatpush1.bf16.msra.mxu0 %v5893
        %6792 = vmatprep.subr.bf16.mxu0 %v5898
        %6793 = vmatpush1.bf16.msra.mxu0 %v5897
        %6794 = vmatprep.subr.bf16.mxu0 %v5902
        %6795 = vmatpush1.bf16.msra.mxu0 %v5901
        %6796 = vmatprep.subr.bf16.mxu0 %v5906
        %6797 = vmatpush1.bf16.msra.mxu0 %v5905
        %6798 = vmatprep.subr.bf16.mxu0 %v5910
        %6799 = vmatpush1.bf16.msra.mxu0 %v5909
        %6800 = vmatprep.subr.bf16.mxu0 %v5914
        %6801 = vmatpush1.bf16.msra.mxu0 %v5913
        %6802 = vmatprep.subr.bf16.mxu0 %v5918
        %6803 = vmatpush1.bf16.msra.mxu0 %v5917
        %6804 = vmatprep.subr.bf16.mxu0 %v5922
        %6805 = vmatpush1.bf16.msra.mxu0 %v5921
        %6806 = vmatprep.subr.bf16.mxu0 %v5926
        %6807 = vmatpush1.bf16.msra.mxu0 %v5925
        %6808 = vmatprep.subr.bf16.mxu0 %v5930
        %6809 = vmatpush1.bf16.msra.mxu0 %v5929
        %6810 = vmatprep.mubr.bf16.mxu0 %v3480
        %6811 = vmatmul.mubr.bf16.gmra.mrb[0].mxu0 %v3479
        %v6812 = vpop.f32.mrb[0].mxu0
        %v6813 = vadd.f32 %v6772, %v6812
        %v6814 = vpop.f32.mrb[0].mxu0
        %v6815 = vadd.f32 %v6774, %v6814
        %v6816 = vpop.f32.mrb[0].mxu0
        %v6817 = vpop.f32.mrb[0].mxu0
        %6818 = vdwg.mxu0
        %6819 = vmatprep.subr.bf16.mxu0 %v5934
        %6820 = vmatpush1.bf16.msra.mxu0 %v5933
        %6821 = vmatprep.subr.bf16.mxu0 %v5938
        %6822 = vmatpush1.bf16.msra.mxu0 %v5937
        %6823 = vmatprep.subr.bf16.mxu0 %v5942
        %6824 = vmatpush1.bf16.msra.mxu0 %v5941
        %6825 = vmatprep.subr.bf16.mxu0 %v5946
        %6826 = vmatpush1.bf16.msra.mxu0 %v5945
        %6827 = vmatprep.subr.bf16.mxu0 %v5950
        %6828 = vmatpush1.bf16.msra.mxu0 %v5949
        %6829 = vmatprep.subr.bf16.mxu0 %v5954
        %6830 = vmatpush1.bf16.msra.mxu0 %v5953
        %6831 = vmatprep.subr.bf16.mxu0 %v5958
        %6832 = vmatpush1.bf16.msra.mxu0 %v5957
        %6833 = vmatprep.subr.bf16.mxu0 %v5962
        %6834 = vmatpush1.bf16.msra.mxu0 %v5961
        %6835 = vmatprep.subr.bf16.mxu0 %v5966
        %6836 = vmatpush1.bf16.msra.mxu0 %v5965
        %6837 = vmatprep.subr.bf16.mxu0 %v5970
        %6838 = vmatpush1.bf16.msra.mxu0 %v5969
        %6839 = vmatprep.subr.bf16.mxu0 %v5974
        %6840 = vmatpush1.bf16.msra.mxu0 %v5973
        %6841 = vmatprep.subr.bf16.mxu0 %v5978
        %6842 = vmatpush1.bf16.msra.mxu0 %v5977
        %6843 = vmatprep.subr.bf16.mxu0 %v5982
        %6844 = vmatpush1.bf16.msra.mxu0 %v5981
        %6845 = vmatprep.subr.bf16.mxu0 %v5986
        %6846 = vmatpush1.bf16.msra.mxu0 %v5985
        %6847 = vmatprep.subr.bf16.mxu0 %v5990
        %6848 = vmatpush1.bf16.msra.mxu0 %v5989
        %6849 = vmatprep.subr.bf16.mxu0 %v5994
        %6850 = vmatpush1.bf16.msra.mxu0 %v5993
        %6851 = vmatprep.mubr.bf16.mxu0 %v3482
        %6852 = vmatmul.mubr.bf16.gmra.mrb[0].mxu0 %v3481
        %v6853 = vpop.f32.mrb[0].mxu0
        %v6854 = vadd.f32 %v6813, %v6853
        %v6855 = vpop.f32.mrb[0].mxu0
        %v6856 = vadd.f32 %v6815, %v6855
        %v6857 = vpop.f32.mrb[0].mxu0
        %v6858 = vpop.f32.mrb[0].mxu0
        %6859 = vdwg.mxu0
        %6860 = vmatprep.subr.bf16.mxu0 %v5998
        %6861 = vmatpush1.bf16.msra.mxu0 %v5997
        %6862 = vmatprep.subr.bf16.mxu0 %v6002
        %6863 = vmatpush1.bf16.msra.mxu0 %v6001
        %6864 = vmatprep.subr.bf16.mxu0 %v6006
        %6865 = vmatpush1.bf16.msra.mxu0 %v6005
        %6866 = vmatprep.subr.bf16.mxu0 %v6010
        %6867 = vmatpush1.bf16.msra.mxu0 %v6009
        %6868 = vmatprep.subr.bf16.mxu0 %v6014
        %6869 = vmatpush1.bf16.msra.mxu0 %v6013
        %6870 = vmatprep.subr.bf16.mxu0 %v6018
        %6871 = vmatpush1.bf16.msra.mxu0 %v6017
        %6872 = vmatprep.subr.bf16.mxu0 %v6022
        %6873 = vmatpush1.bf16.msra.mxu0 %v6021
        %6874 = vmatprep.subr.bf16.mxu0 %v6026
        %6875 = vmatpush1.bf16.msra.mxu0 %v6025
        %6876 = vmatprep.subr.bf16.mxu0 %v6030
        %6877 = vmatpush1.bf16.msra.mxu0 %v6029
        %6878 = vmatprep.subr.bf16.mxu0 %v6034
        %6879 = vmatpush1.bf16.msra.mxu0 %v6033
        %6880 = vmatprep.subr.bf16.mxu0 %v6038
        %6881 = vmatpush1.bf16.msra.mxu0 %v6037
        %6882 = vmatprep.subr.bf16.mxu0 %v6042
        %6883 = vmatpush1.bf16.msra.mxu0 %v6041
        %6884 = vmatprep.subr.bf16.mxu0 %v6046
        %6885 = vmatpush1.bf16.msra.mxu0 %v6045
        %6886 = vmatprep.subr.bf16.mxu0 %v6050
        %6887 = vmatpush1.bf16.msra.mxu0 %v6049
        %6888 = vmatprep.subr.bf16.mxu0 %v6054
        %6889 = vmatpush1.bf16.msra.mxu0 %v6053
        %6890 = vmatprep.subr.bf16.mxu0 %v6058
        %6891 = vmatpush1.bf16.msra.mxu0 %v6057
        %6892 = vmatprep.mubr.bf16.mxu0 %v3484
        %6893 = vmatmul.mubr.bf16.gmra.mrb[0].mxu0 %v3483
        %v6894 = vpop.f32.mrb[0].mxu0
        %v6895 = vadd.f32 %v6854, %v6894
        %v6896 = vpop.f32.mrb[0].mxu0
        %v6897 = vadd.f32 %v6856, %v6896
        %v6898 = vpop.f32.mrb[0].mxu0
        %v6899 = vpop.f32.mrb[0].mxu0
        %6900 = vdwg.mxu0
        %6901 = vmatprep.subr.bf16.mxu0 %v5552
        %6902 = vmatpush1.bf16.msra.mxu0 %v5551
        %6903 = vmatprep.subr.bf16.mxu0 %v5556
        %6904 = vmatpush1.bf16.msra.mxu0 %v5555
        %6905 = vmatprep.subr.bf16.mxu0 %v5560
        %6906 = vmatpush1.bf16.msra.mxu0 %v5559
        %6907 = vmatprep.subr.bf16.mxu0 %v5564
        %6908 = vmatpush1.bf16.msra.mxu0 %v5563
        %6909 = vmatprep.subr.bf16.mxu0 %v5568
        %6910 = vmatpush1.bf16.msra.mxu0 %v5567
        %6911 = vmatprep.subr.bf16.mxu0 %v5572
        %6912 = vmatpush1.bf16.msra.mxu0 %v5571
        %6913 = vmatprep.subr.bf16.mxu0 %v5576
        %6914 = vmatpush1.bf16.msra.mxu0 %v5575
        %6915 = vmatprep.subr.bf16.mxu0 %v5580
        %6916 = vmatpush1.bf16.msra.mxu0 %v5579
        %6917 = vmatprep.subr.bf16.mxu0 %v5584
        %6918 = vmatpush1.bf16.msra.mxu0 %v5583
        %6919 = vmatprep.subr.bf16.mxu0 %v5588
        %6920 = vmatpush1.bf16.msra.mxu0 %v5587
        %6921 = vmatprep.subr.bf16.mxu0 %v5592
        %6922 = vmatpush1.bf16.msra.mxu0 %v5591
        %6923 = vmatprep.subr.bf16.mxu0 %v5596
        %6924 = vmatpush1.bf16.msra.mxu0 %v5595
        %6925 = vmatprep.subr.bf16.mxu0 %v5600
        %6926 = vmatpush1.bf16.msra.mxu0 %v5599
        %6927 = vmatprep.subr.bf16.mxu0 %v5604
        %6928 = vmatpush1.bf16.msra.mxu0 %v5603
        %6929 = vmatprep.subr.bf16.mxu0 %v5608
        %6930 = vmatpush1.bf16.msra.mxu0 %v5607
        %6931 = vmatprep.subr.bf16.mxu0 %v5612
        %6932 = vmatpush1.bf16.msra.mxu0 %v5611
        %6933 = vmatprep.mubr.bf16.mxu0 %v3470
        %6934 = vmatmul.mubr.bf16.gmra.mrb[0].mxu0 %v3469
        %v6935 = vpop.f32.mrb[0].mxu0
        %v6936 = vadd.f32 %v4008, %v6935
        %v6937 = vpop.f32.mrb[0].mxu0
        %v6938 = vadd.f32 %v4012, %v6937
        %v6939 = vpop.f32.mrb[0].mxu0
        %v6940 = vpop.f32.mrb[0].mxu0
        %6941 = vdwg.mxu0
        %6942 = vmatprep.subr.bf16.mxu0 %v5616
        %6943 = vmatpush1.bf16.msra.mxu0 %v5615
        %6944 = vmatprep.subr.bf16.mxu0 %v5620
        %6945 = vmatpush1.bf16.msra.mxu0 %v5619
        %6946 = vmatprep.subr.bf16.mxu0 %v5624
        %6947 = vmatpush1.bf16.msra.mxu0 %v5623
        %6948 = vmatprep.subr.bf16.mxu0 %v5628
        %6949 = vmatpush1.bf16.msra.mxu0 %v5627
        %6950 = vmatprep.subr.bf16.mxu0 %v5632
        %6951 = vmatpush1.bf16.msra.mxu0 %v5631
        %6952 = vmatprep.subr.bf16.mxu0 %v5636
        %6953 = vmatpush1.bf16.msra.mxu0 %v5635
        %6954 = vmatprep.subr.bf16.mxu0 %v5640
        %6955 = vmatpush1.bf16.msra.mxu0 %v5639
        %6956 = vmatprep.subr.bf16.mxu0 %v5644
        %6957 = vmatpush1.bf16.msra.mxu0 %v5643
        %6958 = vmatprep.subr.bf16.mxu0 %v5648
        %6959 = vmatpush1.bf16.msra.mxu0 %v5647
        %6960 = vmatprep.subr.bf16.mxu0 %v5652
        %6961 = vmatpush1.bf16.msra.mxu0 %v5651
        %6962 = vmatprep.subr.bf16.mxu0 %v5656
        %6963 = vmatpush1.bf16.msra.mxu0 %v5655
        %6964 = vmatprep.subr.bf16.mxu0 %v5660
        %6965 = vmatpush1.bf16.msra.mxu0 %v5659
        %6966 = vmatprep.subr.bf16.mxu0 %v5664
        %6967 = vmatpush1.bf16.msra.mxu0 %v5663
        %6968 = vmatprep.subr.bf16.mxu0 %v5668
        %6969 = vmatpush1.bf16.msra.mxu0 %v5667
        %6970 = vmatprep.subr.bf16.mxu0 %v5672
        %6971 = vmatpush1.bf16.msra.mxu0 %v5671
        %6972 = vmatprep.subr.bf16.mxu0 %v5676
        %6973 = vmatpush1.bf16.msra.mxu0 %v5675
        %6974 = vmatprep.mubr.bf16.mxu0 %v3472
        %6975 = vmatmul.mubr.bf16.gmra.mrb[0].mxu0 %v3471
        %v6976 = vpop.f32.mrb[0].mxu0
        %v6977 = vadd.f32 %v6936, %v6976
        %v6978 = vpop.f32.mrb[0].mxu0
        %v6979 = vadd.f32 %v6938, %v6978
        %v6980 = vpop.f32.mrb[0].mxu0
        %v6981 = vpop.f32.mrb[0].mxu0
        %6982 = vdwg.mxu0
        %6983 = vmatprep.subr.bf16.mxu0 %v5680
        %6984 = vmatpush1.bf16.msra.mxu0 %v5679
        %6985 = vmatprep.subr.bf16.mxu0 %v5684
        %6986 = vmatpush1.bf16.msra.mxu0 %v5683
        %6987 = vmatprep.subr.bf16.mxu0 %v5688
        %6988 = vmatpush1.bf16.msra.mxu0 %v5687
        %6989 = vmatprep.subr.bf16.mxu0 %v5692
        %6990 = vmatpush1.bf16.msra.mxu0 %v5691
        %6991 = vmatprep.subr.bf16.mxu0 %v5696
        %6992 = vmatpush1.bf16.msra.mxu0 %v5695
        %6993 = vmatprep.subr.bf16.mxu0 %v5700
        %6994 = vmatpush1.bf16.msra.mxu0 %v5699
        %6995 = vmatprep.subr.bf16.mxu0 %v5704
        %6996 = vmatpush1.bf16.msra.mxu0 %v5703
        %6997 = vmatprep.subr.bf16.mxu0 %v5708
        %6998 = vmatpush1.bf16.msra.mxu0 %v5707
        %6999 = vmatprep.subr.bf16.mxu0 %v5712
        %7000 = vmatpush1.bf16.msra.mxu0 %v5711
        %7001 = vmatprep.subr.bf16.mxu0 %v5716
        %7002 = vmatpush1.bf16.msra.mxu0 %v5715
        %7003 = vmatprep.subr.bf16.mxu0 %v5720
        %7004 = vmatpush1.bf16.msra.mxu0 %v5719
        %7005 = vmatprep.subr.bf16.mxu0 %v5724
        %7006 = vmatpush1.bf16.msra.mxu0 %v5723
        %7007 = vmatprep.subr.bf16.mxu0 %v5728
        %7008 = vmatpush1.bf16.msra.mxu0 %v5727
        %7009 = vmatprep.subr.bf16.mxu0 %v5732
        %7010 = vmatpush1.bf16.msra.mxu0 %v5731
        %7011 = vmatprep.subr.bf16.mxu0 %v5736
        %7012 = vmatpush1.bf16.msra.mxu0 %v5735
        %7013 = vmatprep.subr.bf16.mxu0 %v5740
        %7014 = vmatpush1.bf16.msra.mxu0 %v5739
        %7015 = vmatprep.mubr.bf16.mxu0 %v3474
        %7016 = vmatmul.mubr.bf16.gmra.mrb[0].mxu0 %v3473
        %v7017 = vpop.f32.mrb[0].mxu0
        %v7018 = vadd.f32 %v6977, %v7017
        %v7019 = vpop.f32.mrb[0].mxu0
        %v7020 = vadd.f32 %v6979, %v7019
        %v7021 = vpop.f32.mrb[0].mxu0
        %v7022 = vpop.f32.mrb[0].mxu0
        %7023 = vdwg.mxu0
        %7024 = vmatprep.subr.bf16.mxu0 %v5744
        %7025 = vmatpush1.bf16.msra.mxu0 %v5743
        %7026 = vmatprep.subr.bf16.mxu0 %v5748
        %7027 = vmatpush1.bf16.msra.mxu0 %v5747
        %7028 = vmatprep.subr.bf16.mxu0 %v5752
        %7029 = vmatpush1.bf16.msra.mxu0 %v5751
        %7030 = vmatprep.subr.bf16.mxu0 %v5756
        %7031 = vmatpush1.bf16.msra.mxu0 %v5755
        %7032 = vmatprep.subr.bf16.mxu0 %v5760
        %7033 = vmatpush1.bf16.msra.mxu0 %v5759
        %7034 = vmatprep.subr.bf16.mxu0 %v5764
        %7035 = vmatpush1.bf16.msra.mxu0 %v5763
        %7036 = vmatprep.subr.bf16.mxu0 %v5768
        %7037 = vmatpush1.bf16.msra.mxu0 %v5767
        %7038 = vmatprep.subr.bf16.mxu0 %v5772
        %7039 = vmatpush1.bf16.msra.mxu0 %v5771
        %7040 = vmatprep.subr.bf16.mxu0 %v5776
        %7041 = vmatpush1.bf16.msra.mxu0 %v5775
        %7042 = vmatprep.subr.bf16.mxu0 %v5780
        %7043 = vmatpush1.bf16.msra.mxu0 %v5779
        %7044 = vmatprep.subr.bf16.mxu0 %v5784
        %7045 = vmatpush1.bf16.msra.mxu0 %v5783
        %7046 = vmatprep.subr.bf16.mxu0 %v5788
        %7047 = vmatpush1.bf16.msra.mxu0 %v5787
        %7048 = vmatprep.subr.bf16.mxu0 %v5792
        %7049 = vmatpush1.bf16.msra.mxu0 %v5791
        %7050 = vmatprep.subr.bf16.mxu0 %v5796
        %7051 = vmatpush1.bf16.msra.mxu0 %v5795
        %7052 = vmatprep.subr.bf16.mxu0 %v5800
        %7053 = vmatpush1.bf16.msra.mxu0 %v5799
        %7054 = vmatprep.subr.bf16.mxu0 %v5804
        %7055 = vmatpush1.bf16.msra.mxu0 %v5803
        %7056 = vmatprep.mubr.bf16.mxu0 %v3476
        %7057 = vmatmul.mubr.bf16.gmra.mrb[0].mxu0 %v3475
        %v7058 = vpop.f32.mrb[0].mxu0
        %v7059 = vadd.f32 %v7018, %v7058
        %v7060 = vpop.f32.mrb[0].mxu0
        %v7061 = vadd.f32 %v7020, %v7060
        %v7062 = vpop.f32.mrb[0].mxu0
        %v7063 = vpop.f32.mrb[0].mxu0
        %7064 = vdwg.mxu0
        %7065 = vmatprep.subr.bf16.mxu0 %v5808
        %7066 = vmatpush1.bf16.msra.mxu0 %v5807
        %7067 = vmatprep.subr.bf16.mxu0 %v5812
        %7068 = vmatpush1.bf16.msra.mxu0 %v5811
        %7069 = vmatprep.subr.bf16.mxu0 %v5816
        %7070 = vmatpush1.bf16.msra.mxu0 %v5815
        %7071 = vmatprep.subr.bf16.mxu0 %v5820
        %7072 = vmatpush1.bf16.msra.mxu0 %v5819
        %7073 = vmatprep.subr.bf16.mxu0 %v5824
        %7074 = vmatpush1.bf16.msra.mxu0 %v5823
        %7075 = vmatprep.subr.bf16.mxu0 %v5828
        %7076 = vmatpush1.bf16.msra.mxu0 %v5827
        %7077 = vmatprep.subr.bf16.mxu0 %v5832
        %7078 = vmatpush1.bf16.msra.mxu0 %v5831
        %7079 = vmatprep.subr.bf16.mxu0 %v5836
        %7080 = vmatpush1.bf16.msra.mxu0 %v5835
        %7081 = vmatprep.subr.bf16.mxu0 %v5840
        %7082 = vmatpush1.bf16.msra.mxu0 %v5839
        %7083 = vmatprep.subr.bf16.mxu0 %v5844
        %7084 = vmatpush1.bf16.msra.mxu0 %v5843
        %7085 = vmatprep.subr.bf16.mxu0 %v5848
        %7086 = vmatpush1.bf16.msra.mxu0 %v5847
        %7087 = vmatprep.subr.bf16.mxu0 %v5852
        %7088 = vmatpush1.bf16.msra.mxu0 %v5851
        %7089 = vmatprep.subr.bf16.mxu0 %v5856
        %7090 = vmatpush1.bf16.msra.mxu0 %v5855
        %7091 = vmatprep.subr.bf16.mxu0 %v5860
        %7092 = vmatpush1.bf16.msra.mxu0 %v5859
        %7093 = vmatprep.subr.bf16.mxu0 %v5864
        %7094 = vmatpush1.bf16.msra.mxu0 %v5863
        %7095 = vmatprep.subr.bf16.mxu0 %v5868
        %7096 = vmatpush1.bf16.msra.mxu0 %v5867
        %7097 = vmatprep.mubr.bf16.mxu0 %v3478
        %7098 = vmatmul.mubr.bf16.gmra.mrb[0].mxu0 %v3477
        %v7099 = vpop.f32.mrb[0].mxu0
        %v7100 = vadd.f32 %v7059, %v7099
        %v7101 = vpop.f32.mrb[0].mxu0
        %v7102 = vadd.f32 %v7061, %v7101
        %v7103 = vpop.f32.mrb[0].mxu0
        %v7104 = vpop.f32.mrb[0].mxu0
        %7105 = vdwg.mxu0
        %7106 = vmatprep.subr.bf16.mxu0 %v5872
        %7107 = vmatpush1.bf16.msra.mxu0 %v5871
        %7108 = vmatprep.subr.bf16.mxu0 %v5876
        %7109 = vmatpush1.bf16.msra.mxu0 %v5875
        %7110 = vmatprep.subr.bf16.mxu0 %v5880
        %7111 = vmatpush1.bf16.msra.mxu0 %v5879
        %7112 = vmatprep.subr.bf16.mxu0 %v5884
        %7113 = vmatpush1.bf16.msra.mxu0 %v5883
        %7114 = vmatprep.subr.bf16.mxu0 %v5888
        %7115 = vmatpush1.bf16.msra.mxu0 %v5887
        %7116 = vmatprep.subr.bf16.mxu0 %v5892
        %7117 = vmatpush1.bf16.msra.mxu0 %v5891
        %7118 = vmatprep.subr.bf16.mxu0 %v5896
        %7119 = vmatpush1.bf16.msra.mxu0 %v5895
        %7120 = vmatprep.subr.bf16.mxu0 %v5900
        %7121 = vmatpush1.bf16.msra.mxu0 %v5899
        %7122 = vmatprep.subr.bf16.mxu0 %v5904
        %7123 = vmatpush1.bf16.msra.mxu0 %v5903
        %7124 = vmatprep.subr.bf16.mxu0 %v5908
        %7125 = vmatpush1.bf16.msra.mxu0 %v5907
        %7126 = vmatprep.subr.bf16.mxu0 %v5912
        %7127 = vmatpush1.bf16.msra.mxu0 %v5911
        %7128 = vmatprep.subr.bf16.mxu0 %v5916
        %7129 = vmatpush1.bf16.msra.mxu0 %v5915
        %7130 = vmatprep.subr.bf16.mxu0 %v5920
        %7131 = vmatpush1.bf16.msra.mxu0 %v5919
        %7132 = vmatprep.subr.bf16.mxu0 %v5924
        %7133 = vmatpush1.bf16.msra.mxu0 %v5923
        %7134 = vmatprep.subr.bf16.mxu0 %v5928
        %7135 = vmatpush1.bf16.msra.mxu0 %v5927
        %7136 = vmatprep.subr.bf16.mxu0 %v5932
        %7137 = vmatpush1.bf16.msra.mxu0 %v5931
        %7138 = vmatprep.mubr.bf16.mxu0 %v3480
        %7139 = vmatmul.mubr.bf16.gmra.mrb[0].mxu0 %v3479
        %v7140 = vpop.f32.mrb[0].mxu0
        %v7141 = vadd.f32 %v7100, %v7140
        %v7142 = vpop.f32.mrb[0].mxu0
        %v7143 = vadd.f32 %v7102, %v7142
        %v7144 = vpop.f32.mrb[0].mxu0
        %v7145 = vpop.f32.mrb[0].mxu0
        %7146 = vdwg.mxu0
        %7147 = vmatprep.subr.bf16.mxu0 %v5936
        %7148 = vmatpush1.bf16.msra.mxu0 %v5935
        %7149 = vmatprep.subr.bf16.mxu0 %v5940
        %7150 = vmatpush1.bf16.msra.mxu0 %v5939
        %7151 = vmatprep.subr.bf16.mxu0 %v5944
        %7152 = vmatpush1.bf16.msra.mxu0 %v5943
        %7153 = vmatprep.subr.bf16.mxu0 %v5948
        %7154 = vmatpush1.bf16.msra.mxu0 %v5947
        %7155 = vmatprep.subr.bf16.mxu0 %v5952
        %7156 = vmatpush1.bf16.msra.mxu0 %v5951
        %7157 = vmatprep.subr.bf16.mxu0 %v5956
        %7158 = vmatpush1.bf16.msra.mxu0 %v5955
        %7159 = vmatprep.subr.bf16.mxu0 %v5960
        %7160 = vmatpush1.bf16.msra.mxu0 %v5959
        %7161 = vmatprep.subr.bf16.mxu0 %v5964
        %7162 = vmatpush1.bf16.msra.mxu0 %v5963
        %7163 = vmatprep.subr.bf16.mxu0 %v5968
        %7164 = vmatpush1.bf16.msra.mxu0 %v5967
        %7165 = vmatprep.subr.bf16.mxu0 %v5972
        %7166 = vmatpush1.bf16.msra.mxu0 %v5971
        %7167 = vmatprep.subr.bf16.mxu0 %v5976
        %7168 = vmatpush1.bf16.msra.mxu0 %v5975
        %7169 = vmatprep.subr.bf16.mxu0 %v5980
        %7170 = vmatpush1.bf16.msra.mxu0 %v5979
        %7171 = vmatprep.subr.bf16.mxu0 %v5984
        %7172 = vmatpush1.bf16.msra.mxu0 %v5983
        %7173 = vmatprep.subr.bf16.mxu0 %v5988
        %7174 = vmatpush1.bf16.msra.mxu0 %v5987
        %7175 = vmatprep.subr.bf16.mxu0 %v5992
        %7176 = vmatpush1.bf16.msra.mxu0 %v5991
        %7177 = vmatprep.subr.bf16.mxu0 %v5996
        %7178 = vmatpush1.bf16.msra.mxu0 %v5995
        %7179 = vmatprep.mubr.bf16.mxu0 %v3482
        %7180 = vmatmul.mubr.bf16.gmra.mrb[0].mxu0 %v3481
        %v7181 = vpop.f32.mrb[0].mxu0
        %v7182 = vadd.f32 %v7141, %v7181
        %v7183 = vpop.f32.mrb[0].mxu0
        %v7184 = vadd.f32 %v7143, %v7183
        %v7185 = vpop.f32.mrb[0].mxu0
        %v7186 = vpop.f32.mrb[0].mxu0
        %7187 = vdwg.mxu0
        %7188 = vmatprep.subr.bf16.mxu0 %v6000
        %7189 = vmatpush1.bf16.msra.mxu0 %v5999
        %7190 = vmatprep.subr.bf16.mxu0 %v6004
        %7191 = vmatpush1.bf16.msra.mxu0 %v6003
        %7192 = vmatprep.subr.bf16.mxu0 %v6008
        %7193 = vmatpush1.bf16.msra.mxu0 %v6007
        %7194 = vmatprep.subr.bf16.mxu0 %v6012
        %7195 = vmatpush1.bf16.msra.mxu0 %v6011
        %7196 = vmatprep.subr.bf16.mxu0 %v6016
        %7197 = vmatpush1.bf16.msra.mxu0 %v6015
        %7198 = vmatprep.subr.bf16.mxu0 %v6020
        %7199 = vmatpush1.bf16.msra.mxu0 %v6019
        %7200 = vmatprep.subr.bf16.mxu0 %v6024
        %7201 = vmatpush1.bf16.msra.mxu0 %v6023
        %7202 = vmatprep.subr.bf16.mxu0 %v6028
        %7203 = vmatpush1.bf16.msra.mxu0 %v6027
        %7204 = vmatprep.subr.bf16.mxu0 %v6032
        %7205 = vmatpush1.bf16.msra.mxu0 %v6031
        %7206 = vmatprep.subr.bf16.mxu0 %v6036
        %7207 = vmatpush1.bf16.msra.mxu0 %v6035
        %7208 = vmatprep.subr.bf16.mxu0 %v6040
        %7209 = vmatpush1.bf16.msra.mxu0 %v6039
        %7210 = vmatprep.subr.bf16.mxu0 %v6044
        %7211 = vmatpush1.bf16.msra.mxu0 %v6043
        %7212 = vmatprep.subr.bf16.mxu0 %v6048
        %7213 = vmatpush1.bf16.msra.mxu0 %v6047
        %7214 = vmatprep.subr.bf16.mxu0 %v6052
        %7215 = vmatpush1.bf16.msra.mxu0 %v6051
        %7216 = vmatprep.subr.bf16.mxu0 %v6056
        %7217 = vmatpush1.bf16.msra.mxu0 %v6055
        %7218 = vmatprep.subr.bf16.mxu0 %v6060
        %7219 = vmatpush1.bf16.msra.mxu0 %v6059
        %7220 = vmatprep.mubr.bf16.mxu0 %v3484
        %7221 = vmatmul.mubr.bf16.gmra.mrb[0].mxu0 %v3483
        %v7222 = vpop.f32.mrb[0].mxu0
        %v7223 = vadd.f32 %v7182, %v7222
        %v7224 = vpop.f32.mrb[0].mxu0
        %v7225 = vadd.f32 %v7184, %v7224
        %v7226 = vpop.f32.mrb[0].mxu0
        %v7227 = vpop.f32.mrb[0].mxu0
        %7228 = vdwg.mxu0
        %v7229 = vmax.f32 %v6895, 0.0
        %v7230 = vmax.f32 %v6897, 0.0
        %v7231 = vmax.f32 %v7223, 0.0
        %v7232 = vmax.f32 %v7225, 0.0
        %v7233 = vpack.c.bf16 %v7229, %v7229
        %v7234 = vpack.c.bf16 %v7230, %v7230
        %v7235 = vpack.c.bf16 %v7231, %v7231
        %v7236 = vpack.c.bf16 %v7232, %v7232
        %v7237 = vld [vmem:[%s377] sm:$0xf]
        %v7238 = vld [vmem:[%s377 + $0x4] sm:$0xf]
        %v7239 = vld [vmem:[%s377 + $0x8] sm:$0xf]
        %v7240 = vld [vmem:[%s377 + $0xc] sm:$0xf]
        %v7241 = vld [vmem:[%s377 + $0x10] sm:$0xf]
        %v7242 = vld [vmem:[%s377 + $0x14] sm:$0xf]
        %v7243 = vld [vmem:[%s377 + $0x18] sm:$0xf]
        %v7244 = vld [vmem:[%s377 + $0x1c] sm:$0xf]
        %v7245 = vld [vmem:[%s377 + $0x20] sm:$0xf]
        %v7246 = vld [vmem:[%s377 + $0x24] sm:$0xf]
        %v7247 = vld [vmem:[%s377 + $0x28] sm:$0xf]
        %v7248 = vld [vmem:[%s377 + $0x2c] sm:$0xf]
        %v7249 = vld [vmem:[%s377 + $0x30] sm:$0xf]
        %v7250 = vld [vmem:[%s377 + $0x34] sm:$0xf]
        %v7251 = vld [vmem:[%s377 + $0x38] sm:$0xf]
        %v7252 = vld [vmem:[%s377 + $0x3c] sm:$0xf]
        %v7253 = vld [vmem:[%s377 + $0x40] sm:$0xf]
        %v7254 = vld [vmem:[%s377 + $0x44] sm:$0xf]
        %v7255 = vld [vmem:[%s377 + $0x48] sm:$0xf]
        %v7256 = vld [vmem:[%s377 + $0x4c] sm:$0xf]
        %v7257 = vld [vmem:[%s377 + $0x50] sm:$0xf]
        %v7258 = vld [vmem:[%s377 + $0x54] sm:$0xf]
        %v7259 = vld [vmem:[%s377 + $0x58] sm:$0xf]
        %v7260 = vld [vmem:[%s377 + $0x5c] sm:$0xf]
        %v7261 = vld [vmem:[%s377 + $0x60] sm:$0xf]
        %v7262 = vld [vmem:[%s377 + $0x64] sm:$0xf]
        %v7263 = vld [vmem:[%s377 + $0x68] sm:$0xf]
        %v7264 = vld [vmem:[%s377 + $0x6c] sm:$0xf]
        %v7265 = vld [vmem:[%s377 + $0x70] sm:$0xf]
        %v7266 = vld [vmem:[%s377 + $0x74] sm:$0xf]
        %v7267 = vld [vmem:[%s377 + $0x78] sm:$0xf]
        %v7268 = vld [vmem:[%s377 + $0x7c] sm:$0xf]
        %v7269 = vld [vmem:[%s377 + $0x80] sm:$0xf]
        %v7270 = vld [vmem:[%s377 + $0x84] sm:$0xf]
        %v7271 = vld [vmem:[%s377 + $0x88] sm:$0xf]
        %v7272 = vld [vmem:[%s377 + $0x8c] sm:$0xf]
        %v7273 = vld [vmem:[%s377 + $0x90] sm:$0xf]
        %v7274 = vld [vmem:[%s377 + $0x94] sm:$0xf]
        %v7275 = vld [vmem:[%s377 + $0x98] sm:$0xf]
        %v7276 = vld [vmem:[%s377 + $0x9c] sm:$0xf]
        %v7277 = vld [vmem:[%s377 + $0xa0] sm:$0xf]
        %v7278 = vld [vmem:[%s377 + $0xa4] sm:$0xf]
        %v7279 = vld [vmem:[%s377 + $0xa8] sm:$0xf]
        %v7280 = vld [vmem:[%s377 + $0xac] sm:$0xf]
        %v7281 = vld [vmem:[%s377 + $0xb0] sm:$0xf]
        %v7282 = vld [vmem:[%s377 + $0xb4] sm:$0xf]
        %v7283 = vld [vmem:[%s377 + $0xb8] sm:$0xf]
        %v7284 = vld [vmem:[%s377 + $0xbc] sm:$0xf]
        %v7285 = vld [vmem:[%s377 + $0xc0] sm:$0xf]
        %v7286 = vld [vmem:[%s377 + $0xc4] sm:$0xf]
        %v7287 = vld [vmem:[%s377 + $0xc8] sm:$0xf]
        %v7288 = vld [vmem:[%s377 + $0xcc] sm:$0xf]
        %v7289 = vld [vmem:[%s377 + $0xd0] sm:$0xf]
        %v7290 = vld [vmem:[%s377 + $0xd4] sm:$0xf]
        %v7291 = vld [vmem:[%s377 + $0xd8] sm:$0xf]
        %v7292 = vld [vmem:[%s377 + $0xdc] sm:$0xf]
        %v7293 = vld [vmem:[%s377 + $0xe0] sm:$0xf]
        %v7294 = vld [vmem:[%s377 + $0xe4] sm:$0xf]
        %v7295 = vld [vmem:[%s377 + $0xe8] sm:$0xf]
        %v7296 = vld [vmem:[%s377 + $0xec] sm:$0xf]
        %v7297 = vld [vmem:[%s377 + $0xf0] sm:$0xf]
        %v7298 = vld [vmem:[%s377 + $0xf4] sm:$0xf]
        %v7299 = vld [vmem:[%s377 + $0xf8] sm:$0xf]
        %v7300 = vld [vmem:[%s377 + $0xfc] sm:$0xf]
        %v7301 = vlaneseq
        %v7302 = vshrl.u32 %v7301, 7
        %v7303 = vsub.s32 1, %v7302
        %v7304 = vrot.slane %v445, %v7303
        %v7369 = vunpack.c.l.b16 %v7237
        %v7370 = vunpack.c.l.b16 %v7238
        %v7371 = vunpack.c.l.b16 %v7239
        %v7372 = vunpack.c.l.b16 %v7240
        %v7373 = vunpack.c.l.b16 %v7241
        %v7374 = vunpack.c.l.b16 %v7242
        %v7375 = vunpack.c.l.b16 %v7243
        %v7376 = vunpack.c.l.b16 %v7244
        %v7377 = vunpack.c.l.b16 %v7245
        %v7378 = vunpack.c.l.b16 %v7246
        %v7379 = vunpack.c.l.b16 %v7247
        %v7380 = vunpack.c.l.b16 %v7248
        %v7381 = vunpack.c.l.b16 %v7249
        %v7382 = vunpack.c.l.b16 %v7250
        %v7383 = vunpack.c.l.b16 %v7251
        %v7384 = vunpack.c.l.b16 %v7252
        %v7385 = vunpack.c.l.b16 %v7253
        %v7386 = vunpack.c.l.b16 %v7254
        %v7387 = vunpack.c.l.b16 %v7255
        %v7388 = vunpack.c.l.b16 %v7256
        %v7389 = vunpack.c.l.b16 %v7257
        %v7390 = vunpack.c.l.b16 %v7258
        %v7391 = vunpack.c.l.b16 %v7259
        %v7392 = vunpack.c.l.b16 %v7260
        %v7393 = vunpack.c.l.b16 %v7261
        %v7394 = vunpack.c.l.b16 %v7262
        %v7395 = vunpack.c.l.b16 %v7263
        %v7396 = vunpack.c.l.b16 %v7264
        %v7397 = vunpack.c.l.b16 %v7265
        %v7398 = vunpack.c.l.b16 %v7266
        %v7399 = vunpack.c.l.b16 %v7267
        %v7400 = vunpack.c.l.b16 %v7268
        %v7401 = vunpack.c.l.b16 %v7269
        %v7402 = vunpack.c.l.b16 %v7270
        %v7403 = vunpack.c.l.b16 %v7271
        %v7404 = vunpack.c.l.b16 %v7272
        %v7405 = vunpack.c.l.b16 %v7273
        %v7406 = vunpack.c.l.b16 %v7274
        %v7407 = vunpack.c.l.b16 %v7275
        %v7408 = vunpack.c.l.b16 %v7276
        %v7409 = vunpack.c.l.b16 %v7277
        %v7410 = vunpack.c.l.b16 %v7278
        %v7411 = vunpack.c.l.b16 %v7279
        %v7412 = vunpack.c.l.b16 %v7280
        %v7413 = vunpack.c.l.b16 %v7281
        %v7414 = vunpack.c.l.b16 %v7282
        %v7415 = vunpack.c.l.b16 %v7283
        %v7416 = vunpack.c.l.b16 %v7284
        %v7417 = vunpack.c.l.b16 %v7285
        %v7418 = vunpack.c.l.b16 %v7286
        %v7419 = vunpack.c.l.b16 %v7287
        %v7420 = vunpack.c.l.b16 %v7288
        %v7421 = vunpack.c.l.b16 %v7289
        %v7422 = vunpack.c.l.b16 %v7290
        %v7423 = vunpack.c.l.b16 %v7291
        %v7424 = vunpack.c.l.b16 %v7292
        %v7425 = vunpack.c.l.b16 %v7293
        %v7426 = vunpack.c.l.b16 %v7294
        %v7427 = vunpack.c.l.b16 %v7295
        %v7428 = vunpack.c.l.b16 %v7296
        %v7429 = vunpack.c.l.b16 %v7297
        %v7430 = vunpack.c.l.b16 %v7298
        %v7431 = vunpack.c.l.b16 %v7299
        %v7432 = vunpack.c.l.b16 %v7300
        %v7433 = vpack.c.b16 %v7370, %v7369
        %v7434 = vpack.c.b16 %v7372, %v7371
        %v7435 = vpack.c.b16 %v7374, %v7373
        %v7436 = vpack.c.b16 %v7376, %v7375
        %v7437 = vpack.c.b16 %v7378, %v7377
        %v7438 = vpack.c.b16 %v7380, %v7379
        %v7439 = vpack.c.b16 %v7382, %v7381
        %v7440 = vpack.c.b16 %v7384, %v7383
        %v7441 = vpack.c.b16 %v7386, %v7385
        %v7442 = vpack.c.b16 %v7388, %v7387
        %v7443 = vpack.c.b16 %v7390, %v7389
        %v7444 = vpack.c.b16 %v7392, %v7391
        %v7445 = vpack.c.b16 %v7394, %v7393
        %v7446 = vpack.c.b16 %v7396, %v7395
        %v7447 = vpack.c.b16 %v7398, %v7397
        %v7448 = vpack.c.b16 %v7400, %v7399
        %v7449 = vpack.c.b16 %v7402, %v7401
        %v7450 = vpack.c.b16 %v7404, %v7403
        %v7451 = vpack.c.b16 %v7406, %v7405
        %v7452 = vpack.c.b16 %v7408, %v7407
        %v7453 = vpack.c.b16 %v7410, %v7409
        %v7454 = vpack.c.b16 %v7412, %v7411
        %v7455 = vpack.c.b16 %v7414, %v7413
        %v7456 = vpack.c.b16 %v7416, %v7415
        %v7457 = vpack.c.b16 %v7418, %v7417
        %v7458 = vpack.c.b16 %v7420, %v7419
        %v7459 = vpack.c.b16 %v7422, %v7421
        %v7460 = vpack.c.b16 %v7424, %v7423
        %v7461 = vpack.c.b16 %v7426, %v7425
        %v7462 = vpack.c.b16 %v7428, %v7427
        %v7463 = vpack.c.b16 %v7430, %v7429
        %v7464 = vpack.c.b16 %v7432, %v7431
        %7497 = vmatprep.subr.bf16.mxu0 0
        %7498 = vmatpush1.bf16.msra.mxu0 %v7433
        %7499 = vmatprep.subr.bf16.mxu0 0
        %7500 = vmatpush1.bf16.msra.mxu0 %v7434
        %7501 = vmatprep.subr.bf16.mxu0 0
        %7502 = vmatpush1.bf16.msra.mxu0 %v7435
        %7503 = vmatprep.subr.bf16.mxu0 0
        %7504 = vmatpush1.bf16.msra.mxu0 %v7436
        %7505 = vmatprep.subr.bf16.mxu0 0
        %7506 = vmatpush1.bf16.msra.mxu0 %v7437
        %7507 = vmatprep.subr.bf16.mxu0 0
        %7508 = vmatpush1.bf16.msra.mxu0 %v7438
        %7509 = vmatprep.subr.bf16.mxu0 0
        %7510 = vmatpush1.bf16.msra.mxu0 %v7439
        %7511 = vmatprep.subr.bf16.mxu0 0
        %7512 = vmatpush1.bf16.msra.mxu0 %v7440
        %7513 = vmatprep.subr.bf16.mxu0 0
        %7514 = vmatpush1.bf16.msra.mxu0 %v7441
        %7515 = vmatprep.subr.bf16.mxu0 0
        %7516 = vmatpush1.bf16.msra.mxu0 %v7442
        %7517 = vmatprep.subr.bf16.mxu0 0
        %7518 = vmatpush1.bf16.msra.mxu0 %v7443
        %7519 = vmatprep.subr.bf16.mxu0 0
        %7520 = vmatpush1.bf16.msra.mxu0 %v7444
        %7521 = vmatprep.subr.bf16.mxu0 0
        %7522 = vmatpush1.bf16.msra.mxu0 %v7445
        %7523 = vmatprep.subr.bf16.mxu0 0
        %7524 = vmatpush1.bf16.msra.mxu0 %v7446
        %7525 = vmatprep.subr.bf16.mxu0 0
        %7526 = vmatpush1.bf16.msra.mxu0 %v7447
        %7527 = vmatprep.subr.bf16.mxu0 0
        %7528 = vmatpush1.bf16.msra.mxu0 %v7448
        %7529 = vmatprep.mubr.bf16.mxu0 %v7234
        %7530 = vmatmul.mubr.bf16.gmra.mrb[0].mxu0 %v7233
        %v7531 = vpop.f32.mrb[0].mxu0
        %v7532 = vadd.f32 %v7304, %v7531
        %v7533 = vpop.f32.mrb[0].mxu0
        %v7534 = vpop.f32.mrb[0].mxu0
        %v7535 = vpop.f32.mrb[0].mxu0
        %7536 = vdwg.mxu0
        %7537 = vmatprep.subr.bf16.mxu0 0
        %7538 = vmatpush1.bf16.msra.mxu0 %v7449
        %7539 = vmatprep.subr.bf16.mxu0 0
        %7540 = vmatpush1.bf16.msra.mxu0 %v7450
        %7541 = vmatprep.subr.bf16.mxu0 0
        %7542 = vmatpush1.bf16.msra.mxu0 %v7451
        %7543 = vmatprep.subr.bf16.mxu0 0
        %7544 = vmatpush1.bf16.msra.mxu0 %v7452
        %7545 = vmatprep.subr.bf16.mxu0 0
        %7546 = vmatpush1.bf16.msra.mxu0 %v7453
        %7547 = vmatprep.subr.bf16.mxu0 0
        %7548 = vmatpush1.bf16.msra.mxu0 %v7454
        %7549 = vmatprep.subr.bf16.mxu0 0
        %7550 = vmatpush1.bf16.msra.mxu0 %v7455
        %7551 = vmatprep.subr.bf16.mxu0 0
        %7552 = vmatpush1.bf16.msra.mxu0 %v7456
        %7553 = vmatprep.subr.bf16.mxu0 0
        %7554 = vmatpush1.bf16.msra.mxu0 %v7457
        %7555 = vmatprep.subr.bf16.mxu0 0
        %7556 = vmatpush1.bf16.msra.mxu0 %v7458
        %7557 = vmatprep.subr.bf16.mxu0 0
        %7558 = vmatpush1.bf16.msra.mxu0 %v7459
        %7559 = vmatprep.subr.bf16.mxu0 0
        %7560 = vmatpush1.bf16.msra.mxu0 %v7460
        %7561 = vmatprep.subr.bf16.mxu0 0
        %7562 = vmatpush1.bf16.msra.mxu0 %v7461
        %7563 = vmatprep.subr.bf16.mxu0 0
        %7564 = vmatpush1.bf16.msra.mxu0 %v7462
        %7565 = vmatprep.subr.bf16.mxu0 0
        %7566 = vmatpush1.bf16.msra.mxu0 %v7463
        %7567 = vmatprep.subr.bf16.mxu0 0
        %7568 = vmatpush1.bf16.msra.mxu0 %v7464
        %7569 = vmatprep.mubr.bf16.mxu0 %v7236
        %7570 = vmatmul.mubr.bf16.gmra.mrb[0].mxu0 %v7235
        %v7571 = vpop.f32.mrb[0].mxu0
        %v7572 = vadd.f32 %v7532, %v7571
        %v7573 = vpop.f32.mrb[0].mxu0
        %v7574 = vpop.f32.mrb[0].mxu0
        %v7575 = vpop.f32.mrb[0].mxu0
        %7576 = vdwg.mxu0
        %7577 = vst [vmem:[%s434] sm:$0x3] %v7572
        %p7578 = scmp.ge.s32.totalorder %s30, 2
        // Predicated region
        $region69: #{tpu_custom_call.1} parent=43 // pred_check
          %p7579 = pneg %p7578
        $region70: #{tpu_custom_call.1} parent=43 // pred_check_branch
          %7581 = sbr.rel (%p7579) target = $region72
        $region71: #{tpu_custom_call.1} parent=43 // pred_region
          %v7582 = vxor.u32 %v7572, 2147483648
          %v7583 = vmul.f32 %v7582, 1.442695
          %v7584 = vpow.pop %v7583
          %v7585 = vadd.f32 %v7584, 1.0
          %v7586 = vrcp.pop %v7585
          %v7587 = vmul.f32 1.0, %v7586
          %7588 = vst [vmem:[%s434] sm:$0x3] %v7587
        $region72: #{tpu_custom_call.1} parent=43 // pred_fallthru
          _
        %s7589 = sand.u32 %s189, 1
        %s7590 = scalar_lea.sflag [#allocation4], %s7589
        %s7591 = sand.u32 %s189, 1
        %s7592 = smul.addr %s7591, 2
        %s7593 = scalar_lea.vmem [#allocation13], %s7592
        // Predicated region
        $region73: #{tpu_custom_call.1} parent=43 // pred_check
          %p7594 = pneg %p199
        $region74: #{tpu_custom_call.1} parent=43 // pred_check_branch
          %7596 = sbr.rel (%p7594) target = $region76
        $region75: #{tpu_custom_call.1} parent=43 // pred_region
          %s7598 = ssub.s32 32, 32
          %7599 = vsyncadd %s7590, %s7598
          %s7600 = smul.addr %s30, 32
          %s7601 = scalar_lea.hbm %s6, %s7600
          %s7603 = sshll.u32 %s7593, 4
          %s7604 = int_to_ptr.vmem [resolvable:$true] %s7603
          %7606 = dma.vmem_to_hbm [thread:$0]  %s7604, 32, %s7601, %s7590
        $region76: #{tpu_custom_call.1} parent=43 // pred_fallthru
          _
      $region44: #{tpu_custom_call.1} parent=5 // pred_fallthru
        _
      %p7607 = scmp.le.s32.totalorder 2, %s25
      // Predicated region
      $region77: #{tpu_custom_call.1} parent=5 // pred_check
        %p7608 = pneg %p7607
      $region78: #{tpu_custom_call.1} parent=5 // pred_check_branch
        %7610 = sbr.rel (%p7608) target = $region80
      $region79: #{tpu_custom_call.1} parent=5 // pred_region
        %s7611 = ssub.s32 %s25, 2
        // Predicated region
        $region81: #{tpu_custom_call.1} parent=79 // pred_check
          %p7612 = pneg %p205
        $region82: #{tpu_custom_call.1} parent=79 // pred_check_branch
          %7614 = sbr.rel (%p7612) target = $region84
        $region83: #{tpu_custom_call.1} parent=79 // pred_region
          %s7615 = sand.u32 %s190, 1
          %s7616 = scalar_lea.sflag [#allocation4], %s7615
          %s7617 = sand.u32 %s190, 1
          %s7618 = smul.addr %s7617, 2
          %s7619 = scalar_lea.vmem [#allocation13], %s7618
          %7620 = dma.done %s7616, 32
        $region84: #{tpu_custom_call.1} parent=79 // pred_fallthru
          _
      $region80: #{tpu_custom_call.1} parent=5 // pred_fallthru
        _
    $region6: #{tpu_custom_call.1} parent=1 // loop_footer
      %s29 = sadd.s32 1, %s25
    $region7: #{tpu_custom_call.1} parent=1 // loop_footer_branch
      %24 = sbr.rel target = $region3
    $region8: #{tpu_custom_call.1} parent=1 // loop_exit
      _
    %7621 = vsyncpa [#allocation3], 1
    %s7622 = scalar_lea.sflag [#allocation3], 1
    %7623 = vsyncpa %s7622, 1
    %7624 = vsyncpa [#allocation6], 1
    %s7625 = scalar_lea.sflag [#allocation6], 1
    %7626 = vsyncpa %s7625, 1
    %7627 = vsyncpa [#allocation9], 1
    %s7628 = scalar_lea.sflag [#allocation9], 1
    %7629 = vsyncpa %s7628, 1
    %7630 = vsyncpa [#allocation12], 1
    %s7631 = scalar_lea.sflag [#allocation12], 1
    %7632 = vsyncpa %s7631, 1
    %7633 = vsyncpa [#allocation4], 1
    %s7634 = scalar_lea.sflag [#allocation4], 1
    %7635 = vsyncpa %s7634, 1

</llo_original>
